<compile_context>
chip_gen: v7x
topology: tpu7x:2x2x1
jax: 0.10.0
libtpu: 0.0.40
codegen_flags: <defaults>
</compile_context>

<pallas_src>
import functools

import jax
import jax.numpy as jnp
from jax.experimental import pallas as pl
from jax.experimental.pallas import tpu as pltpu

F32 = jnp.float32
BF16 = jnp.bfloat16


def _round_up(x, m):
    return (x + m - 1) // m * m


def _pad2d(a, rows, cols):
    r, c = a.shape
    if r == rows and c == cols:
        return a
    return jnp.pad(a, ((0, rows - r), (0, cols - c)))


@functools.lru_cache(maxsize=None)
def _vmem_limit_bytes():
    """Scoped-VMEM budget from the actual chip (~3/4 of physical VMEM):
    ~96 MiB on v5e/v6e (128 MiB physical), ~48 MiB on v7x (64 MiB)."""
    try:
        cap = int(pltpu.get_tpu_info().vmem_capacity_bytes)
    except Exception:
        cap = 64 * 1024 * 1024
    return min(cap * 3 // 4, 100 * 1024 * 1024)


def _budget():
    return int(_vmem_limit_bytes() * 0.7)


# --------------------------- tile-size selection ----------------------------

def _gemm_tiles(M, N, K, out_itemsize=2):
    Ma, Na, Ka = _round_up(M, 8), _round_up(N, 128), _round_up(K, 128)
    tm = min(1024 if Ma >= 1024 else 512, Ma)
    tn = min(512, Na)
    tk = min(512, Ka)

    def need(tm_, tn_, tk_):  # double-buffered ins/outs + f32 acc + bias
        return (4 * tm_ * tk_ + 4 * tk_ * tn_ + 2 * out_itemsize * tm_ * tn_
                + 4 * tm_ * tn_ + 8 * tn_)

    while need(tm, tn, tk) > _budget() and tk > 128:
        tk //= 2
    while need(tm, tn, tk) > _budget() and tn > 128:
        tn //= 2
    while need(tm, tn, tk) > _budget() and tm > 8:
        tm = max(tm // 2, 8)
    return tm, tn, tk


def _res_ln_tiles(M, N, K):
    Ma, Ka = _round_up(M, 8), _round_up(K, 128)
    tm = min(1024 if Ma >= 1024 else 512, Ma)
    tk = min(512, Ka)

    def need(tm_, tk_):
        return (4 * tm_ * tk_ + 4 * tk_ * N + 4 * tm_ * N  # x, w, residual
                + 4 * tm_ * N + 4 * tm_ * N + 16 * N)      # out, acc, LN vecs

    while need(tm, tk) > _budget() and tk > 128:
        tk //= 2
    while need(tm, tk) > _budget() and tm > 8:
        tm = max(tm // 2, 8)
    return tm, tk


def _ffn_tiles(M, H, I):
    Ma, Ia = _round_up(M, 8), _round_up(I, 128)
    tm = min(1024 if Ma >= 1024 else 512, Ma)
    ti = min(512, Ia)

    def need(tm_, ti_):
        return (4 * tm_ * H + 4 * H * ti_ + 4 * ti_ * H + 4 * tm_ * H
                + 4 * tm_ * H + 4 * tm_ * H + 16 * H + 8 * ti_)

    while need(tm, ti) > _budget() and ti > 128:
        ti //= 2
    while need(tm, ti) > _budget() and tm > 8:
        tm = max(tm // 2, 8)
    return tm, ti


# ------------------------------ Pallas kernels ------------------------------

def _matmul_kernel(x_ref, w_ref, b_ref, o_ref, acc_ref):
    """Tiled GEMM (y = x @ w + b), f32 accumulator."""
    k = pl.program_id(2)

    @pl.when(k == 0)
    def _():
        acc_ref[...] = jnp.zeros_like(acc_ref)

    acc_ref[...] += jnp.dot(x_ref[...], w_ref[...],
                            preferred_element_type=jnp.float32)

    @pl.when(k == pl.num_programs(2) - 1)
    def _():
        o_ref[...] = (acc_ref[...] + b_ref[...]).astype(o_ref.dtype)


def linear(x, w, b, out_dtype=BF16):
    """y = x @ w + b; bf16 operands, f32 accumulation, tiled/pipelined."""
    M, K = x.shape
    N = w.shape[1]
    tm, tn, tk = _gemm_tiles(M, N, K, jnp.dtype(out_dtype).itemsize)
    Mp, Np, Kp = _round_up(M, tm), _round_up(N, tn), _round_up(K, tk)

    x_p = _pad2d(x.astype(BF16), Mp, Kp)
    w_p = _pad2d(w.astype(BF16), Kp, Np)
    b_p = _pad2d(b.reshape(1, N).astype(F32), 1, Np)

    cost = pl.CostEstimate(
        flops=2 * Mp * Np * Kp, transcendentals=0,
        bytes_accessed=2 * (Mp * Kp + Kp * Np)
        + Mp * Np * jnp.dtype(out_dtype).itemsize)

    out = pl.pallas_call(
        _matmul_kernel,
        grid=(Mp // tm, Np // tn, Kp // tk),
        in_specs=[pl.BlockSpec((tm, tk), lambda i, j, k: (i, k)),
                  pl.BlockSpec((tk, tn), lambda i, j, k: (k, j)),
                  pl.BlockSpec((1, tn), lambda i, j, k: (0, j))],
        out_specs=pl.BlockSpec((tm, tn), lambda i, j, k: (i, j)),
        out_shape=jax.ShapeDtypeStruct((Mp, Np), out_dtype),
        scratch_shapes=[pltpu.VMEM((tm, tn), jnp.float32)],
        compiler_params=pltpu.CompilerParams(
            dimension_semantics=("parallel", "parallel", "arbitrary"),
            vmem_limit_bytes=_vmem_limit_bytes()),
        cost_estimate=cost,
    )(x_p, w_p, b_p)
    return out[:M, :N]


def _matmul_res_ln_kernel(x_ref, w_ref, b_ref, r_ref, g_ref, be_ref,
                          o_ref, acc_ref, *, eps):
    """Tiled GEMM with fused (+bias, +residual, LayerNorm) epilogue.
    N (= hidden) is NOT tiled so LN statistics see the whole row."""
    k = pl.program_id(1)

    @pl.when(k == 0)
    def _():
        acc_ref[...] = jnp.zeros_like(acc_ref)

    acc_ref[...] += jnp.dot(x_ref[...], w_ref[...],
                            preferred_element_type=jnp.float32)

    @pl.when(k == pl.num_programs(1) - 1)
    def _():
        z = acc_ref[...] + b_ref[...] + r_ref[...].astype(jnp.float32)
        mu = jnp.mean(z, axis=-1, keepdims=True)
        zc = z - mu
        var = jnp.mean(zc * zc, axis=-1, keepdims=True)
        y = zc * jax.lax.rsqrt(var + eps)
        o_ref[...] = (y * g_ref[...] + be_ref[...]).astype(o_ref.dtype)


def linear_res_ln(x, w, b, residual, gamma, beta, eps=1e-12, out_dtype=BF16):
    """LayerNorm(x @ w + b + residual); GEMM + epilogue in one kernel."""
    M, K = x.shape
    N = w.shape[1]                      # = hidden, kept unpadded for LN
    tm, tk = _res_ln_tiles(M, N, K)
    Mp, Kp = _round_up(M, tm), _round_up(K, tk)

    x_p = _pad2d(x.astype(BF16), Mp, Kp)
    w_p = _pad2d(w.astype(BF16), Kp, N)
    r_p = _pad2d(residual.astype(BF16), Mp, N)
    b_r = b.reshape(1, N).astype(F32)
    g_r = gamma.reshape(1, N).astype(F32)
    be_r = beta.reshape(1, N).astype(F32)

    cost = pl.CostEstimate(
        flops=2 * Mp * N * Kp, transcendentals=Mp,
        bytes_accessed=2 * (Mp * Kp + Kp * N + 2 * Mp * N))

    out = pl.pallas_call(
        functools.partial(_matmul_res_ln_kernel, eps=eps),
        grid=(Mp // tm, Kp // tk),
        in_specs=[pl.BlockSpec((tm, tk), lambda i, k: (i, k)),
                  pl.BlockSpec((tk, N), lambda i, k: (k, 0)),
                  pl.BlockSpec((1, N), lambda i, k: (0, 0)),
                  pl.BlockSpec((tm, N), lambda i, k: (i, 0)),
                  pl.BlockSpec((1, N), lambda i, k: (0, 0)),
                  pl.BlockSpec((1, N), lambda i, k: (0, 0))],
        out_specs=pl.BlockSpec((tm, N), lambda i, k: (i, 0)),
        out_shape=jax.ShapeDtypeStruct((Mp, N), out_dtype),
        scratch_shapes=[pltpu.VMEM((tm, N), jnp.float32)],
        compiler_params=pltpu.CompilerParams(
            dimension_semantics=("parallel", "arbitrary"),
            vmem_limit_bytes=_vmem_limit_bytes()),
        cost_estimate=cost,
    )(x_p, w_p, b_r, r_p, g_r, be_r)
    return out[:M]


def _ffn_kernel(x_ref, wi_ref, bi_ref, wf_ref, bf_ref, r_ref, g_ref, be_ref,
                o_ref, acc_ref, *, eps):
    """Fused FFN: GELU(x @ wi + bi) @ wf kept in VMEM, reduced over the
    intermediate-dim grid axis, then (+bf, +residual, LayerNorm) epilogue."""
    j = pl.program_id(1)

    @pl.when(j == 0)
    def _():
        acc_ref[...] = jnp.zeros_like(acc_ref)

    u = jnp.dot(x_ref[...], wi_ref[...],
                preferred_element_type=jnp.float32) + bi_ref[...]
    u = 0.5 * u * (1.0 + jax.lax.erf(u * 0.7071067811865476))  # exact GELU
    acc_ref[...] += jnp.dot(u.astype(x_ref.dtype), wf_ref[...],
                            preferred_element_type=jnp.float32)

    @pl.when(j == pl.num_programs(1) - 1)
    def _():
        z = acc_ref[...] + bf_ref[...] + r_ref[...].astype(jnp.float32)
        mu = jnp.mean(z, axis=-1, keepdims=True)
        zc = z - mu
        var = jnp.mean(zc * zc, axis=-1, keepdims=True)
        y = zc * jax.lax.rsqrt(var + eps)
        o_ref[...] = (y * g_ref[...] + be_ref[...]).astype(o_ref.dtype)


def ffn_fused(x, wi, bi, wf, bf, residual, gamma, beta, eps=1e-12,
              out_dtype=BF16):
    """LayerNorm(GELU(x @ wi + bi) @ wf + bf + residual) in a single kernel;
    the intermediate activation never touches HBM."""
    M, H = x.shape
    I = wi.shape[1]
    tm, ti = _ffn_tiles(M, H, I)
    Mp, Ip = _round_up(M, tm), _round_up(I, ti)

    x_p = _pad2d(x.astype(BF16), Mp, H)
    wi_p = _pad2d(wi.astype(BF16), H, Ip)
    bi_p = _pad2d(bi.reshape(1, I).astype(F32), 1, Ip)
    wf_p = _pad2d(wf.astype(BF16), Ip, H)
    bf_r = bf.reshape(1, H).astype(F32)
    r_p = _pad2d(residual.astype(BF16), Mp, H)
    g_r = gamma.reshape(1, H).astype(F32)
    be_r = beta.reshape(1, H).astype(F32)

    cost = pl.CostEstimate(
        flops=4 * Mp * Ip * H, transcendentals=Mp * Ip,
        bytes_accessed=2 * (3 * Mp * H + 2 * H * Ip))

    out = pl.pallas_call(
        functools.partial(_ffn_kernel, eps=eps),
        grid=(Mp // tm, Ip // ti),
        in_specs=[pl.BlockSpec((tm, H), lambda i, j: (i, 0)),
                  pl.BlockSpec((H, ti), lambda i, j: (0, j)),
                  pl.BlockSpec((1, ti), lambda i, j: (0, j)),
                  pl.BlockSpec((ti, H), lambda i, j: (j, 0)),
                  pl.BlockSpec((1, H), lambda i, j: (0, 0)),
                  pl.BlockSpec((tm, H), lambda i, j: (i, 0)),
                  pl.BlockSpec((1, H), lambda i, j: (0, 0)),
                  pl.BlockSpec((1, H), lambda i, j: (0, 0))],
        out_specs=pl.BlockSpec((tm, H), lambda i, j: (i, 0)),
        out_shape=jax.ShapeDtypeStruct((Mp, H), out_dtype),
        scratch_shapes=[pltpu.VMEM((tm, H), jnp.float32)],
        compiler_params=pltpu.CompilerParams(
            dimension_semantics=("parallel", "arbitrary"),
            vmem_limit_bytes=_vmem_limit_bytes()),
        cost_estimate=cost,
    )(x_p, wi_p, bi_p, wf_p, bf_r, r_p, g_r, be_r)
    return out[:M]


def _ln_kernel(x_ref, g_ref, b_ref, o_ref, *, eps):
    x = x_ref[...].astype(jnp.float32)
    mu = jnp.mean(x, axis=-1, keepdims=True)
    xc = x - mu
    var = jnp.mean(xc * xc, axis=-1, keepdims=True)
    y = xc * jax.lax.rsqrt(var + eps)
    o_ref[...] = (y * g_ref[...] + b_ref[...]).astype(o_ref.dtype)


def layernorm(x, gamma, beta, eps=1e-12, out_dtype=BF16):
    """Row-tiled LayerNorm (no residual) — used for the embedding LN."""
    M, H = x.shape
    tm = min(512, _round_up(M, 8))
    Mp = _round_up(M, tm)
    x_p = _pad2d(x, Mp, H)
    out = pl.pallas_call(
        functools.partial(_ln_kernel, eps=eps),
        grid=(Mp // tm,),
        in_specs=[pl.BlockSpec((tm, H), lambda i: (i, 0)),
                  pl.BlockSpec((1, H), lambda i: (0, 0)),
                  pl.BlockSpec((1, H), lambda i: (0, 0))],
        out_specs=pl.BlockSpec((tm, H), lambda i: (i, 0)),
        out_shape=jax.ShapeDtypeStruct((Mp, H), out_dtype),
        compiler_params=pltpu.CompilerParams(
            dimension_semantics=("parallel",),
            vmem_limit_bytes=_vmem_limit_bytes()),
    )(x_p, gamma.reshape(1, H).astype(F32), beta.reshape(1, H).astype(F32))
    return out[:M]


def _attention_kernel(q_ref, k_ref, v_ref, m_ref, o_ref, *, scale):
    """One (batch, head) pair per grid step.  q/k/v arrive as lane-dense
    (S, 128) slabs (head dim zero-padded to 128); the context is written
    straight to its own (S, 128) output slab — no concat, no relayouts."""
    q = q_ref[0]                                   # (S, Dp) bf16
    k = k_ref[0]
    v = v_ref[0]
    mask = m_ref[0]                                # (1, S) additive, f32
    # q @ k^T without materializing a transpose (contracts full 128 lanes).
    s = jax.lax.dot_general(q, k, (((1,), (1,)), ((), ())),
                            preferred_element_type=jnp.float32)
    s = s * scale + mask
    s = s - jnp.max(s, axis=-1, keepdims=True)
    p = jnp.exp(s)
    p = p * pl.reciprocal(jnp.sum(p, axis=-1, keepdims=True), approx=True)
    o_ref[0] = jnp.dot(p.astype(v.dtype), v,
                       preferred_element_type=jnp.float32).astype(o_ref.dtype)


def attention(qkv, add_mask, n_heads, head_dim, dp):
    """qkv: [B, S, 3*n_heads*dp] bf16 (per-head q|k|v slabs, head dim padded
    to dp=128); add_mask: [B, 1, S] f32 -> context [B, S, n_heads*dp]."""
    B, S, _ = qkv.shape
    scale = 1.0 / float(head_dim) ** 0.5
    return pl.pallas_call(
        functools.partial(_attention_kernel, scale=scale),
        grid=(B, n_heads),
        in_specs=[
            pl.BlockSpec((1, S, dp), lambda b, h: (b, 0, h)),
            pl.BlockSpec((1, S, dp), lambda b, h: (b, 0, n_heads + h)),
            pl.BlockSpec((1, S, dp), lambda b, h: (b, 0, 2 * n_heads + h)),
            pl.BlockSpec((1, 1, S), lambda b, h: (b, 0, 0)),
        ],
        out_specs=pl.BlockSpec((1, S, dp), lambda b, h: (b, 0, h)),
        out_shape=jax.ShapeDtypeStruct((B, S, n_heads * dp), BF16),
        compiler_params=pltpu.CompilerParams(
            dimension_semantics=("parallel", "parallel"),
            vmem_limit_bytes=_vmem_limit_bytes()),
    )(qkv, qkv, qkv, add_mask)


def _pooler_head_kernel(cls_ref, wp_ref, bp_ref, wc_ref, bc_ref, o_ref):
    """Pooler (Linear + tanh on CLS) fused with the scoring head."""
    pooled = jnp.tanh(
        jnp.dot(cls_ref[...], wp_ref[...],
                preferred_element_type=jnp.float32) + bp_ref[...])
    o_ref[...] = (jnp.dot(pooled.astype(wc_ref.dtype), wc_ref[...],
                          preferred_element_type=jnp.float32)
                  + bc_ref[...]).astype(o_ref.dtype)


def pooler_head(cls, wp, bp, wc, bc):
    """logits = tanh(cls @ wp + bp) @ wc + bc  (single tiny kernel)."""
    B, H = cls.shape
    n_class = wc.shape[1]
    Bp = _round_up(B, 8)
    Np = _round_up(n_class, 128)
    out = pl.pallas_call(
        _pooler_head_kernel,
        out_shape=jax.ShapeDtypeStruct((Bp, Np), F32),
        compiler_params=pltpu.CompilerParams(
            vmem_limit_bytes=_vmem_limit_bytes()),
    )(_pad2d(cls.astype(BF16), Bp, H),
      wp.astype(BF16),
      bp.reshape(1, H).astype(F32),
      _pad2d(wc.astype(BF16), H, Np),
      _pad2d(bc.reshape(1, n_class).astype(F32), 1, Np))
    return out[:B, :n_class]


# --------------------------- parameters / forward ---------------------------

def _pack_qkv(wq, wk, wv, bq, bk, bv, n_heads, dh, dp):
    """Permute + zero-pad the fused QKV projection so each head occupies a
    lane-dense dp(=128)-wide slab: columns = [q heads | k heads | v heads]."""
    H = wq.shape[0]

    def pad_w(w):
        w = w.reshape(H, n_heads, dh)
        return jnp.pad(w, ((0, 0), (0, 0), (0, dp - dh))).reshape(H, n_heads * dp)

    def pad_b(b):
        b = b.reshape(n_heads, dh)
        return jnp.pad(b, ((0, 0), (0, dp - dh))).reshape(n_heads * dp)

    w = jnp.concatenate([pad_w(wq), pad_w(wk), pad_w(wv)], axis=1)
    b = jnp.concatenate([pad_b(bq), pad_b(bk), pad_b(bv)], axis=0)
    return w, b


def _pack_wo(wo, n_heads, dh, dp):
    """Zero-pad the attention-output projection rows so it consumes the
    padded per-head context directly (absorbs the un-padding into the GEMM)."""
    H = wo.shape[1]
    wo = wo.reshape(n_heads, dh, H)
    return jnp.pad(wo, ((0, 0), (0, dp - dh), (0, 0))).reshape(n_heads * dp, H)


def init_params(key, *, vocab, max_pos, type_vocab, hidden, n_layers,
                n_heads, intermediate, n_class):
    dh = hidden // n_heads
    dp = max(128, _round_up(dh, 128))
    keys = iter(jax.random.split(key, 8 + 8 * n_layers))
    std = 0.02

    def nrm(shape):
        return jax.random.normal(next(keys), shape, F32) * std

    params = {
        "word_emb": nrm((vocab, hidden)),
        "pos_emb": nrm((max_pos, hidden)),
        "type_emb": nrm((type_vocab, hidden)),
        "emb_ln_g": jnp.ones((hidden,), F32),
        "emb_ln_b": jnp.zeros((hidden,), F32),
        "pooler_w": nrm((hidden, hidden)).astype(BF16),
        "pooler_b": jnp.zeros((hidden,), F32),
        "cls_w": nrm((hidden, n_class)).astype(BF16),   # scoring_list[task_id]
        "cls_b": jnp.zeros((n_class,), F32),
        "layers": [],
    }
    for _ in range(n_layers):
        wq, wk, wv = nrm((hidden, hidden)), nrm((hidden, hidden)), nrm((hidden, hidden))
        bq = bk = bv = jnp.zeros((hidden,), F32)
        wqkv_p, bqkv_p = _pack_qkv(wq, wk, wv, bq, bk, bv, n_heads, dh, dp)
        wo_p = _pack_wo(nrm((hidden, hidden)), n_heads, dh, dp)
        params["layers"].append({
            "wqkv": wqkv_p.astype(BF16), "bqkv": bqkv_p,
            "wo": wo_p.astype(BF16), "bo": jnp.zeros((hidden,), F32),
            "ln1_g": jnp.ones((hidden,), F32), "ln1_b": jnp.zeros((hidden,), F32),
            "wi": nrm((hidden, intermediate)).astype(BF16),
            "bi": jnp.zeros((intermediate,), F32),
            "wf": nrm((intermediate, hidden)).astype(BF16),
            "bf": jnp.zeros((hidden,), F32),
            "ln2_g": jnp.ones((hidden,), F32), "ln2_b": jnp.zeros((hidden,), F32),
        })
    return params


def san_bert_forward(params, input_ids, token_type_ids, attention_mask,
                     n_heads):
    """== SANBertNetwork.forward for a classification task (task_obj != None,
    decoder_opt == 0): BERT encode -> Pooler(CLS) -> dropout (identity in
    eval) -> Linear scoring head -> logits [B, n_class]."""
    B, S = input_ids.shape
    H = params["word_emb"].shape[1]
    dh = H // n_heads
    dp = max(128, _round_up(dh, 128))

    # --- BERT embeddings (gathers in plain JAX, LayerNorm in Pallas) ---
    positions = jnp.arange(S, dtype=jnp.int32)[None, :]
    emb = (params["word_emb"][input_ids]
           + params["pos_emb"][positions]
           + params["type_emb"][token_type_ids])                   # (B,S,H) f32
    x = layernorm(emb.reshape(B * S, H),
                  params["emb_ln_g"], params["emb_ln_b"])          # bf16

    # additive attention mask (B, 1, S): 0 where valid / -1e4 where padded
    add_mask = ((1.0 - attention_mask.astype(F32)) * -10000.0)[:, None, :]

    # --- transformer layers ---
    for lyr in params["layers"]:
        qkv = linear(x, lyr["wqkv"], lyr["bqkv"])                  # (B*S, 3*nh*dp)
        ctx = attention(qkv.reshape(B, S, 3 * n_heads * dp),
                        add_mask, n_heads, dh, dp)                 # (B, S, nh*dp)
        x = linear_res_ln(ctx.reshape(B * S, n_heads * dp),
                          lyr["wo"], lyr["bo"],
                          x, lyr["ln1_g"], lyr["ln1_b"])           # add & norm
        x = ffn_fused(x, lyr["wi"], lyr["bi"], lyr["wf"], lyr["bf"],
                      x, lyr["ln2_g"], lyr["ln2_b"])               # FFN + add & norm

    last_hidden_state = x.reshape(B, S, H)

    # --- Pooler (CLS -> Linear -> tanh) + scoring head (fused kernel) ---
    # TODO(synk): DropoutWrapper is a deterministic no-op here (eval-mode dropout).
    cls = last_hidden_state[:, 0, :]
    logits = pooler_head(cls, params["pooler_w"], params["pooler_b"],
                         params["cls_w"], params["cls_b"])
    return logits


if __name__ == "__main__":
    B, S, H, N_HEADS, N_LAYERS, INTER = 2, 8, 32, 4, 2, 64
    VOCAB, MAX_POS, TYPE_VOCAB, N_CLASS = 64, 16, 2, 3

    key = jax.random.PRNGKey(0)
    pkey, ikey = jax.random.split(key)
    params = init_params(pkey, vocab=VOCAB, max_pos=MAX_POS,
                         type_vocab=TYPE_VOCAB, hidden=H, n_layers=N_LAYERS,
                         n_heads=N_HEADS, intermediate=INTER, n_class=N_CLASS)

    input_ids = jax.random.randint(ikey, (B, S), 0, VOCAB, dtype=jnp.int32)
    token_type_ids = jnp.zeros((B, S), jnp.int32)
    attention_mask = jnp.ones((B, S), jnp.int32)

    fwd = jax.jit(san_bert_forward, static_argnames=("n_heads",))
    logits = fwd(params, input_ids, token_type_ids, attention_mask,
                 n_heads=N_HEADS)
    jax.block_until_ready(logits)
    assert logits.shape == (B, N_CLASS) and logits.dtype == jnp.float32
    print("KERNEL_OK")
</pallas_src>

<mosaic_0001>
module attributes {stable_mosaic.version = 11 : i64} {
  func.func @_ln_kernel(%arg0: i32, %arg1: memref<16x32xf32, #tpu.memory_space<vmem>>, %arg2: memref<1x32xf32, #tpu.memory_space<vmem>>, %arg3: memref<1x32xf32, #tpu.memory_space<vmem>>, %arg4: memref<16x32xbf16, #tpu.memory_space<vmem>>) attributes {dimension_semantics = [#tpu.dimension_semantics<parallel>], iteration_bounds = array<i64: 1>, scalar_prefetch = 0 : i64, scratch_operands = 0 : i64, tpu.core_type = #tpu.core_type<tc>, window_params = [{transform_indices = @transform_0, window_bounds = array<i64: 16, 32>}, {pipeline_mode = #tpu.pipeline_mode<synchronous>, transform_indices = @transform_1, window_bounds = array<i64: 1, 32>}, {pipeline_mode = #tpu.pipeline_mode<synchronous>, transform_indices = @transform_2, window_bounds = array<i64: 1, 32>}, {transform_indices = @transform_3, window_bounds = array<i64: 16, 32>}]} {
    %c0 = arith.constant 0 : index
    %c0_0 = arith.constant 0 : index
    %0 = vector.load %arg1[%c0, %c0_0] : memref<16x32xf32, #tpu.memory_space<vmem>>, vector<16x32xf32>
    %cst = arith.constant dense<0.000000e+00> : vector<16xf32>
    %1 = vector.multi_reduction <add>, %0, %cst [1] : vector<16x32xf32> to vector<16xf32>
    %2 = vector.shape_cast %1 : vector<16xf32> to vector<16x1xf32>
    %cst_1 = arith.constant 3.200000e+01 : f32
    %3 = vector.broadcast %cst_1 : f32 to vector<16x1xf32>
    %4 = arith.divf %2, %3 : vector<16x1xf32>
    %5 = vector.broadcast %4 : vector<16x1xf32> to vector<16x32xf32>
    %6 = arith.subf %0, %5 : vector<16x32xf32>
    %7 = arith.mulf %6, %6 : vector<16x32xf32>
    %cst_2 = arith.constant dense<0.000000e+00> : vector<16xf32>
    %8 = vector.multi_reduction <add>, %7, %cst_2 [1] : vector<16x32xf32> to vector<16xf32>
    %9 = vector.shape_cast %8 : vector<16xf32> to vector<16x1xf32>
    %cst_3 = arith.constant 3.200000e+01 : f32
    %10 = vector.broadcast %cst_3 : f32 to vector<16x1xf32>
    %11 = arith.divf %9, %10 : vector<16x1xf32>
    %cst_4 = arith.constant 9.99999996E-13 : f32
    %12 = vector.broadcast %cst_4 : f32 to vector<16x1xf32>
    %13 = arith.addf %11, %12 : vector<16x1xf32>
    %14 = math.rsqrt %13 : vector<16x1xf32>
    %15 = vector.broadcast %14 : vector<16x1xf32> to vector<16x32xf32>
    %16 = arith.mulf %6, %15 : vector<16x32xf32>
    %c0_5 = arith.constant 0 : index
    %c0_6 = arith.constant 0 : index
    %17 = vector.load %arg2[%c0_5, %c0_6] : memref<1x32xf32, #tpu.memory_space<vmem>>, vector<1x32xf32>
    %18 = vector.broadcast %17 : vector<1x32xf32> to vector<16x32xf32>
    %19 = arith.mulf %16, %18 : vector<16x32xf32>
    %c0_7 = arith.constant 0 : index
    %c0_8 = arith.constant 0 : index
    %20 = vector.load %arg3[%c0_7, %c0_8] : memref<1x32xf32, #tpu.memory_space<vmem>>, vector<1x32xf32>
    %21 = vector.broadcast %20 : vector<1x32xf32> to vector<16x32xf32>
    %22 = arith.addf %19, %21 : vector<16x32xf32>
    %23 = arith.truncf %22 : vector<16x32xf32> to vector<16x32xbf16>
    %c0_9 = arith.constant 0 : index
    %c0_10 = arith.constant 0 : index
    %24 = vector.load %arg4[%c0_9, %c0_10] : memref<16x32xbf16, #tpu.memory_space<vmem>>, vector<16x32xbf16>
    tpu.vector_store %arg4[%c0_9, %c0_10], %23 {strides = array<i32>} : memref<16x32xbf16, #tpu.memory_space<vmem>>, vector<16x32xbf16>,
    return
  }
  func.func @transform_0(%arg0: i32) -> (i32, i32) {
    %c0_i32 = arith.constant 0 : i32
    %c0_i32_0 = arith.constant 0 : i32
    return %arg0, %c0_i32 : i32, i32
  }
  func.func @transform_1(%arg0: i32) -> (i32, i32) {
    %c0_i32 = arith.constant 0 : i32
    %c0_i32_0 = arith.constant 0 : i32
    %c0_i32_1 = arith.constant 0 : i32
    return %c0_i32, %c0_i32_0 : i32, i32
  }
  func.func @transform_2(%arg0: i32) -> (i32, i32) {
    %c0_i32 = arith.constant 0 : i32
    %c0_i32_0 = arith.constant 0 : i32
    %c0_i32_1 = arith.constant 0 : i32
    return %c0_i32, %c0_i32_0 : i32, i32
  }
  func.func @transform_3(%arg0: i32) -> (i32, i32) {
    %c0_i32 = arith.constant 0 : i32
    %c0_i32_0 = arith.constant 0 : i32
    return %arg0, %c0_i32 : i32, i32
  }
}

module attributes {stable_mosaic.version = 11 : i64} {
  func.func @_attention_kernel(%arg0: i32, %arg1: i32, %arg2: memref<1x8x128xbf16, #tpu.memory_space<vmem>>, %arg3: memref<1x8x128xbf16, #tpu.memory_space<vmem>>, %arg4: memref<1x8x128xbf16, #tpu.memory_space<vmem>>, %arg5: memref<1x1x8xf32, #tpu.memory_space<vmem>>, %arg6: memref<1x8x128xbf16, #tpu.memory_space<vmem>>) attributes {dimension_semantics = [#tpu.dimension_semantics<parallel>, #tpu.dimension_semantics<parallel>], iteration_bounds = array<i64: 2, 4>, scalar_prefetch = 0 : i64, scratch_operands = 0 : i64, tpu.core_type = #tpu.core_type<tc>, window_params = [{transform_indices = @transform_0, window_bounds = array<i64: 1, 8, 128>}, {transform_indices = @transform_1, window_bounds = array<i64: 1, 8, 128>}, {transform_indices = @transform_2, window_bounds = array<i64: 1, 8, 128>}, {transform_indices = @transform_3, window_bounds = array<i64: 1, 1, 8>}, {transform_indices = @transform_4, window_bounds = array<i64: 1, 8, 128>}]} {
    %c0 = arith.constant 0 : index
    %c0_0 = arith.constant 0 : index
    %c0_1 = arith.constant 0 : index
    %0 = vector.load %arg2[%c0, %c0_0, %c0_1] : memref<1x8x128xbf16, #tpu.memory_space<vmem>>, vector<1x8x128xbf16>
    %1 = vector.shape_cast %0 : vector<1x8x128xbf16> to vector<8x128xbf16>
    %c0_2 = arith.constant 0 : index
    %c0_3 = arith.constant 0 : index
    %c0_4 = arith.constant 0 : index
    %2 = vector.load %arg3[%c0_2, %c0_3, %c0_4] : memref<1x8x128xbf16, #tpu.memory_space<vmem>>, vector<1x8x128xbf16>
    %3 = vector.shape_cast %2 : vector<1x8x128xbf16> to vector<8x128xbf16>
    %c0_5 = arith.constant 0 : index
    %c0_6 = arith.constant 0 : index
    %c0_7 = arith.constant 0 : index
    %4 = vector.load %arg4[%c0_5, %c0_6, %c0_7] : memref<1x8x128xbf16, #tpu.memory_space<vmem>>, vector<1x8x128xbf16>
    %5 = vector.shape_cast %4 : vector<1x8x128xbf16> to vector<8x128xbf16>
    %c0_8 = arith.constant 0 : index
    %c0_9 = arith.constant 0 : index
    %c0_10 = arith.constant 0 : index
    %6 = vector.load %arg5[%c0_8, %c0_9, %c0_10] : memref<1x1x8xf32, #tpu.memory_space<vmem>>, vector<1x1x8xf32>
    %7 = vector.shape_cast %6 : vector<1x1x8xf32> to vector<1x8xf32>
    %cst = arith.constant dense<0.000000e+00> : vector<8x8xf32>
    %8 = tpu.matmul %1, %3, %cst {dimension_numbers = #tpu.dot_dimension_numbers<[1], [1], [0], [0], [0, 0, 1, 0], [], []>} : vector<8x128xbf16>, vector<8x128xbf16>, vector<8x8xf32> -> vector<8x8xf32>
    %cst_11 = arith.constant 0.353553385 : f32
    %9 = vector.broadcast %cst_11 : f32 to vector<8x8xf32>
    %10 = arith.mulf %8, %9 : vector<8x8xf32>
    %11 = vector.broadcast %7 : vector<1x8xf32> to vector<8x8xf32>
    %12 = arith.addf %10, %11 : vector<8x8xf32>
    %cst_12 = arith.constant dense<0xFF800000> : vector<8xf32>
    %13 = vector.multi_reduction <maximumf>, %12, %cst_12 [1] : vector<8x8xf32> to vector<8xf32>
    %14 = vector.shape_cast %13 : vector<8xf32> to vector<8x1xf32>
    %15 = vector.broadcast %14 : vector<8x1xf32> to vector<8x8xf32>
    %16 = arith.subf %12, %15 : vector<8x8xf32>
    %17 = math.exp %16 : vector<8x8xf32>
    %cst_13 = arith.constant dense<0.000000e+00> : vector<8xf32>
    %18 = vector.multi_reduction <add>, %17, %cst_13 [1] : vector<8x8xf32> to vector<8xf32>
    %19 = vector.shape_cast %18 : vector<8xf32> to vector<8x1xf32>
    %20 = tpu.reciprocal %19 {approx = true} : vector<8x1xf32> -> vector<8x1xf32>
    %21 = vector.broadcast %20 : vector<8x1xf32> to vector<8x8xf32>
    %22 = arith.mulf %17, %21 : vector<8x8xf32>
    %23 = arith.truncf %22 : vector<8x8xf32> to vector<8x8xbf16>
    %cst_14 = arith.constant dense<0.000000e+00> : vector<8x128xf32>
    %24 = tpu.matmul %23, %5, %cst_14 {dimension_numbers = #tpu.dot_dimension_numbers<[1], [0], [0], [1], [0, 0, 1, 1], [], []>} : vector<8x8xbf16>, vector<8x128xbf16>, vector<8x128xf32> -> vector<8x128xf32>
    %25 = arith.truncf %24 : vector<8x128xf32> to vector<8x128xbf16>
    %c0_15 = arith.constant 0 : index
    %c0_16 = arith.constant 0 : index
    %c0_17 = arith.constant 0 : index
    %26 = vector.load %arg6[%c0_15, %c0_16, %c0_17] : memref<1x8x128xbf16, #tpu.memory_space<vmem>>, vector<1x8x128xbf16>
    %27 = vector.shape_cast %26 : vector<1x8x128xbf16> to vector<8x128xbf16>
    %28 = vector.shape_cast %25 : vector<8x128xbf16> to vector<1x8x128xbf16>
    tpu.vector_store %arg6[%c0_15, %c0_16, %c0_17], %28 {strides = array<i32>} : memref<1x8x128xbf16, #tpu.memory_space<vmem>>, vector<1x8x128xbf16>,
    return
  }
  func.func @transform_0(%arg0: i32, %arg1: i32) -> (i32, i32, i32) {
    %c0_i32 = arith.constant 0 : i32
    %c0_i32_0 = arith.constant 0 : i32
    return %arg0, %c0_i32, %arg1 : i32, i32, i32
  }
  func.func @transform_1(%arg0: i32, %arg1: i32) -> (i32, i32, i32) {
    %c4_i32 = arith.constant 4 : i32
    %0 = arith.addi %c4_i32, %arg1 : i32
    %c0_i32 = arith.constant 0 : i32
    %c0_i32_0 = arith.constant 0 : i32
    return %arg0, %c0_i32, %0 : i32, i32, i32
  }
  func.func @transform_2(%arg0: i32, %arg1: i32) -> (i32, i32, i32) {
    %c8_i32 = arith.constant 8 : i32
    %0 = arith.addi %c8_i32, %arg1 : i32
    %c0_i32 = arith.constant 0 : i32
    %c0_i32_0 = arith.constant 0 : i32
    return %arg0, %c0_i32, %0 : i32, i32, i32
  }
  func.func @transform_3(%arg0: i32, %arg1: i32) -> (i32, i32, i32) {
    %c0_i32 = arith.constant 0 : i32
    %c0_i32_0 = arith.constant 0 : i32
    %c0_i32_1 = arith.constant 0 : i32
    return %arg0, %c0_i32, %c0_i32_0 : i32, i32, i32
  }
  func.func @transform_4(%arg0: i32, %arg1: i32) -> (i32, i32, i32) {
    %c0_i32 = arith.constant 0 : i32
    %c0_i32_0 = arith.constant 0 : i32
    return %arg0, %c0_i32, %arg1 : i32, i32, i32
  }
}

module attributes {stable_mosaic.version = 11 : i64} {
  func.func @_matmul_kernel(%arg0: i32, %arg1: i32, %arg2: i32, %arg3: memref<16x128xbf16, #tpu.memory_space<vmem>>, %arg4: memref<128x512xbf16, #tpu.memory_space<vmem>>, %arg5: memref<1x512xf32, #tpu.memory_space<vmem>>, %arg6: memref<16x512xbf16, #tpu.memory_space<vmem>>, %arg7: memref<16x512xf32, #tpu.memory_space<vmem>>) attributes {dimension_semantics = [#tpu.dimension_semantics<parallel>, #tpu.dimension_semantics<parallel>, #tpu.dimension_semantics<arbitrary>], iteration_bounds = array<i64: 1, 3, 1>, scalar_prefetch = 0 : i64, scratch_operands = 1 : i64, tpu.core_type = #tpu.core_type<tc>, window_params = [{transform_indices = @transform_0, window_bounds = array<i64: 16, 128>}, {transform_indices = @transform_1, window_bounds = array<i64: 128, 512>}, {transform_indices = @transform_2, window_bounds = array<i64: 1, 512>}, {transform_indices = @transform_3, window_bounds = array<i64: 16, 512>}]} {
    %c0_i32 = arith.constant 0 : i32
    %0 = arith.cmpi eq, %arg2, %c0_i32 : i32
    %1 = arith.extui %0 : i1 to i32
    %c0_i32_0 = arith.constant 0 : i32
    %2 = arith.cmpi ne, %1, %c0_i32_0 : i32
    scf.if %2 {
      %cst_10 = arith.constant 0.000000e+00 : f32
      %12 = vector.broadcast %cst_10 : f32 to vector<16x512xf32>
      %c0_11 = arith.constant 0 : index
      %c0_12 = arith.constant 0 : index
      %13 = vector.load %arg7[%c0_11, %c0_12] : memref<16x512xf32, #tpu.memory_space<vmem>>, vector<16x512xf32>
      tpu.vector_store %arg7[%c0_11, %c0_12], %12 {strides = array<i32>} : memref<16x512xf32, #tpu.memory_space<vmem>>, vector<16x512xf32>,
    } else {
    }
    %c0 = arith.constant 0 : index
    %c0_1 = arith.constant 0 : index
    %3 = vector.load %arg7[%c0, %c0_1] : memref<16x512xf32, #tpu.memory_space<vmem>>, vector<16x512xf32>
    %c0_2 = arith.constant 0 : index
    %c0_3 = arith.constant 0 : index
    %4 = vector.load %arg3[%c0_2, %c0_3] : memref<16x128xbf16, #tpu.memory_space<vmem>>, vector<16x128xbf16>
    %c0_4 = arith.constant 0 : index
    %c0_5 = arith.constant 0 : index
    %5 = vector.load %arg4[%c0_4, %c0_5] : memref<128x512xbf16, #tpu.memory_space<vmem>>, vector<128x512xbf16>
    %cst = arith.constant dense<0.000000e+00> : vector<16x512xf32>
    %6 = tpu.matmul %4, %5, %cst {dimension_numbers = #tpu.dot_dimension_numbers<[1], [0], [0], [1], [0, 0, 1, 1], [], []>} : vector<16x128xbf16>, vector<128x512xbf16>, vector<16x512xf32> -> vector<16x512xf32>
    %7 = arith.addf %3, %6 : vector<16x512xf32>
    %c0_6 = arith.constant 0 : index
    %c0_7 = arith.constant 0 : index
    %8 = vector.load %arg7[%c0_6, %c0_7] : memref<16x512xf32, #tpu.memory_space<vmem>>, vector<16x512xf32>
    tpu.vector_store %arg7[%c0_6, %c0_7], %7 {strides = array<i32>} : memref<16x512xf32, #tpu.memory_space<vmem>>, vector<16x512xf32>,
    %c0_i32_8 = arith.constant 0 : i32
    %9 = arith.cmpi eq, %arg2, %c0_i32_8 : i32
    %10 = arith.extui %9 : i1 to i32
    %c0_i32_9 = arith.constant 0 : i32
    %11 = arith.cmpi ne, %10, %c0_i32_9 : i32
    scf.if %11 {
      %c0_10 = arith.constant 0 : index
      %c0_11 = arith.constant 0 : index
      %12 = vector.load %arg7[%c0_10, %c0_11] : memref<16x512xf32, #tpu.memory_space<vmem>>, vector<16x512xf32>
      %c0_12 = arith.constant 0 : index
      %c0_13 = arith.constant 0 : index
      %13 = vector.load %arg5[%c0_12, %c0_13] : memref<1x512xf32, #tpu.memory_space<vmem>>, vector<1x512xf32>
      %14 = vector.broadcast %13 : vector<1x512xf32> to vector<16x512xf32>
      %15 = arith.addf %12, %14 : vector<16x512xf32>
      %16 = arith.truncf %15 : vector<16x512xf32> to vector<16x512xbf16>
      %c0_14 = arith.constant 0 : index
      %c0_15 = arith.constant 0 : index
      %17 = vector.load %arg6[%c0_14, %c0_15] : memref<16x512xbf16, #tpu.memory_space<vmem>>, vector<16x512xbf16>
      tpu.vector_store %arg6[%c0_14, %c0_15], %16 {strides = array<i32>} : memref<16x512xbf16, #tpu.memory_space<vmem>>, vector<16x512xbf16>,
    } else {
    }
    return
  }
  func.func @transform_0(%arg0: i32, %arg1: i32, %arg2: i32) -> (i32, i32) {
    %c0_i32 = arith.constant 0 : i32
    return %arg0, %arg2 : i32, i32
  }
  func.func @transform_1(%arg0: i32, %arg1: i32, %arg2: i32) -> (i32, i32) {
    %c0_i32 = arith.constant 0 : i32
    return %arg2, %arg1 : i32, i32
  }
  func.func @transform_2(%arg0: i32, %arg1: i32, %arg2: i32) -> (i32, i32) {
    %c0_i32 = arith.constant 0 : i32
    %c0_i32_0 = arith.constant 0 : i32
    return %c0_i32, %arg1 : i32, i32
  }
  func.func @transform_3(%arg0: i32, %arg1: i32, %arg2: i32) -> (i32, i32) {
    %c0_i32 = arith.constant 0 : i32
    return %arg0, %arg1 : i32, i32
  }
}

module attributes {stable_mosaic.version = 11 : i64} {
  func.func @_matmul_res_ln_kernel(%arg0: i32, %arg1: i32, %arg2: memref<16x512xbf16, #tpu.memory_space<vmem>>, %arg3: memref<512x32xbf16, #tpu.memory_space<vmem>>, %arg4: memref<1x32xf32, #tpu.memory_space<vmem>>, %arg5: memref<16x32xbf16, #tpu.memory_space<vmem>>, %arg6: memref<1x32xf32, #tpu.memory_space<vmem>>, %arg7: memref<1x32xf32, #tpu.memory_space<vmem>>, %arg8: memref<16x32xbf16, #tpu.memory_space<vmem>>, %arg9: memref<16x32xf32, #tpu.memory_space<vmem>>) attributes {dimension_semantics = [#tpu.dimension_semantics<parallel>, #tpu.dimension_semantics<arbitrary>], iteration_bounds = array<i64: 1, 1>, scalar_prefetch = 0 : i64, scratch_operands = 1 : i64, tpu.core_type = #tpu.core_type<tc>, window_params = [{transform_indices = @transform_0, window_bounds = array<i64: 16, 512>}, {transform_indices = @transform_1, window_bounds = array<i64: 512, 32>}, {pipeline_mode = #tpu.pipeline_mode<synchronous>, transform_indices = @transform_2, window_bounds = array<i64: 1, 32>}, {transform_indices = @transform_3, window_bounds = array<i64: 16, 32>}, {pipeline_mode = #tpu.pipeline_mode<synchronous>, transform_indices = @transform_4, window_bounds = array<i64: 1, 32>}, {pipeline_mode = #tpu.pipeline_mode<synchronous>, transform_indices = @transform_5, window_bounds = array<i64: 1, 32>}, {transform_indices = @transform_6, window_bounds = array<i64: 16, 32>}]} {
    %c0_i32 = arith.constant 0 : i32
    %0 = arith.cmpi eq, %arg1, %c0_i32 : i32
    %1 = arith.extui %0 : i1 to i32
    %c0_i32_0 = arith.constant 0 : i32
    %2 = arith.cmpi ne, %1, %c0_i32_0 : i32
    scf.if %2 {
      %cst_10 = arith.constant 0.000000e+00 : f32
      %12 = vector.broadcast %cst_10 : f32 to vector<16x32xf32>
      %c0_11 = arith.constant 0 : index
      %c0_12 = arith.constant 0 : index
      %13 = vector.load %arg9[%c0_11, %c0_12] : memref<16x32xf32, #tpu.memory_space<vmem>>, vector<16x32xf32>
      tpu.vector_store %arg9[%c0_11, %c0_12], %12 {strides = array<i32>} : memref<16x32xf32, #tpu.memory_space<vmem>>, vector<16x32xf32>,
    } else {
    }
    %c0 = arith.constant 0 : index
    %c0_1 = arith.constant 0 : index
    %3 = vector.load %arg9[%c0, %c0_1] : memref<16x32xf32, #tpu.memory_space<vmem>>, vector<16x32xf32>
    %c0_2 = arith.constant 0 : index
    %c0_3 = arith.constant 0 : index
    %4 = vector.load %arg2[%c0_2, %c0_3] : memref<16x512xbf16, #tpu.memory_space<vmem>>, vector<16x512xbf16>
    %c0_4 = arith.constant 0 : index
    %c0_5 = arith.constant 0 : index
    %5 = vector.load %arg3[%c0_4, %c0_5] : memref<512x32xbf16, #tpu.memory_space<vmem>>, vector<512x32xbf16>
    %cst = arith.constant dense<0.000000e+00> : vector<16x32xf32>
    %6 = tpu.matmul %4, %5, %cst {dimension_numbers = #tpu.dot_dimension_numbers<[1], [0], [0], [1], [0, 0, 1, 1], [], []>} : vector<16x512xbf16>, vector<512x32xbf16>, vector<16x32xf32> -> vector<16x32xf32>
    %7 = arith.addf %3, %6 : vector<16x32xf32>
    %c0_6 = arith.constant 0 : index
    %c0_7 = arith.constant 0 : index
    %8 = vector.load %arg9[%c0_6, %c0_7] : memref<16x32xf32, #tpu.memory_space<vmem>>, vector<16x32xf32>
    tpu.vector_store %arg9[%c0_6, %c0_7], %7 {strides = array<i32>} : memref<16x32xf32, #tpu.memory_space<vmem>>, vector<16x32xf32>,
    %c0_i32_8 = arith.constant 0 : i32
    %9 = arith.cmpi eq, %arg1, %c0_i32_8 : i32
    %10 = arith.extui %9 : i1 to i32
    %c0_i32_9 = arith.constant 0 : i32
    %11 = arith.cmpi ne, %10, %c0_i32_9 : i32
    scf.if %11 {
      %c0_10 = arith.constant 0 : index
      %c0_11 = arith.constant 0 : index
      %12 = vector.load %arg9[%c0_10, %c0_11] : memref<16x32xf32, #tpu.memory_space<vmem>>, vector<16x32xf32>
      %c0_12 = arith.constant 0 : index
      %c0_13 = arith.constant 0 : index
      %13 = vector.load %arg4[%c0_12, %c0_13] : memref<1x32xf32, #tpu.memory_space<vmem>>, vector<1x32xf32>
      %14 = vector.broadcast %13 : vector<1x32xf32> to vector<16x32xf32>
      %15 = arith.addf %12, %14 : vector<16x32xf32>
      %c0_14 = arith.constant 0 : index
      %c0_15 = arith.constant 0 : index
      %16 = vector.load %arg5[%c0_14, %c0_15] : memref<16x32xbf16, #tpu.memory_space<vmem>>, vector<16x32xbf16>
      %17 = arith.extf %16 : vector<16x32xbf16> to vector<16x32xf32>
      %18 = arith.addf %15, %17 : vector<16x32xf32>
      %cst_16 = arith.constant dense<0.000000e+00> : vector<16xf32>
      %19 = vector.multi_reduction <add>, %18, %cst_16 [1] : vector<16x32xf32> to vector<16xf32>
      %20 = vector.shape_cast %19 : vector<16xf32> to vector<16x1xf32>
      %cst_17 = arith.constant 3.200000e+01 : f32
      %21 = vector.broadcast %cst_17 : f32 to vector<16x1xf32>
      %22 = arith.divf %20, %21 : vector<16x1xf32>
      %23 = vector.broadcast %22 : vector<16x1xf32> to vector<16x32xf32>
      %24 = arith.subf %18, %23 : vector<16x32xf32>
      %25 = arith.mulf %24, %24 : vector<16x32xf32>
      %cst_18 = arith.constant dense<0.000000e+00> : vector<16xf32>
      %26 = vector.multi_reduction <add>, %25, %cst_18 [1] : vector<16x32xf32> to vector<16xf32>
      %27 = vector.shape_cast %26 : vector<16xf32> to vector<16x1xf32>
      %cst_19 = arith.constant 3.200000e+01 : f32
      %28 = vector.broadcast %cst_19 : f32 to vector<16x1xf32>
      %29 = arith.divf %27, %28 : vector<16x1xf32>
      %cst_20 = arith.constant 9.99999996E-13 : f32
      %30 = vector.broadcast %cst_20 : f32 to vector<16x1xf32>
      %31 = arith.addf %29, %30 : vector<16x1xf32>
      %32 = math.rsqrt %31 : vector<16x1xf32>
      %33 = vector.broadcast %32 : vector<16x1xf32> to vector<16x32xf32>
      %34 = arith.mulf %24, %33 : vector<16x32xf32>
      %c0_21 = arith.constant 0 : index
      %c0_22 = arith.constant 0 : index
      %35 = vector.load %arg6[%c0_21, %c0_22] : memref<1x32xf32, #tpu.memory_space<vmem>>, vector<1x32xf32>
      %36 = vector.broadcast %35 : vector<1x32xf32> to vector<16x32xf32>
      %37 = arith.mulf %34, %36 : vector<16x32xf32>
      %c0_23 = arith.constant 0 : index
      %c0_24 = arith.constant 0 : index
      %38 = vector.load %arg7[%c0_23, %c0_24] : memref<1x32xf32, #tpu.memory_space<vmem>>, vector<1x32xf32>
      %39 = vector.broadcast %38 : vector<1x32xf32> to vector<16x32xf32>
      %40 = arith.addf %37, %39 : vector<16x32xf32>
      %41 = arith.truncf %40 : vector<16x32xf32> to vector<16x32xbf16>
      %c0_25 = arith.constant 0 : index
      %c0_26 = arith.constant 0 : index
      %42 = vector.load %arg8[%c0_25, %c0_26] : memref<16x32xbf16, #tpu.memory_space<vmem>>, vector<16x32xbf16>
      tpu.vector_store %arg8[%c0_25, %c0_26], %41 {strides = array<i32>} : memref<16x32xbf16, #tpu.memory_space<vmem>>, vector<16x32xbf16>,
    } else {
    }
    return
  }
  func.func @transform_0(%arg0: i32, %arg1: i32) -> (i32, i32) {
    %c0_i32 = arith.constant 0 : i32
    return %arg0, %arg1 : i32, i32
  }
  func.func @transform_1(%arg0: i32, %arg1: i32) -> (i32, i32) {
    %c0_i32 = arith.constant 0 : i32
    %c0_i32_0 = arith.constant 0 : i32
    return %arg1, %c0_i32 : i32, i32
  }
  func.func @transform_2(%arg0: i32, %arg1: i32) -> (i32, i32) {
    %c0_i32 = arith.constant 0 : i32
    %c0_i32_0 = arith.constant 0 : i32
    %c0_i32_1 = arith.constant 0 : i32
    return %c0_i32, %c0_i32_0 : i32, i32
  }
  func.func @transform_3(%arg0: i32, %arg1: i32) -> (i32, i32) {
    %c0_i32 = arith.constant 0 : i32
    %c0_i32_0 = arith.constant 0 : i32
    return %arg0, %c0_i32 : i32, i32
  }
  func.func @transform_4(%arg0: i32, %arg1: i32) -> (i32, i32) {
    %c0_i32 = arith.constant 0 : i32
    %c0_i32_0 = arith.constant 0 : i32
    %c0_i32_1 = arith.constant 0 : i32
    return %c0_i32, %c0_i32_0 : i32, i32
  }
  func.func @transform_5(%arg0: i32, %arg1: i32) -> (i32, i32) {
    %c0_i32 = arith.constant 0 : i32
    %c0_i32_0 = arith.constant 0 : i32
    %c0_i32_1 = arith.constant 0 : i32
    return %c0_i32, %c0_i32_0 : i32, i32
  }
  func.func @transform_6(%arg0: i32, %arg1: i32) -> (i32, i32) {
    %c0_i32 = arith.constant 0 : i32
    %c0_i32_0 = arith.constant 0 : i32
    return %arg0, %c0_i32 : i32, i32
  }
}

module attributes {stable_mosaic.version = 11 : i64} {
  func.func @_pooler_head_kernel(%arg0: memref<8x32xbf16, #tpu.memory_space<vmem>>, %arg1: memref<32x32xbf16, #tpu.memory_space<vmem>>, %arg2: memref<1x32xf32, #tpu.memory_space<vmem>>, %arg3: memref<32x128xbf16, #tpu.memory_space<vmem>>, %arg4: memref<1x128xf32, #tpu.memory_space<vmem>>, %arg5: memref<8x128xf32, #tpu.memory_space<vmem>>) attributes {dimension_semantics = [], scalar_prefetch = 0 : i64, scratch_operands = 0 : i64, tpu.core_type = #tpu.core_type<tc>} {
    %c0 = arith.constant 0 : index
    %c0_0 = arith.constant 0 : index
    %0 = vector.load %arg0[%c0, %c0_0] : memref<8x32xbf16, #tpu.memory_space<vmem>>, vector<8x32xbf16>
    %c0_1 = arith.constant 0 : index
    %c0_2 = arith.constant 0 : index
    %1 = vector.load %arg1[%c0_1, %c0_2] : memref<32x32xbf16, #tpu.memory_space<vmem>>, vector<32x32xbf16>
    %cst = arith.constant dense<0.000000e+00> : vector<8x32xf32>
    %2 = tpu.matmul %0, %1, %cst {dimension_numbers = #tpu.dot_dimension_numbers<[1], [0], [0], [1], [0, 0, 1, 1], [], []>} : vector<8x32xbf16>, vector<32x32xbf16>, vector<8x32xf32> -> vector<8x32xf32>
    %c0_3 = arith.constant 0 : index
    %c0_4 = arith.constant 0 : index
    %3 = vector.load %arg2[%c0_3, %c0_4] : memref<1x32xf32, #tpu.memory_space<vmem>>, vector<1x32xf32>
    %4 = vector.broadcast %3 : vector<1x32xf32> to vector<8x32xf32>
    %5 = arith.addf %2, %4 : vector<8x32xf32>
    %6 = math.tanh %5 : vector<8x32xf32>
    %7 = arith.truncf %6 : vector<8x32xf32> to vector<8x32xbf16>
    %c0_5 = arith.constant 0 : index
    %c0_6 = arith.constant 0 : index
    %8 = vector.load %arg3[%c0_5, %c0_6] : memref<32x128xbf16, #tpu.memory_space<vmem>>, vector<32x128xbf16>
    %cst_7 = arith.constant dense<0.000000e+00> : vector<8x128xf32>
    %9 = tpu.matmul %7, %8, %cst_7 {dimension_numbers = #tpu.dot_dimension_numbers<[1], [0], [0], [1], [0, 0, 1, 1], [], []>} : vector<8x32xbf16>, vector<32x128xbf16>, vector<8x128xf32> -> vector<8x128xf32>
    %c0_8 = arith.constant 0 : index
    %c0_9 = arith.constant 0 : index
    %10 = vector.load %arg4[%c0_8, %c0_9] : memref<1x128xf32, #tpu.memory_space<vmem>>, vector<1x128xf32>
    %11 = vector.broadcast %10 : vector<1x128xf32> to vector<8x128xf32>
    %12 = arith.addf %9, %11 : vector<8x128xf32>
    %c0_10 = arith.constant 0 : index
    %c0_11 = arith.constant 0 : index
    %13 = vector.load %arg5[%c0_10, %c0_11] : memref<8x128xf32, #tpu.memory_space<vmem>>, vector<8x128xf32>
    tpu.vector_store %arg5[%c0_10, %c0_11], %12 {strides = array<i32>} : memref<8x128xf32, #tpu.memory_space<vmem>>, vector<8x128xf32>,
    return
  }
}

module attributes {stable_mosaic.version = 11 : i64} {
  func.func @_ffn_kernel(%arg0: i32, %arg1: i32, %arg2: memref<16x32xbf16, #tpu.memory_space<vmem>>, %arg3: memref<32x128xbf16, #tpu.memory_space<vmem>>, %arg4: memref<1x128xf32, #tpu.memory_space<vmem>>, %arg5: memref<128x32xbf16, #tpu.memory_space<vmem>>, %arg6: memref<1x32xf32, #tpu.memory_space<vmem>>, %arg7: memref<16x32xbf16, #tpu.memory_space<vmem>>, %arg8: memref<1x32xf32, #tpu.memory_space<vmem>>, %arg9: memref<1x32xf32, #tpu.memory_space<vmem>>, %arg10: memref<16x32xbf16, #tpu.memory_space<vmem>>, %arg11: memref<16x32xf32, #tpu.memory_space<vmem>>) attributes {dimension_semantics = [#tpu.dimension_semantics<parallel>, #tpu.dimension_semantics<arbitrary>], iteration_bounds = array<i64: 1, 1>, scalar_prefetch = 0 : i64, scratch_operands = 1 : i64, tpu.core_type = #tpu.core_type<tc>, window_params = [{transform_indices = @transform_0, window_bounds = array<i64: 16, 32>}, {transform_indices = @transform_1, window_bounds = array<i64: 32, 128>}, {transform_indices = @transform_2, window_bounds = array<i64: 1, 128>}, {transform_indices = @transform_3, window_bounds = array<i64: 128, 32>}, {pipeline_mode = #tpu.pipeline_mode<synchronous>, transform_indices = @transform_4, window_bounds = array<i64: 1, 32>}, {transform_indices = @transform_5, window_bounds = array<i64: 16, 32>}, {pipeline_mode = #tpu.pipeline_mode<synchronous>, transform_indices = @transform_6, window_bounds = array<i64: 1, 32>}, {pipeline_mode = #tpu.pipeline_mode<synchronous>, transform_indices = @transform_7, window_bounds = array<i64: 1, 32>}, {transform_indices = @transform_8, window_bounds = array<i64: 16, 32>}]} {
    %c0_i32 = arith.constant 0 : i32
    %0 = arith.cmpi eq, %arg1, %c0_i32 : i32
    %1 = arith.extui %0 : i1 to i32
    %c0_i32_0 = arith.constant 0 : i32
    %2 = arith.cmpi ne, %1, %c0_i32_0 : i32
    scf.if %2 {
      %cst_18 = arith.constant 0.000000e+00 : f32
      %26 = vector.broadcast %cst_18 : f32 to vector<16x32xf32>
      %c0_19 = arith.constant 0 : index
      %c0_20 = arith.constant 0 : index
      %27 = vector.load %arg11[%c0_19, %c0_20] : memref<16x32xf32, #tpu.memory_space<vmem>>, vector<16x32xf32>
      tpu.vector_store %arg11[%c0_19, %c0_20], %26 {strides = array<i32>} : memref<16x32xf32, #tpu.memory_space<vmem>>, vector<16x32xf32>,
    } else {
    }
    %c0 = arith.constant 0 : index
    %c0_1 = arith.constant 0 : index
    %3 = vector.load %arg2[%c0, %c0_1] : memref<16x32xbf16, #tpu.memory_space<vmem>>, vector<16x32xbf16>
    %c0_2 = arith.constant 0 : index
    %c0_3 = arith.constant 0 : index
    %4 = vector.load %arg3[%c0_2, %c0_3] : memref<32x128xbf16, #tpu.memory_space<vmem>>, vector<32x128xbf16>
    %cst = arith.constant dense<0.000000e+00> : vector<16x128xf32>
    %5 = tpu.matmul %3, %4, %cst {dimension_numbers = #tpu.dot_dimension_numbers<[1], [0], [0], [1], [0, 0, 1, 1], [], []>} : vector<16x32xbf16>, vector<32x128xbf16>, vector<16x128xf32> -> vector<16x128xf32>
    %c0_4 = arith.constant 0 : index
    %c0_5 = arith.constant 0 : index
    %6 = vector.load %arg4[%c0_4, %c0_5] : memref<1x128xf32, #tpu.memory_space<vmem>>, vector<1x128xf32>
    %7 = vector.broadcast %6 : vector<1x128xf32> to vector<16x128xf32>
    %8 = arith.addf %5, %7 : vector<16x128xf32>
    %cst_6 = arith.constant 5.000000e-01 : f32
    %9 = vector.broadcast %cst_6 : f32 to vector<16x128xf32>
    %10 = arith.mulf %9, %8 : vector<16x128xf32>
    %cst_7 = arith.constant 0.707106769 : f32
    %11 = vector.broadcast %cst_7 : f32 to vector<16x128xf32>
    %12 = arith.mulf %8, %11 : vector<16x128xf32>
    %13 = math.erf %12 : vector<16x128xf32>
    %cst_8 = arith.constant 1.000000e+00 : f32
    %14 = vector.broadcast %cst_8 : f32 to vector<16x128xf32>
    %15 = arith.addf %14, %13 : vector<16x128xf32>
    %16 = arith.mulf %10, %15 : vector<16x128xf32>
    %c0_9 = arith.constant 0 : index
    %c0_10 = arith.constant 0 : index
    %17 = vector.load %arg11[%c0_9, %c0_10] : memref<16x32xf32, #tpu.memory_space<vmem>>, vector<16x32xf32>
    %18 = arith.truncf %16 : vector<16x128xf32> to vector<16x128xbf16>
    %c0_11 = arith.constant 0 : index
    %c0_12 = arith.constant 0 : index
    %19 = vector.load %arg5[%c0_11, %c0_12] : memref<128x32xbf16, #tpu.memory_space<vmem>>, vector<128x32xbf16>
    %cst_13 = arith.constant dense<0.000000e+00> : vector<16x32xf32>
    %20 = tpu.matmul %18, %19, %cst_13 {dimension_numbers = #tpu.dot_dimension_numbers<[1], [0], [0], [1], [0, 0, 1, 1], [], []>} : vector<16x128xbf16>, vector<128x32xbf16>, vector<16x32xf32> -> vector<16x32xf32>
    %21 = arith.addf %17, %20 : vector<16x32xf32>
    %c0_14 = arith.constant 0 : index
    %c0_15 = arith.constant 0 : index
    %22 = vector.load %arg11[%c0_14, %c0_15] : memref<16x32xf32, #tpu.memory_space<vmem>>, vector<16x32xf32>
    tpu.vector_store %arg11[%c0_14, %c0_15], %21 {strides = array<i32>} : memref<16x32xf32, #tpu.memory_space<vmem>>, vector<16x32xf32>,
    %c0_i32_16 = arith.constant 0 : i32
    %23 = arith.cmpi eq, %arg1, %c0_i32_16 : i32
    %24 = arith.extui %23 : i1 to i32
    %c0_i32_17 = arith.constant 0 : i32
    %25 = arith.cmpi ne, %24, %c0_i32_17 : i32
    scf.if %25 {
      %c0_18 = arith.constant 0 : index
      %c0_19 = arith.constant 0 : index
      %26 = vector.load %arg11[%c0_18, %c0_19] : memref<16x32xf32, #tpu.memory_space<vmem>>, vector<16x32xf32>
      %c0_20 = arith.constant 0 : index
      %c0_21 = arith.constant 0 : index
      %27 = vector.load %arg6[%c0_20, %c0_21] : memref<1x32xf32, #tpu.memory_space<vmem>>, vector<1x32xf32>
      %28 = vector.broadcast %27 : vector<1x32xf32> to vector<16x32xf32>
      %29 = arith.addf %26, %28 : vector<16x32xf32>
      %c0_22 = arith.constant 0 : index
      %c0_23 = arith.constant 0 : index
      %30 = vector.load %arg7[%c0_22, %c0_23] : memref<16x32xbf16, #tpu.memory_space<vmem>>, vector<16x32xbf16>
      %31 = arith.extf %30 : vector<16x32xbf16> to vector<16x32xf32>
      %32 = arith.addf %29, %31 : vector<16x32xf32>
      %cst_24 = arith.constant dense<0.000000e+00> : vector<16xf32>
      %33 = vector.multi_reduction <add>, %32, %cst_24 [1] : vector<16x32xf32> to vector<16xf32>
      %34 = vector.shape_cast %33 : vector<16xf32> to vector<16x1xf32>
      %cst_25 = arith.constant 3.200000e+01 : f32
      %35 = vector.broadcast %cst_25 : f32 to vector<16x1xf32>
      %36 = arith.divf %34, %35 : vector<16x1xf32>
      %37 = vector.broadcast %36 : vector<16x1xf32> to vector<16x32xf32>
      %38 = arith.subf %32, %37 : vector<16x32xf32>
      %39 = arith.mulf %38, %38 : vector<16x32xf32>
      %cst_26 = arith.constant dense<0.000000e+00> : vector<16xf32>
      %40 = vector.multi_reduction <add>, %39, %cst_26 [1] : vector<16x32xf32> to vector<16xf32>
      %41 = vector.shape_cast %40 : vector<16xf32> to vector<16x1xf32>
      %cst_27 = arith.constant 3.200000e+01 : f32
      %42 = vector.broadcast %cst_27 : f32 to vector<16x1xf32>
      %43 = arith.divf %41, %42 : vector<16x1xf32>
      %cst_28 = arith.constant 9.99999996E-13 : f32
      %44 = vector.broadcast %cst_28 : f32 to vector<16x1xf32>
      %45 = arith.addf %43, %44 : vector<16x1xf32>
      %46 = math.rsqrt %45 : vector<16x1xf32>
      %47 = vector.broadcast %46 : vector<16x1xf32> to vector<16x32xf32>
      %48 = arith.mulf %38, %47 : vector<16x32xf32>
      %c0_29 = arith.constant 0 : index
      %c0_30 = arith.constant 0 : index
      %49 = vector.load %arg8[%c0_29, %c0_30] : memref<1x32xf32, #tpu.memory_space<vmem>>, vector<1x32xf32>
      %50 = vector.broadcast %49 : vector<1x32xf32> to vector<16x32xf32>
      %51 = arith.mulf %48, %50 : vector<16x32xf32>
      %c0_31 = arith.constant 0 : index
      %c0_32 = arith.constant 0 : index
      %52 = vector.load %arg9[%c0_31, %c0_32] : memref<1x32xf32, #tpu.memory_space<vmem>>, vector<1x32xf32>
      %53 = vector.broadcast %52 : vector<1x32xf32> to vector<16x32xf32>
      %54 = arith.addf %51, %53 : vector<16x32xf32>
      %55 = arith.truncf %54 : vector<16x32xf32> to vector<16x32xbf16>
      %c0_33 = arith.constant 0 : index
      %c0_34 = arith.constant 0 : index
      %56 = vector.load %arg10[%c0_33, %c0_34] : memref<16x32xbf16, #tpu.memory_space<vmem>>, vector<16x32xbf16>
      tpu.vector_store %arg10[%c0_33, %c0_34], %55 {strides = array<i32>} : memref<16x32xbf16, #tpu.memory_space<vmem>>, vector<16x32xbf16>,
    } else {
    }
    return
  }
  func.func @transform_0(%arg0: i32, %arg1: i32) -> (i32, i32) {
    %c0_i32 = arith.constant 0 : i32
    %c0_i32_0 = arith.constant 0 : i32
    return %arg0, %c0_i32 : i32, i32
  }
  func.func @transform_1(%arg0: i32, %arg1: i32) -> (i32, i32) {
    %c0_i32 = arith.constant 0 : i32
    %c0_i32_0 = arith.constant 0 : i32
    return %c0_i32, %arg1 : i32, i32
  }
  func.func @transform_2(%arg0: i32, %arg1: i32) -> (i32, i32) {
    %c0_i32 = arith.constant 0 : i32
    %c0_i32_0 = arith.constant 0 : i32
    return %c0_i32, %arg1 : i32, i32
  }
  func.func @transform_3(%arg0: i32, %arg1: i32) -> (i32, i32) {
    %c0_i32 = arith.constant 0 : i32
    %c0_i32_0 = arith.constant 0 : i32
    return %arg1, %c0_i32 : i32, i32
  }
  func.func @transform_4(%arg0: i32, %arg1: i32) -> (i32, i32) {
    %c0_i32 = arith.constant 0 : i32
    %c0_i32_0 = arith.constant 0 : i32
    %c0_i32_1 = arith.constant 0 : i32
    return %c0_i32, %c0_i32_0 : i32, i32
  }
  func.func @transform_5(%arg0: i32, %arg1: i32) -> (i32, i32) {
    %c0_i32 = arith.constant 0 : i32
    %c0_i32_0 = arith.constant 0 : i32
    return %arg0, %c0_i32 : i32, i32
  }
  func.func @transform_6(%arg0: i32, %arg1: i32) -> (i32, i32) {
    %c0_i32 = arith.constant 0 : i32
    %c0_i32_0 = arith.constant 0 : i32
    %c0_i32_1 = arith.constant 0 : i32
    return %c0_i32, %c0_i32_0 : i32, i32
  }
  func.func @transform_7(%arg0: i32, %arg1: i32) -> (i32, i32) {
    %c0_i32 = arith.constant 0 : i32
    %c0_i32_0 = arith.constant 0 : i32
    %c0_i32_1 = arith.constant 0 : i32
    return %c0_i32, %c0_i32_0 : i32, i32
  }
  func.func @transform_8(%arg0: i32, %arg1: i32) -> (i32, i32) {
    %c0_i32 = arith.constant 0 : i32
    %c0_i32_0 = arith.constant 0 : i32
    return %arg0, %c0_i32 : i32, i32
  }
}

</mosaic_0001>

<llo_original>
// kernel: san_bert_forward.12
$region0: #{san_bert_forward.12}
  #allocation0 [shape = 'u32[]', space=smem, size = 0x4, offset = 0x4, fixed_abs, tag = 'smem constant byte address 0x4 - core index']
  #allocation1 [shape = 'u32[144,128]{1,0:T(1,128)}', space=vmem, size = 0x12000, scoped, tag = 'internal scratch']
  %s0 = inlined_call_operand.vmem [shape: bf16[2,8,1536], index: 0, kind: input, shape index: {}, may-alias: {0,1,2}]
  %s1 = inlined_call_operand.vmem [shape: bf16[2,8,1536], index: 1, kind: input, shape index: {}, may-alias: {0,1,2}]
  %s2 = inlined_call_operand.vmem [shape: bf16[2,8,1536], index: 2, kind: input, shape index: {}, may-alias: {0,1,2}]
  %s3 = inlined_call_operand.vmem [shape: f32[2,1,8], index: 3, kind: input, shape index: {}]
  %s4 = inlined_call_operand.vmem [shape: bf16[2,8,512], index: 4, kind: output, shape index: {}]
  %s5 = sld [smem:[#allocation0]]
  $region49: #{san_bert_forward.12} parent=0
    _
  %s7 = ssub.s32 1, %s5
  %s8 = scalar_select 0, %s7, %s5
  loop: start=0, step=1, limit=10
  $region2: #{san_bert_forward.12} parent=0 // loop_pre_header
    _
  $region3: #{san_bert_forward.12} parent=0 // loop_header
    %s10 = sphi 0, %s14
    %p11 = scmp.ge.s32.totalorder %s10, 10
    %s17 = sphi 0, %s29
    %s18 = sphi 0, %s25
    %s19 = sphi 0, %s17
    %s20 = sphi 0, %s18
    %s21 = sphi 0, %s19
    %s22 = sphi 0, %s20
    %s34 = sphi 0, %s36
    %s37 = sphi 0, %s34
    %s38 = sphi 0, %s37
    %s54 = sphi 0, %s38
    %s64 = sphi 0, %s66
    %s67 = sphi 0, %s64
    %s68 = sphi 0, %s67
    %s84 = sphi 0, %s68
    %s94 = sphi 0, %s96
    %s97 = sphi 0, %s94
    %s98 = sphi 0, %s97
    %s114 = sphi 0, %s98
    %s120 = sphi 0, %s122
    %s123 = sphi 0, %s120
    %s124 = sphi 0, %s123
    %s140 = sphi 0, %s124
    %s148 = sphi 0, %s150
    %s151 = sphi 0, %s148
    %s152 = sphi 0, %s151
    %s168 = sphi 0, %s152
  $region4: #{san_bert_forward.12} parent=0 // loop_header_branch
    %13 = sbr.rel (%p11) target = $region8
  $region5: #{san_bert_forward.12} parent=0 // loop_body
    %s15 = ssub.s32 %s10, 1
    %s16 = ssub.s32 %s10, 2
    %s23 = sadd.s32 1, %s18
    %p24 = scmp.ge.s32.totalorder %s23, 4
    %s25 = scalar_select %p24, 0, %s23
    %s26 = sadd.s32 1, %s17
    %s27 = scalar_select %p24, %s26, %s17
    %p28 = scmp.ge.s32.totalorder %s27, 2
    %s29 = scalar_select %p28, 0, %s27
    %s30 = ssub.s32 %s17, %s29
    %s31 = ssub.s32 %s18, %s25
    %s32 = sor.u32 %s30, %s31
    %p33 = scmp.eq.s32.totalorder %s32, 0
    %s35 = sadd.s32 %s34, 1
    %s36 = scalar_select %p33, %s34, %s35
    %p39 = pneg %p33
    %p40 = scmp.eq.s32.totalorder %s10, 7
    %p41 = por %p39, %p40
    %p42 = scmp.ne.s32.totalorder %s34, %s37
    %p43 = scmp.eq.s32.totalorder %s10, 0
    %p44 = por %p42, %p43
    %p45 = scmp.ne.s32.totalorder %s34, %s37
    %p46 = scmp.eq.s32.totalorder %s15, 7
    %p47 = por %p45, %p46
    %p48 = scmp.ne.s32.totalorder %s37, %s38
    %p49 = scmp.eq.s32.totalorder %s15, 0
    %p50 = por %p48, %p49
    %p51 = scmp.ne.s32.totalorder %s37, %s38
    %p52 = scmp.eq.s32.totalorder %s16, 7
    %p53 = por %p51, %p52
    %p55 = scmp.ne.s32.totalorder %s38, %s54
    %p56 = scmp.eq.s32.totalorder %s16, 0
    %p57 = por %p55, %p56
    %s58 = sadd.s32 %s18, 4
    %s59 = sadd.s32 %s25, 4
    %s60 = ssub.s32 %s17, %s29
    %s61 = ssub.s32 %s58, %s59
    %s62 = sor.u32 %s60, %s61
    %p63 = scmp.eq.s32.totalorder %s62, 0
    %s65 = sadd.s32 %s64, 1
    %s66 = scalar_select %p63, %s64, %s65
    %p69 = pneg %p63
    %p70 = scmp.eq.s32.totalorder %s10, 7
    %p71 = por %p69, %p70
    %p72 = scmp.ne.s32.totalorder %s64, %s67
    %p73 = scmp.eq.s32.totalorder %s10, 0
    %p74 = por %p72, %p73
    %p75 = scmp.ne.s32.totalorder %s64, %s67
    %p76 = scmp.eq.s32.totalorder %s15, 7
    %p77 = por %p75, %p76
    %p78 = scmp.ne.s32.totalorder %s67, %s68
    %p79 = scmp.eq.s32.totalorder %s15, 0
    %p80 = por %p78, %p79
    %p81 = scmp.ne.s32.totalorder %s67, %s68
    %p82 = scmp.eq.s32.totalorder %s16, 7
    %p83 = por %p81, %p82
    %p85 = scmp.ne.s32.totalorder %s68, %s84
    %p86 = scmp.eq.s32.totalorder %s16, 0
    %p87 = por %p85, %p86
    %s88 = sadd.s32 %s18, 8
    %s89 = sadd.s32 %s25, 8
    %s90 = ssub.s32 %s17, %s29
    %s91 = ssub.s32 %s88, %s89
    %s92 = sor.u32 %s90, %s91
    %p93 = scmp.eq.s32.totalorder %s92, 0
    %s95 = sadd.s32 %s94, 1
    %s96 = scalar_select %p93, %s94, %s95
    %p99 = pneg %p93
    %p100 = scmp.eq.s32.totalorder %s10, 7
    %p101 = por %p99, %p100
    %p102 = scmp.ne.s32.totalorder %s94, %s97
    %p103 = scmp.eq.s32.totalorder %s10, 0
    %p104 = por %p102, %p103
    %p105 = scmp.ne.s32.totalorder %s94, %s97
    %p106 = scmp.eq.s32.totalorder %s15, 7
    %p107 = por %p105, %p106
    %p108 = scmp.ne.s32.totalorder %s97, %s98
    %p109 = scmp.eq.s32.totalorder %s15, 0
    %p110 = por %p108, %p109
    %p111 = scmp.ne.s32.totalorder %s97, %s98
    %p112 = scmp.eq.s32.totalorder %s16, 7
    %p113 = por %p111, %p112
    %p115 = scmp.ne.s32.totalorder %s98, %s114
    %p116 = scmp.eq.s32.totalorder %s16, 0
    %p117 = por %p115, %p116
    %s118 = ssub.s32 %s17, %s29
    %p119 = scmp.eq.s32.totalorder %s118, 0
    %s121 = sadd.s32 %s120, 1
    %s122 = scalar_select %p119, %s120, %s121
    %p125 = pneg %p119
    %p126 = scmp.eq.s32.totalorder %s10, 7
    %p127 = por %p125, %p126
    %p128 = scmp.ne.s32.totalorder %s120, %s123
    %p129 = scmp.eq.s32.totalorder %s10, 0
    %p130 = por %p128, %p129
    %p131 = scmp.ne.s32.totalorder %s120, %s123
    %p132 = scmp.eq.s32.totalorder %s15, 7
    %p133 = por %p131, %p132
    %p134 = scmp.ne.s32.totalorder %s123, %s124
    %p135 = scmp.eq.s32.totalorder %s15, 0
    %p136 = por %p134, %p135
    %p137 = scmp.ne.s32.totalorder %s123, %s124
    %p138 = scmp.eq.s32.totalorder %s16, 7
    %p139 = por %p137, %p138
    %p141 = scmp.ne.s32.totalorder %s124, %s140
    %p142 = scmp.eq.s32.totalorder %s16, 0
    %p143 = por %p141, %p142
    %s144 = ssub.s32 %s17, %s29
    %s145 = ssub.s32 %s18, %s25
    %s146 = sor.u32 %s144, %s145
    %p147 = scmp.eq.s32.totalorder %s146, 0
    %s149 = sadd.s32 %s148, 1
    %s150 = scalar_select %p147, %s148, %s149
    %p153 = pneg %p147
    %p154 = scmp.eq.s32.totalorder %s10, 7
    %p155 = por %p153, %p154
    %p156 = scmp.ne.s32.totalorder %s148, %s151
    %p157 = scmp.eq.s32.totalorder %s10, 0
    %p158 = por %p156, %p157
    %p159 = scmp.ne.s32.totalorder %s148, %s151
    %p160 = scmp.eq.s32.totalorder %s15, 7
    %p161 = por %p159, %p160
    %p162 = scmp.ne.s32.totalorder %s151, %s152
    %p163 = scmp.eq.s32.totalorder %s15, 0
    %p164 = por %p162, %p163
    %p165 = scmp.ne.s32.totalorder %s151, %s152
    %p166 = scmp.eq.s32.totalorder %s16, 7
    %p167 = por %p165, %p166
    %p169 = scmp.ne.s32.totalorder %s152, %s168
    %p170 = scmp.eq.s32.totalorder %s16, 0
    %p171 = por %p169, %p170
    %p172 = scmp.le.s32.totalorder 1, %s10
    %p173 = scmp.lt.s32.totalorder %s10, 9
    %p174 = pnand %p172, %p173
    %p175 = pneg %p174
    // Predicated region
    $region9: #{san_bert_forward.12} parent=5 // pred_check
      _
    $region10: #{san_bert_forward.12} parent=5 // pred_check_branch
      %177 = sbr.rel (%p174) target = $region12
    $region11: #{san_bert_forward.12} parent=5 // pred_region
      %s178 = ssub.s32 %s10, 1
    $region12: #{san_bert_forward.12} parent=5 // pred_fallthru
      _
    %p179 = scmp.lt.s32.totalorder %s10, 8
    // Predicated region
    $region13: #{san_bert_forward.12} parent=5 // pred_check
      %p180 = pneg %p179
    $region14: #{san_bert_forward.12} parent=5 // pred_check_branch
      %182 = sbr.rel (%p180) target = $region16
    $region15: #{san_bert_forward.12} parent=5 // pred_region
      // Predicated region
      $region17: #{san_bert_forward.12} parent=15 // pred_check
        %p183 = pneg %p44
      $region18: #{san_bert_forward.12} parent=15 // pred_check_branch
        %185 = sbr.rel (%p183) target = $region20
      $region19: #{san_bert_forward.12} parent=15 // pred_region
        %p186 = scmp.lt.s32.totalorder %s17, 1
        %s187 = scalar_select %p186, %s17, 1
        %p188 = scmp.lt.s32.totalorder %s18, 11
        %s189 = scalar_select %p188, %s18, 11
        %s190 = smul.addr %s187, 12
        %s191 = sadd.s32 %s189, %s190
        %s192 = smul.addr %s191, 4
        %s193 = scalar_lea.vmem %s0, %s192
      $region20: #{san_bert_forward.12} parent=15 // pred_fallthru
        _
      // Predicated region
      $region21: #{san_bert_forward.12} parent=15 // pred_check
        %p194 = pneg %p74
      $region22: #{san_bert_forward.12} parent=15 // pred_check_branch
        %196 = sbr.rel (%p194) target = $region24
      $region23: #{san_bert_forward.12} parent=15 // pred_region
        %s197 = sadd.s32 %s18, 4
        %p198 = scmp.lt.s32.totalorder %s17, 1
        %s199 = scalar_select %p198, %s17, 1
        %p200 = scmp.lt.s32.totalorder %s197, 11
        %s201 = scalar_select %p200, %s197, 11
        %s202 = smul.addr %s199, 12
        %s203 = sadd.s32 %s201, %s202
        %s204 = smul.addr %s203, 4
        %s205 = scalar_lea.vmem %s1, %s204
        %s206 = sadd.s32 %s18, 4
      $region24: #{san_bert_forward.12} parent=15 // pred_fallthru
        _
      // Predicated region
      $region25: #{san_bert_forward.12} parent=15 // pred_check
        %p207 = pneg %p104
      $region26: #{san_bert_forward.12} parent=15 // pred_check_branch
        %209 = sbr.rel (%p207) target = $region28
      $region27: #{san_bert_forward.12} parent=15 // pred_region
        %s210 = sadd.s32 %s18, 8
        %p211 = scmp.lt.s32.totalorder %s17, 1
        %s212 = scalar_select %p211, %s17, 1
        %p213 = scmp.lt.s32.totalorder %s210, 11
        %s214 = scalar_select %p213, %s210, 11
        %s215 = smul.addr %s212, 12
        %s216 = sadd.s32 %s214, %s215
        %s217 = smul.addr %s216, 4
        %s218 = scalar_lea.vmem %s2, %s217
        %s219 = sadd.s32 %s18, 8
      $region28: #{san_bert_forward.12} parent=15 // pred_fallthru
        _
      // Predicated region
      $region29: #{san_bert_forward.12} parent=15 // pred_check
        %p220 = pneg %p130
      $region30: #{san_bert_forward.12} parent=15 // pred_check_branch
        %222 = sbr.rel (%p220) target = $region32
      $region31: #{san_bert_forward.12} parent=15 // pred_region
        %p223 = scmp.lt.s32.totalorder %s17, 1
        %s224 = scalar_select %p223, %s17, 1
        %s225 = scalar_lea.vmem %s3, %s224
      $region32: #{san_bert_forward.12} parent=15 // pred_fallthru
        _
    $region16: #{san_bert_forward.12} parent=5 // pred_fallthru
      _
    %p226 = scmp.le.s32.totalorder 1, %s10
    %p227 = scmp.lt.s32.totalorder %s10, 9
    %p228 = pnand %p226, %p227
    %p229 = pneg %p228
    // Predicated region
    $region33: #{san_bert_forward.12} parent=5 // pred_check
      _
    $region34: #{san_bert_forward.12} parent=5 // pred_check_branch
      %231 = sbr.rel (%p228) target = $region36
    $region35: #{san_bert_forward.12} parent=5 // pred_region
      %s232 = ssub.s32 %s10, 1
      %p233 = scmp.lt.s32.totalorder %s19, 1
      %s234 = scalar_select %p233, %s19, 1
      %p235 = scmp.lt.s32.totalorder %s20, 11
      %s236 = scalar_select %p235, %s20, 11
      %s237 = smul.addr %s234, 12
      %s238 = sadd.s32 %s236, %s237
      %s239 = smul.addr %s238, 4
      %s240 = scalar_lea.vmem %s0, %s239
      %p241 = pneg %p50
      %p242 = pneg %p47
      %s243 = sadd.s32 %s20, 4
      %p244 = scmp.lt.s32.totalorder %s19, 1
      %s245 = scalar_select %p244, %s19, 1
      %p246 = scmp.lt.s32.totalorder %s243, 11
      %s247 = scalar_select %p246, %s243, 11
      %s248 = smul.addr %s245, 12
      %s249 = sadd.s32 %s247, %s248
      %s250 = smul.addr %s249, 4
      %s251 = scalar_lea.vmem %s1, %s250
      %p252 = pneg %p80
      %p253 = pneg %p77
      %s254 = sadd.s32 %s20, 8
      %p255 = scmp.lt.s32.totalorder %s19, 1
      %s256 = scalar_select %p255, %s19, 1
      %p257 = scmp.lt.s32.totalorder %s254, 11
      %s258 = scalar_select %p257, %s254, 11
      %s259 = smul.addr %s256, 12
      %s260 = sadd.s32 %s258, %s259
      %s261 = smul.addr %s260, 4
      %s262 = scalar_lea.vmem %s2, %s261
      %p263 = pneg %p110
      %p264 = pneg %p107
      %p265 = scmp.lt.s32.totalorder %s19, 1
      %s266 = scalar_select %p265, %s19, 1
      %s267 = scalar_lea.vmem %s3, %s266
      %p268 = pneg %p136
      %p269 = pneg %p133
      %p270 = pneg %p164
      %p271 = pneg %p161
      %p272 = scmp.lt.s32.totalorder %s19, 1
      %s273 = scalar_select %p272, %s19, 1
      %p274 = scmp.lt.s32.totalorder %s20, 3
      %s275 = scalar_select %p274, %s20, 3
      %s276 = smul.addr %s273, 4
      %s277 = sadd.s32 %s275, %s276
      %s278 = smul.addr %s277, 4
      %s279 = scalar_lea.vmem %s4, %s278
      %p280 = scmp.lt.s32.totalorder %s19, 1
      %s281 = scalar_select %p280, %s19, 1
      %p282 = scmp.lt.s32.totalorder %s20, 11
      %s283 = scalar_select %p282, %s20, 11
      %s284 = smul.addr %s281, 12
      %s285 = sadd.s32 %s283, %s284
      %s286 = smul.addr %s285, 4
      %s287 = scalar_lea.vmem %s0, %s286
      %s288 = sadd.s32 %s20, 4
      %p289 = scmp.lt.s32.totalorder %s19, 1
      %s290 = scalar_select %p289, %s19, 1
      %p291 = scmp.lt.s32.totalorder %s288, 11
      %s292 = scalar_select %p291, %s288, 11
      %s293 = smul.addr %s290, 12
      %s294 = sadd.s32 %s292, %s293
      %s295 = smul.addr %s294, 4
      %s296 = scalar_lea.vmem %s1, %s295
      %s297 = sadd.s32 %s20, 4
      %s298 = sadd.s32 %s20, 8
      %p299 = scmp.lt.s32.totalorder %s19, 1
      %s300 = scalar_select %p299, %s19, 1
      %p301 = scmp.lt.s32.totalorder %s298, 11
      %s302 = scalar_select %p301, %s298, 11
      %s303 = smul.addr %s300, 12
      %s304 = sadd.s32 %s302, %s303
      %s305 = smul.addr %s304, 4
      %s306 = scalar_lea.vmem %s2, %s305
      %s307 = sadd.s32 %s20, 8
      %p308 = scmp.lt.s32.totalorder %s19, 1
      %s309 = scalar_select %p308, %s19, 1
      %s310 = scalar_lea.vmem %s3, %s309
      %p311 = scmp.lt.s32.totalorder %s19, 1
      %s312 = scalar_select %p311, %s19, 1
      %p313 = scmp.lt.s32.totalorder %s20, 3
      %s314 = scalar_select %p313, %s20, 3
      %s315 = smul.addr %s312, 4
      %s316 = sadd.s32 %s314, %s315
      %s317 = smul.addr %s316, 4
      %s318 = scalar_lea.vmem %s4, %s317
      %v320 = vld [vmem:[%s287] sm:$0xf]
      %v321 = vld [vmem:[%s296] sm:$0xf]
      %v322 = vld [vmem:[%s306] sm:$0xf]
      %v323 = vld [vmem:[%s310] sm:$0x1]
      %324 = vmatprep.subr.bf16.mxu0 0
      %325 = vmatpush1.bf16.xpose.msra.mxu0 %v321
      %326 = vmatprep.subr.bf16.mxu0 0
      %327 = vmatpush1.bf16.xpose.msra.mxu0 0
      %328 = vmatprep.subr.bf16.mxu0 0
      %329 = vmatpush1.bf16.xpose.msra.mxu0 0
      %330 = vmatprep.subr.bf16.mxu0 0
      %331 = vmatpush1.bf16.xpose.msra.mxu0 0
      %332 = vmatprep.subr.bf16.mxu0 0
      %333 = vmatpush1.bf16.xpose.msra.mxu0 0
      %334 = vmatprep.subr.bf16.mxu0 0
      %335 = vmatpush1.bf16.xpose.msra.mxu0 0
      %336 = vmatprep.subr.bf16.mxu0 0
      %337 = vmatpush1.bf16.xpose.msra.mxu0 0
      %338 = vmatprep.subr.bf16.mxu0 0
      %339 = vmatpush1.bf16.xpose.msra.mxu0 0
      %340 = vmatprep.subr.bf16.mxu0 0
      %341 = vmatpush1.bf16.xpose.msra.mxu0 0
      %342 = vmatprep.subr.bf16.mxu0 0
      %343 = vmatpush1.bf16.xpose.msra.mxu0 0
      %344 = vmatprep.subr.bf16.mxu0 0
      %345 = vmatpush1.bf16.xpose.msra.mxu0 0
      %346 = vmatprep.subr.bf16.mxu0 0
      %347 = vmatpush1.bf16.xpose.msra.mxu0 0
      %348 = vmatprep.subr.bf16.mxu0 0
      %349 = vmatpush1.bf16.xpose.msra.mxu0 0
      %350 = vmatprep.subr.bf16.mxu0 0
      %351 = vmatpush1.bf16.xpose.msra.mxu0 0
      %352 = vmatprep.subr.bf16.mxu0 0
      %353 = vmatpush1.bf16.xpose.msra.mxu0 0
      %354 = vmatprep.subr.bf16.mxu0 0
      %355 = vmatpush1.bf16.xpose.msra.mxu0 0
      %356 = vmatprep.mubr.bf16.mxu0 0
      %357 = vmatmul.mubr.bf16.gmra.mrb[0].mxu0 %v320
      %v358 = vpop.f32.mrb[0].mxu0
      %v359 = vadd.f32 0.0, %v358
      %v360 = vpop.f32.mrb[0].mxu0
      %v361 = vpop.f32.mrb[0].mxu0
      %v362 = vpop.f32.mrb[0].mxu0
      %363 = vdwg.mxu0
      %v364 = vmul.f32 %v359, 0.35355338
      %v366 = vlaneseq
      %v367 = vshrl.u32 %v366, 7
      %v368 = vsub.s32 0, %v367
      %v369 = vrot.slane %v323, %v368
      %v371 = vadd.f32 %v364, %v369
      %vm372 = vcmask 64512
      %v373 = vsel %vm372, %v371, -inf
      %374 = vmax.xlane.f32.xlu0 %v373
      %v375 = vpop.xlane.xlu0 %374
      %v376 = vsub.f32 %v371, %v375
      %v377 = vmul.f32 %v376, 1.442695
      %v378 = vpow.pop %v377
      %v379 = vsel %vm372, %v378, 0.0
      %380 = vadd.xlane.f32.xlu0 %v379
      %v381 = vpop.xlane.xlu0 %380
      %v382 = vrcp.pop %v381
      %v383 = vmul.f32 %v378, %v382
      %v384 = vpack.c.bf16 %v383, %v383
      %v386 = vsel %vm372, %v384, 0
      %vm388 = vcmask 1043456
      %v390 = vsel %vm388, %v322, 0
      %392 = vmatprep.subr.bf16.mxu0 0
      %393 = vmatpush1.bf16.msra.mxu0 %v390
      %394 = vmatprep.subr.bf16.mxu0 0
      %395 = vmatpush1.bf16.msra.mxu0 0
      %396 = vmatprep.subr.bf16.mxu0 0
      %397 = vmatpush1.bf16.msra.mxu0 0
      %398 = vmatprep.subr.bf16.mxu0 0
      %399 = vmatpush1.bf16.msra.mxu0 0
      %400 = vmatprep.subr.bf16.mxu0 0
      %401 = vmatpush1.bf16.msra.mxu0 0
      %402 = vmatprep.subr.bf16.mxu0 0
      %403 = vmatpush1.bf16.msra.mxu0 0
      %404 = vmatprep.subr.bf16.mxu0 0
      %405 = vmatpush1.bf16.msra.mxu0 0
      %406 = vmatprep.subr.bf16.mxu0 0
      %407 = vmatpush1.bf16.msra.mxu0 0
      %408 = vmatprep.subr.bf16.mxu0 0
      %409 = vmatpush1.bf16.msra.mxu0 0
      %410 = vmatprep.subr.bf16.mxu0 0
      %411 = vmatpush1.bf16.msra.mxu0 0
      %412 = vmatprep.subr.bf16.mxu0 0
      %413 = vmatpush1.bf16.msra.mxu0 0
      %414 = vmatprep.subr.bf16.mxu0 0
      %415 = vmatpush1.bf16.msra.mxu0 0
      %416 = vmatprep.subr.bf16.mxu0 0
      %417 = vmatpush1.bf16.msra.mxu0 0
      %418 = vmatprep.subr.bf16.mxu0 0
      %419 = vmatpush1.bf16.msra.mxu0 0
      %420 = vmatprep.subr.bf16.mxu0 0
      %421 = vmatpush1.bf16.msra.mxu0 0
      %422 = vmatprep.subr.bf16.mxu0 0
      %423 = vmatpush1.bf16.msra.mxu0 0
      %424 = vmatprep.mubr.bf16.mxu0 0
      %425 = vmatmul.mubr.bf16.gmra.mrb[0].mxu0 %v386
      %v426 = vpop.f32.mrb[0].mxu0
      %v427 = vadd.f32 0.0, %v426
      %v428 = vpop.f32.mrb[0].mxu0
      %v429 = vpop.f32.mrb[0].mxu0
      %v430 = vpop.f32.mrb[0].mxu0
      %431 = vdwg.mxu0
      %v432 = vpack.c.bf16 %v427, %v427
      %433 = vst [vmem:[%s318] sm:$0xf] %v432
      %p434 = scmp.lt.s32.totalorder %s19, 1
      %s435 = scalar_select %p434, %s19, 1
      %p436 = scmp.lt.s32.totalorder %s20, 3
      %s437 = scalar_select %p436, %s20, 3
      %s438 = smul.addr %s435, 4
      %s439 = sadd.s32 %s437, %s438
      %s440 = smul.addr %s439, 4
      %s441 = scalar_lea.vmem %s4, %s440
      // Predicated region
      $region37: #{san_bert_forward.12} parent=35 // pred_check
        %p442 = pneg %p161
      $region38: #{san_bert_forward.12} parent=35 // pred_check_branch
        %444 = sbr.rel (%p442) target = $region40
      $region39: #{san_bert_forward.12} parent=35 // pred_region
        _
      $region40: #{san_bert_forward.12} parent=35 // pred_fallthru
        _
    $region36: #{san_bert_forward.12} parent=5 // pred_fallthru
      _
    %p445 = scmp.le.s32.totalorder 2, %s10
    // Predicated region
    $region41: #{san_bert_forward.12} parent=5 // pred_check
      %p446 = pneg %p445
    $region42: #{san_bert_forward.12} parent=5 // pred_check_branch
      %448 = sbr.rel (%p446) target = $region44
    $region43: #{san_bert_forward.12} parent=5 // pred_region
      %s449 = ssub.s32 %s10, 2
      // Predicated region
      $region45: #{san_bert_forward.12} parent=43 // pred_check
        %p450 = pneg %p167
      $region46: #{san_bert_forward.12} parent=43 // pred_check_branch
        %452 = sbr.rel (%p450) target = $region48
      $region47: #{san_bert_forward.12} parent=43 // pred_region
        %p453 = scmp.lt.s32.totalorder %s21, 1
        %s454 = scalar_select %p453, %s21, 1
        %p455 = scmp.lt.s32.totalorder %s22, 3
        %s456 = scalar_select %p455, %s22, 3
        %s457 = smul.addr %s454, 4
        %s458 = sadd.s32 %s456, %s457
        %s459 = smul.addr %s458, 4
        %s460 = scalar_lea.vmem %s4, %s459
      $region48: #{san_bert_forward.12} parent=43 // pred_fallthru
        _
    $region44: #{san_bert_forward.12} parent=5 // pred_fallthru
      _
  $region6: #{san_bert_forward.12} parent=0 // loop_footer
    %s14 = sadd.s32 1, %s10
  $region7: #{san_bert_forward.12} parent=0 // loop_footer_branch
    %9 = sbr.rel target = $region3
  $region8: #{san_bert_forward.12} parent=0 // loop_exit
    _

// kernel: san_bert_forward.10
$region0: #{san_bert_forward.10}
  #allocation0 [shape = 'u32[]', space=smem, size = 0x4, offset = 0x4, fixed_abs, tag = 'smem constant byte address 0x4 - core index']
  #allocation1 [shape = 'u32[144,128]{1,0:T(1,128)}', space=vmem, size = 0x12000, scoped, tag = 'internal scratch']
  %s0 = inlined_call_operand.vmem [shape: f32[16,32], index: 0, kind: input, shape index: {}]
  %s1 = inlined_call_operand.vmem [shape: f32[1,32], index: 1, kind: input, shape index: {}]
  %s2 = inlined_call_operand.vmem [shape: f32[1,32], index: 2, kind: input, shape index: {}]
  %s3 = inlined_call_operand.vmem [shape: bf16[16,32], index: 3, kind: output, shape index: {}]
  %s4 = sld [smem:[#allocation0]]
  $region22: #{san_bert_forward.10} parent=0
    _
  %s6 = ssub.s32 1, %s4
  %s7 = scalar_select 0, %s6, %s4
  // Predicated region
  $region2: #{san_bert_forward.10} parent=0 // pred_check
    _
  $region3: #{san_bert_forward.10} parent=0 // pred_check_branch
    %9 = sbr.rel (0) target = $region5
  $region4: #{san_bert_forward.10} parent=0 // pred_region
    _
  $region5: #{san_bert_forward.10} parent=0 // pred_fallthru
    _
  // Predicated region
  $region6: #{san_bert_forward.10} parent=0 // pred_check
    _
  $region7: #{san_bert_forward.10} parent=0 // pred_check_branch
    %11 = sbr.rel (0) target = $region9
  $region8: #{san_bert_forward.10} parent=0 // pred_region
    _
  $region9: #{san_bert_forward.10} parent=0 // pred_fallthru
    _
  // Predicated region
  $region10: #{san_bert_forward.10} parent=0 // pred_check
    _
  $region11: #{san_bert_forward.10} parent=0 // pred_check_branch
    %13 = sbr.rel (0) target = $region13
  $region12: #{san_bert_forward.10} parent=0 // pred_region
    _
  $region13: #{san_bert_forward.10} parent=0 // pred_fallthru
    _
  %v14 = vld [vmem:[%s0] sm:$0xff]
  %v15 = vld [vmem:[%s0 + $0x8] sm:$0xff]
  %vm16 = vcmask 261120
  %v17 = vsel %vm16, %v14, 0.0
  %18 = vadd.xlane.f32.xlu0 %v17
  %v19 = vpop.xlane.xlu0 %18
  %v20 = vsel %vm16, %v15, 0.0
  %21 = vadd.xlane.f32.xlu0 %v20
  %v22 = vpop.xlane.xlu0 %21
  %v23 = vrcp.pop 32.0
  %v24 = vmul.f32 %v19, %v23
  %v25 = vmul.f32 %v22, %v23
  %v26 = vsub.f32 %v14, %v24
  %v27 = vsub.f32 %v15, %v25
  %v28 = vmul.f32 %v26, %v26
  %v29 = vmul.f32 %v27, %v27
  %v30 = vsel %vm16, %v28, 0.0
  %31 = vadd.xlane.f32.xlu0 %v30
  %v32 = vpop.xlane.xlu0 %31
  %v33 = vsel %vm16, %v29, 0.0
  %34 = vadd.xlane.f32.xlu0 %v33
  %v35 = vpop.xlane.xlu0 %34
  %v36 = vmul.f32 %v32, %v23
  %v37 = vmul.f32 %v35, %v23
  %v38 = vadd.f32 %v36, 1e-12
  %v39 = vadd.f32 %v37, 1e-12
  %v40 = vrsqrt.pop %v38
  %v41 = vrsqrt.pop %v39
  %v42 = vmul.f32 %v26, %v40
  %v43 = vmul.f32 %v27, %v41
  %v44 = vld [vmem:[%s1] sm:$0x1]
  %v46 = vlaneseq
  %v47 = vshrl.u32 %v46, 7
  %v48 = vsub.s32 0, %v47
  %v49 = vrot.slane %v44, %v48
  %v51 = vmul.f32 %v42, %v49
  %v52 = vmul.f32 %v43, %v49
  %v53 = vld [vmem:[%s2] sm:$0x1]
  %v55 = vlaneseq
  %v56 = vshrl.u32 %v55, 7
  %v57 = vsub.s32 0, %v56
  %v58 = vrot.slane %v53, %v57
  %v60 = vadd.f32 %v51, %v58
  %v61 = vadd.f32 %v52, %v58
  %v62 = vpack.c.bf16 %v61, %v60
  %v64 = vunpack.c.l.b16 %v62
  %v65 = vunpack.c.h.b16 %v62
  %v66 = vpack.c.b16 %v64, %v64
  %v67 = vpack.c.b16 %v65, %v65
  %vm70 = vcmask 257024
  %71 = vst.msk [vmem:[%s3] sm:$0xf] %vm70, %v66
  %72 = vst.msk [vmem:[%s3 + $0x4] sm:$0xf] %vm70, %v67
  // Predicated region
  $region14: #{san_bert_forward.10} parent=0 // pred_check
    _
  $region15: #{san_bert_forward.10} parent=0 // pred_check_branch
    %74 = sbr.rel (0) target = $region17
  $region16: #{san_bert_forward.10} parent=0 // pred_region
    _
  $region17: #{san_bert_forward.10} parent=0 // pred_fallthru
    _
  // Predicated region
  $region18: #{san_bert_forward.10} parent=0 // pred_check
    _
  $region19: #{san_bert_forward.10} parent=0 // pred_check_branch
    %76 = sbr.rel (0) target = $region21
  $region20: #{san_bert_forward.10} parent=0 // pred_region
    _
  $region21: #{san_bert_forward.10} parent=0 // pred_fallthru
    _

// kernel: san_bert_forward.11
$region0: #{san_bert_forward.11}
  #allocation0 [shape = 'u32[]', space=smem, size = 0x4, offset = 0x4, fixed_abs, tag = 'smem constant byte address 0x4 - core index']
  #allocation1 [shape = 'u32[144,128]{1,0:T(1,128)}', space=vmem, size = 0x12000, scoped, tag = 'internal scratch']
  #allocation2 [shape = 'f32[16,512]{1,0:T(8,128)}', space=vmem, size = 0x8000, scoped, tag = 'scratch operand']
  %s0 = inlined_call_operand.vmem [shape: bf16[16,128], index: 0, kind: input, shape index: {}]
  %s1 = inlined_call_operand.vmem [shape: bf16[128,1536], index: 1, kind: input, shape index: {}]
  %s2 = inlined_call_operand.vmem [shape: f32[1,1536], index: 2, kind: input, shape index: {}]
  %s3 = inlined_call_operand.vmem [shape: bf16[16,1536], index: 3, kind: output, shape index: {}]
  %s4 = sld [smem:[#allocation0]]
  $region95: #{san_bert_forward.11} parent=0
    _
  %s6 = ssub.s32 1, %s4
  %s7 = scalar_select 0, %s6, %s4
  $region1: #{san_bert_forward.11} parent=0
    #allocation3 [shape = 'u8[262144]{0}', space=vmem, size = 0x40000, scoped, tag = 'input window, operand 1']
    #allocation4 [shape = 'u8[32768]{0}', space=vmem, size = 0x8000, scoped, tag = 'output window, operand 0']
    loop: start=0, step=1, limit=5
    $region2: #{san_bert_forward.11} parent=1 // loop_pre_header
      _
    $region3: #{san_bert_forward.11} parent=1 // loop_header
      %s9 = sphi 0, %s13
      %p10 = scmp.ge.s32.totalorder %s9, 5
      %s16 = sphi 0, %s35
      %s17 = sphi 0, %s31
      %s18 = sphi 0, %s27
      %s19 = sphi 0, %s16
      %s20 = sphi 0, %s17
      %s21 = sphi 0, %s18
      %s22 = sphi 0, %s19
      %s23 = sphi 0, %s20
      %s24 = sphi 0, %s21
      %s40 = sphi 0, %s42
      %s43 = sphi 0, %s40
      %s44 = sphi 0, %s43
      %s60 = sphi 0, %s44
      %s68 = sphi 0, %s70
      %s71 = sphi 0, %s68
      %s72 = sphi 0, %s71
      %s88 = sphi 0, %s72
      %s94 = sphi 0, %s96
      %s97 = sphi 0, %s94
      %s98 = sphi 0, %s97
      %s114 = sphi 0, %s98
      %s122 = sphi 0, %s124
      %s125 = sphi 0, %s122
      %s126 = sphi 0, %s125
      %s142 = sphi 0, %s126
    $region4: #{san_bert_forward.11} parent=1 // loop_header_branch
      %12 = sbr.rel (%p10) target = $region8
    $region5: #{san_bert_forward.11} parent=1 // loop_body
      %s14 = ssub.s32 %s9, 1
      %s15 = ssub.s32 %s9, 2
      %s25 = sadd.s32 1, %s18
      %p26 = scmp.ge.s32.totalorder %s25, 1
      %s27 = scalar_select %p26, 0, %s25
      %s28 = sadd.s32 1, %s17
      %s29 = scalar_select %p26, %s28, %s17
      %p30 = scmp.ge.s32.totalorder %s29, 3
      %s31 = scalar_select %p30, 0, %s29
      %s32 = sadd.s32 1, %s16
      %s33 = scalar_select %p30, %s32, %s16
      %p34 = scmp.ge.s32.totalorder %s33, 1
      %s35 = scalar_select %p34, 0, %s33
      %s36 = ssub.s32 %s16, %s35
      %s37 = ssub.s32 %s18, %s27
      %s38 = sor.u32 %s36, %s37
      %p39 = scmp.eq.s32.totalorder %s38, 0
      %s41 = sadd.s32 %s40, 1
      %s42 = scalar_select %p39, %s40, %s41
      %p45 = pneg %p39
      %p46 = scmp.eq.s32.totalorder %s9, 2
      %p47 = por %p45, %p46
      %p48 = scmp.ne.s32.totalorder %s40, %s43
      %p49 = scmp.eq.s32.totalorder %s9, 0
      %p50 = por %p48, %p49
      %p51 = scmp.ne.s32.totalorder %s40, %s43
      %p52 = scmp.eq.s32.totalorder %s14, 2
      %p53 = por %p51, %p52
      %p54 = scmp.ne.s32.totalorder %s43, %s44
      %p55 = scmp.eq.s32.totalorder %s14, 0
      %p56 = por %p54, %p55
      %p57 = scmp.ne.s32.totalorder %s43, %s44
      %p58 = scmp.eq.s32.totalorder %s15, 2
      %p59 = por %p57, %p58
      %p61 = scmp.ne.s32.totalorder %s44, %s60
      %p62 = scmp.eq.s32.totalorder %s15, 0
      %p63 = por %p61, %p62
      %s64 = ssub.s32 %s18, %s27
      %s65 = ssub.s32 %s17, %s31
      %s66 = sor.u32 %s64, %s65
      %p67 = scmp.eq.s32.totalorder %s66, 0
      %s69 = sadd.s32 %s68, 1
      %s70 = scalar_select %p67, %s68, %s69
      %p73 = pneg %p67
      %p74 = scmp.eq.s32.totalorder %s9, 2
      %p75 = por %p73, %p74
      %p76 = scmp.ne.s32.totalorder %s68, %s71
      %p77 = scmp.eq.s32.totalorder %s9, 0
      %p78 = por %p76, %p77
      %p79 = scmp.ne.s32.totalorder %s68, %s71
      %p80 = scmp.eq.s32.totalorder %s14, 2
      %p81 = por %p79, %p80
      %p82 = scmp.ne.s32.totalorder %s71, %s72
      %p83 = scmp.eq.s32.totalorder %s14, 0
      %p84 = por %p82, %p83
      %p85 = scmp.ne.s32.totalorder %s71, %s72
      %p86 = scmp.eq.s32.totalorder %s15, 2
      %p87 = por %p85, %p86
      %p89 = scmp.ne.s32.totalorder %s72, %s88
      %p90 = scmp.eq.s32.totalorder %s15, 0
      %p91 = por %p89, %p90
      %s92 = ssub.s32 %s17, %s31
      %p93 = scmp.eq.s32.totalorder %s92, 0
      %s95 = sadd.s32 %s94, 1
      %s96 = scalar_select %p93, %s94, %s95
      %p99 = pneg %p93
      %p100 = scmp.eq.s32.totalorder %s9, 2
      %p101 = por %p99, %p100
      %p102 = scmp.ne.s32.totalorder %s94, %s97
      %p103 = scmp.eq.s32.totalorder %s9, 0
      %p104 = por %p102, %p103
      %p105 = scmp.ne.s32.totalorder %s94, %s97
      %p106 = scmp.eq.s32.totalorder %s14, 2
      %p107 = por %p105, %p106
      %p108 = scmp.ne.s32.totalorder %s97, %s98
      %p109 = scmp.eq.s32.totalorder %s14, 0
      %p110 = por %p108, %p109
      %p111 = scmp.ne.s32.totalorder %s97, %s98
      %p112 = scmp.eq.s32.totalorder %s15, 2
      %p113 = por %p111, %p112
      %p115 = scmp.ne.s32.totalorder %s98, %s114
      %p116 = scmp.eq.s32.totalorder %s15, 0
      %p117 = por %p115, %p116
      %s118 = ssub.s32 %s16, %s35
      %s119 = ssub.s32 %s17, %s31
      %s120 = sor.u32 %s118, %s119
      %p121 = scmp.eq.s32.totalorder %s120, 0
      %s123 = sadd.s32 %s122, 1
      %s124 = scalar_select %p121, %s122, %s123
      %p127 = pneg %p121
      %p128 = scmp.eq.s32.totalorder %s9, 2
      %p129 = por %p127, %p128
      %p130 = scmp.ne.s32.totalorder %s122, %s125
      %p131 = scmp.eq.s32.totalorder %s9, 0
      %p132 = por %p130, %p131
      %p133 = scmp.ne.s32.totalorder %s122, %s125
      %p134 = scmp.eq.s32.totalorder %s14, 2
      %p135 = por %p133, %p134
      %p136 = scmp.ne.s32.totalorder %s125, %s126
      %p137 = scmp.eq.s32.totalorder %s14, 0
      %p138 = por %p136, %p137
      %p139 = scmp.ne.s32.totalorder %s125, %s126
      %p140 = scmp.eq.s32.totalorder %s15, 2
      %p141 = por %p139, %p140
      %p143 = scmp.ne.s32.totalorder %s126, %s142
      %p144 = scmp.eq.s32.totalorder %s15, 0
      %p145 = por %p143, %p144
      %p146 = scmp.le.s32.totalorder 1, %s9
      %p147 = scmp.lt.s32.totalorder %s9, 4
      %p148 = pnand %p146, %p147
      %p149 = pneg %p148
      // Predicated region
      $region9: #{san_bert_forward.11} parent=5 // pred_check
        _
      $region10: #{san_bert_forward.11} parent=5 // pred_check_branch
        %151 = sbr.rel (%p148) target = $region12
      $region11: #{san_bert_forward.11} parent=5 // pred_region
        %s152 = ssub.s32 %s9, 1
        // Predicated region
        $region13: #{san_bert_forward.11} parent=11 // pred_check
          %p153 = pneg %p56
        $region14: #{san_bert_forward.11} parent=11 // pred_check_branch
          %155 = sbr.rel (%p153) target = $region16
        $region15: #{san_bert_forward.11} parent=11 // pred_region
          %s156 = smul.u32 2, %s19
          %p157 = scmp.lt.s32.totalorder %s156, 1
          %s158 = scalar_select %p157, %s156, 1
          %p159 = scmp.lt.s32.totalorder %s21, 0
          %s160 = scalar_select %p159, %s21, 0
          %s161 = sadd.s32 %s160, %s158
          %s162 = smul.addr %s161, 4
          %s163 = scalar_lea.vmem %s0, %s162
          %s164 = smul.u32 2, %s19
        $region16: #{san_bert_forward.11} parent=11 // pred_fallthru
          _
      $region12: #{san_bert_forward.11} parent=5 // pred_fallthru
        _
      %p165 = scmp.lt.s32.totalorder %s9, 3
      // Predicated region
      $region17: #{san_bert_forward.11} parent=5 // pred_check
        %p166 = pneg %p165
      $region18: #{san_bert_forward.11} parent=5 // pred_check_branch
        %168 = sbr.rel (%p166) target = $region20
      $region19: #{san_bert_forward.11} parent=5 // pred_region
        // Predicated region
        $region21: #{san_bert_forward.11} parent=19 // pred_check
          %p169 = pneg %p78
        $region22: #{san_bert_forward.11} parent=19 // pred_check_branch
          %171 = sbr.rel (%p169) target = $region24
        $region23: #{san_bert_forward.11} parent=19 // pred_region
          %s172 = sand.u32 %s68, 1
          %s173 = sand.u32 %s68, 1
          %s174 = smul.addr %s173, 256
          %s175 = scalar_lea.vmem [#allocation3], %s174
          %s176 = smul.u32 16, %s18
          %s177 = smul.u32 4, %s17
          %s178 = smul.addr %s176, 12
          %s179 = sadd.s32 %s177, %s178
          %s180 = smul.addr %s179, 4
          %s181 = scalar_lea.vmem %s1, %s180
          // Predicated region
          $region25: #{san_bert_forward.11} parent=23 // pred_check
            _
          $region26: #{san_bert_forward.11} parent=23 // pred_check_branch
            %183 = sbr.rel (0) target = $region28
          $region27: #{san_bert_forward.11} parent=23 // pred_region
            // Predicated region
            $region29: #{san_bert_forward.11} parent=27 // pred_check
              _
            $region30: #{san_bert_forward.11} parent=27 // pred_check_branch
              %185 = sbr.rel (0) target = $region32
            $region31: #{san_bert_forward.11} parent=27 // pred_region
              loop: start=0, step=1, limit=1
              $region33: #{san_bert_forward.11} parent=31 // loop_pre_header
                _
              $region34: #{san_bert_forward.11} parent=31 // loop_header
                %s187 = sphi 0, %s191
                %p188 = scmp.ge.s32.totalorder %s187, 1
                %s192 = sphi %s181, %s181
                %s193 = sphi %s175, %s175
              $region35: #{san_bert_forward.11} parent=31 // loop_header_branch
                %190 = sbr.rel (%p188) target = $region39
              $region36: #{san_bert_forward.11} parent=31 // loop_body
                %v194 = vld [vmem:[%s192] sm:$0xff]
                %195 = vst [vmem:[%s193] sm:$0xff] %v194
                %v196 = vld [vmem:[%s192 + $0x8] sm:$0xff]
                %197 = vst [vmem:[%s193 + $0x8] sm:$0xff] %v196
                %v198 = vld [vmem:[%s192 + $0x30] sm:$0xff]
                %199 = vst [vmem:[%s193 + $0x10] sm:$0xff] %v198
                %v200 = vld [vmem:[%s192 + $0x38] sm:$0xff]
                %201 = vst [vmem:[%s193 + $0x18] sm:$0xff] %v200
                %v202 = vld [vmem:[%s192 + $0x60] sm:$0xff]
                %203 = vst [vmem:[%s193 + $0x20] sm:$0xff] %v202
                %v204 = vld [vmem:[%s192 + $0x68] sm:$0xff]
                %205 = vst [vmem:[%s193 + $0x28] sm:$0xff] %v204
                %v206 = vld [vmem:[%s192 + $0x90] sm:$0xff]
                %207 = vst [vmem:[%s193 + $0x30] sm:$0xff] %v206
                %v208 = vld [vmem:[%s192 + $0x98] sm:$0xff]
                %209 = vst [vmem:[%s193 + $0x38] sm:$0xff] %v208
                %v210 = vld [vmem:[%s192 + $0xc0] sm:$0xff]
                %211 = vst [vmem:[%s193 + $0x40] sm:$0xff] %v210
                %v212 = vld [vmem:[%s192 + $0xc8] sm:$0xff]
                %213 = vst [vmem:[%s193 + $0x48] sm:$0xff] %v212
                %v214 = vld [vmem:[%s192 + $0xf0] sm:$0xff]
                %215 = vst [vmem:[%s193 + $0x50] sm:$0xff] %v214
                %v216 = vld [vmem:[%s192 + $0xf8] sm:$0xff]
                %217 = vst [vmem:[%s193 + $0x58] sm:$0xff] %v216
                %v218 = vld [vmem:[%s192 + $0x120] sm:$0xff]
                %219 = vst [vmem:[%s193 + $0x60] sm:$0xff] %v218
                %v220 = vld [vmem:[%s192 + $0x128] sm:$0xff]
                %221 = vst [vmem:[%s193 + $0x68] sm:$0xff] %v220
                %v222 = vld [vmem:[%s192 + $0x150] sm:$0xff]
                %223 = vst [vmem:[%s193 + $0x70] sm:$0xff] %v222
                %v224 = vld [vmem:[%s192 + $0x158] sm:$0xff]
                %225 = vst [vmem:[%s193 + $0x78] sm:$0xff] %v224
                %v226 = vld [vmem:[%s192 + $0x180] sm:$0xff]
                %227 = vst [vmem:[%s193 + $0x80] sm:$0xff] %v226
                %v228 = vld [vmem:[%s192 + $0x188] sm:$0xff]
                %229 = vst [vmem:[%s193 + $0x88] sm:$0xff] %v228
                %v230 = vld [vmem:[%s192 + $0x1b0] sm:$0xff]
                %231 = vst [vmem:[%s193 + $0x90] sm:$0xff] %v230
                %v232 = vld [vmem:[%s192 + $0x1b8] sm:$0xff]
                %233 = vst [vmem:[%s193 + $0x98] sm:$0xff] %v232
                %v234 = vld [vmem:[%s192 + $0x1e0] sm:$0xff]
                %235 = vst [vmem:[%s193 + $0xa0] sm:$0xff] %v234
                %v236 = vld [vmem:[%s192 + $0x1e8] sm:$0xff]
                %237 = vst [vmem:[%s193 + $0xa8] sm:$0xff] %v236
                %v238 = vld [vmem:[%s192 + $0x210] sm:$0xff]
                %239 = vst [vmem:[%s193 + $0xb0] sm:$0xff] %v238
                %v240 = vld [vmem:[%s192 + $0x218] sm:$0xff]
                %241 = vst [vmem:[%s193 + $0xb8] sm:$0xff] %v240
                %v242 = vld [vmem:[%s192 + $0x240] sm:$0xff]
                %243 = vst [vmem:[%s193 + $0xc0] sm:$0xff] %v242
                %v244 = vld [vmem:[%s192 + $0x248] sm:$0xff]
                %245 = vst [vmem:[%s193 + $0xc8] sm:$0xff] %v244
                %v246 = vld [vmem:[%s192 + $0x270] sm:$0xff]
                %247 = vst [vmem:[%s193 + $0xd0] sm:$0xff] %v246
                %v248 = vld [vmem:[%s192 + $0x278] sm:$0xff]
                %249 = vst [vmem:[%s193 + $0xd8] sm:$0xff] %v248
                %v250 = vld [vmem:[%s192 + $0x2a0] sm:$0xff]
                %251 = vst [vmem:[%s193 + $0xe0] sm:$0xff] %v250
                %v252 = vld [vmem:[%s192 + $0x2a8] sm:$0xff]
                %253 = vst [vmem:[%s193 + $0xe8] sm:$0xff] %v252
                %v254 = vld [vmem:[%s192 + $0x2d0] sm:$0xff]
                %255 = vst [vmem:[%s193 + $0xf0] sm:$0xff] %v254
                %v256 = vld [vmem:[%s192 + $0x2d8] sm:$0xff]
                %257 = vst [vmem:[%s193 + $0xf8] sm:$0xff] %v256
              $region37: #{san_bert_forward.11} parent=31 // loop_footer
                %s191 = sadd.s32 1, %s187
              $region38: #{san_bert_forward.11} parent=31 // loop_footer_branch
                %186 = sbr.rel target = $region34
              $region39: #{san_bert_forward.11} parent=31 // loop_exit
                _
            $region32: #{san_bert_forward.11} parent=27 // pred_fallthru
              _
            // Predicated region
            $region40: #{san_bert_forward.11} parent=27 // pred_check
              _
            $region41: #{san_bert_forward.11} parent=27 // pred_check_branch
              %259 = sbr.rel target = $region43
            $region42: #{san_bert_forward.11} parent=27 // pred_region
              _
            $region43: #{san_bert_forward.11} parent=27 // pred_fallthru
              _
          $region28: #{san_bert_forward.11} parent=23 // pred_fallthru
            _
          %260 = vnop
        $region24: #{san_bert_forward.11} parent=19 // pred_fallthru
          _
        // Predicated region
        $region44: #{san_bert_forward.11} parent=19 // pred_check
          %p261 = pneg %p104
        $region45: #{san_bert_forward.11} parent=19 // pred_check_branch
          %263 = sbr.rel (%p261) target = $region47
        $region46: #{san_bert_forward.11} parent=19 // pred_region
          %s264 = smul.u32 4, %s17
          %p265 = scmp.lt.s32.totalorder %s264, 11
          %s266 = scalar_select %p265, %s264, 11
          %s267 = scalar_lea.vmem %s2, %s266
          %s268 = smul.u32 4, %s17
        $region47: #{san_bert_forward.11} parent=19 // pred_fallthru
          _
      $region20: #{san_bert_forward.11} parent=5 // pred_fallthru
        _
      %p269 = scmp.le.s32.totalorder 1, %s9
      %p270 = scmp.lt.s32.totalorder %s9, 4
      %p271 = pnand %p269, %p270
      %p272 = pneg %p271
      // Predicated region
      $region48: #{san_bert_forward.11} parent=5 // pred_check
        _
      $region49: #{san_bert_forward.11} parent=5 // pred_check_branch
        %274 = sbr.rel (%p271) target = $region51
      $region50: #{san_bert_forward.11} parent=5 // pred_region
        %s275 = ssub.s32 %s9, 1
        %s276 = sand.u32 %s71, 1
        %s277 = sand.u32 %s71, 1
        %s278 = smul.addr %s277, 256
        %s279 = scalar_lea.vmem [#allocation3], %s278
        // Predicated region
        $region52: #{san_bert_forward.11} parent=50 // pred_check
          %p280 = pneg %p84
        $region53: #{san_bert_forward.11} parent=50 // pred_check_branch
          %282 = sbr.rel (%p280) target = $region55
        $region54: #{san_bert_forward.11} parent=50 // pred_region
          _
        $region55: #{san_bert_forward.11} parent=50 // pred_fallthru
          _
        %s283 = smul.u32 2, %s19
        %p284 = scmp.lt.s32.totalorder %s283, 1
        %s285 = scalar_select %p284, %s283, 1
        %p286 = scmp.lt.s32.totalorder %s21, 0
        %s287 = scalar_select %p286, %s21, 0
        %s288 = sadd.s32 %s287, %s285
        %s289 = smul.addr %s288, 4
        %s290 = scalar_lea.vmem %s0, %s289
        %p291 = pneg %p56
        %p292 = pneg %p53
        %s293 = sand.u32 %s71, 1
        %s294 = sand.u32 %s71, 1
        %s295 = smul.addr %s294, 256
        %s296 = scalar_lea.vmem [#allocation3], %s295
        %p297 = pneg %p84
        %p298 = pneg %p81
        %s299 = smul.u32 4, %s20
        %p300 = scmp.lt.s32.totalorder %s299, 11
        %s301 = scalar_select %p300, %s299, 11
        %s302 = scalar_lea.vmem %s2, %s301
        %p303 = pneg %p110
        %p304 = pneg %p107
        %p305 = pneg %p138
        %p306 = pneg %p135
        %s307 = sand.u32 %s125, 1
        %s308 = sand.u32 %s125, 1
        %s309 = smul.addr %s308, 32
        %s310 = scalar_lea.vmem [#allocation4], %s309
        %s311 = smul.u32 2, %s19
        %p312 = scmp.lt.s32.totalorder %s311, 1
        %s313 = scalar_select %p312, %s311, 1
        %p314 = scmp.lt.s32.totalorder %s21, 0
        %s315 = scalar_select %p314, %s21, 0
        %s316 = sadd.s32 %s315, %s313
        %s317 = smul.addr %s316, 4
        %s318 = scalar_lea.vmem %s0, %s317
        %s319 = smul.u32 2, %s19
        %s320 = smul.u32 16, %s21
        %s321 = smul.u32 4, %s20
        %s322 = smul.u32 4, %s20
        %p323 = scmp.lt.s32.totalorder %s322, 11
        %s324 = scalar_select %p323, %s322, 11
        %s325 = scalar_lea.vmem %s2, %s324
        %s326 = smul.u32 4, %s20
        %s327 = smul.u32 2, %s19
        %s328 = smul.u32 4, %s20
        %p330 = scmp.eq.s32.totalorder %s21, 0
        // Predicated region
        $region56: #{san_bert_forward.11} parent=50 // pred_check
          %p331 = pneg %p330
        $region57: #{san_bert_forward.11} parent=50 // pred_check_branch
          %333 = sbr.rel (%p331) target = $region59
        $region58: #{san_bert_forward.11} parent=50 // pred_region
          %334 = vst [vmem:[#allocation2] sm:$0xff] 0.0
          %335 = vst [vmem:[#allocation2 + $0x8] sm:$0xff] 0.0
          %336 = vst [vmem:[#allocation2 + $0x10] sm:$0xff] 0.0
          %337 = vst [vmem:[#allocation2 + $0x18] sm:$0xff] 0.0
          %338 = vst [vmem:[#allocation2 + $0x20] sm:$0xff] 0.0
          %339 = vst [vmem:[#allocation2 + $0x28] sm:$0xff] 0.0
          %340 = vst [vmem:[#allocation2 + $0x30] sm:$0xff] 0.0
          %341 = vst [vmem:[#allocation2 + $0x38] sm:$0xff] 0.0
        $region59: #{san_bert_forward.11} parent=50 // pred_fallthru
          _
        %v342 = vld [vmem:[#allocation2] sm:$0xff]
        %v343 = vld [vmem:[#allocation2 + $0x8] sm:$0xff]
        %v344 = vld [vmem:[#allocation2 + $0x10] sm:$0xff]
        %v345 = vld [vmem:[#allocation2 + $0x18] sm:$0xff]
        %v346 = vld [vmem:[#allocation2 + $0x20] sm:$0xff]
        %v347 = vld [vmem:[#allocation2 + $0x28] sm:$0xff]
        %v348 = vld [vmem:[#allocation2 + $0x30] sm:$0xff]
        %v349 = vld [vmem:[#allocation2 + $0x38] sm:$0xff]
        %v350 = vld [vmem:[%s318] sm:$0xf]
        %v351 = vld [vmem:[%s318 + $0x4] sm:$0xf]
        %v352 = vld [vmem:[%s279] sm:$0xff]
        %v353 = vld [vmem:[%s279 + $0x8] sm:$0xff]
        %v354 = vld [vmem:[%s279 + $0x10] sm:$0xff]
        %v355 = vld [vmem:[%s279 + $0x18] sm:$0xff]
        %v356 = vld [vmem:[%s279 + $0x20] sm:$0xff]
        %v357 = vld [vmem:[%s279 + $0x28] sm:$0xff]
        %v358 = vld [vmem:[%s279 + $0x30] sm:$0xff]
        %v359 = vld [vmem:[%s279 + $0x38] sm:$0xff]
        %v360 = vld [vmem:[%s279 + $0x40] sm:$0xff]
        %v361 = vld [vmem:[%s279 + $0x48] sm:$0xff]
        %v362 = vld [vmem:[%s279 + $0x50] sm:$0xff]
        %v363 = vld [vmem:[%s279 + $0x58] sm:$0xff]
        %v364 = vld [vmem:[%s279 + $0x60] sm:$0xff]
        %v365 = vld [vmem:[%s279 + $0x68] sm:$0xff]
        %v366 = vld [vmem:[%s279 + $0x70] sm:$0xff]
        %v367 = vld [vmem:[%s279 + $0x78] sm:$0xff]
        %v368 = vld [vmem:[%s279 + $0x80] sm:$0xff]
        %v369 = vld [vmem:[%s279 + $0x88] sm:$0xff]
        %v370 = vld [vmem:[%s279 + $0x90] sm:$0xff]
        %v371 = vld [vmem:[%s279 + $0x98] sm:$0xff]
        %v372 = vld [vmem:[%s279 + $0xa0] sm:$0xff]
        %v373 = vld [vmem:[%s279 + $0xa8] sm:$0xff]
        %v374 = vld [vmem:[%s279 + $0xb0] sm:$0xff]
        %v375 = vld [vmem:[%s279 + $0xb8] sm:$0xff]
        %v376 = vld [vmem:[%s279 + $0xc0] sm:$0xff]
        %v377 = vld [vmem:[%s279 + $0xc8] sm:$0xff]
        %v378 = vld [vmem:[%s279 + $0xd0] sm:$0xff]
        %v379 = vld [vmem:[%s279 + $0xd8] sm:$0xff]
        %v380 = vld [vmem:[%s279 + $0xe0] sm:$0xff]
        %v381 = vld [vmem:[%s279 + $0xe8] sm:$0xff]
        %v382 = vld [vmem:[%s279 + $0xf0] sm:$0xff]
        %v383 = vld [vmem:[%s279 + $0xf8] sm:$0xff]
        %v386 = vunpack.c.l.b16 %v350
        %v387 = vunpack.c.l.b16 %v351
        %v388 = vpack.c.b16 %v387, %v386
        %v422 = vunpack.c.l.b16 %v352
        %v423 = vunpack.c.h.b16 %v352
        %v424 = vunpack.c.l.b16 %v353
        %v425 = vunpack.c.h.b16 %v353
        %v426 = vunpack.c.l.b16 %v354
        %v427 = vunpack.c.h.b16 %v354
        %v428 = vunpack.c.l.b16 %v355
        %v429 = vunpack.c.h.b16 %v355
        %v430 = vunpack.c.l.b16 %v356
        %v431 = vunpack.c.h.b16 %v356
        %v432 = vunpack.c.l.b16 %v357
        %v433 = vunpack.c.h.b16 %v357
        %v434 = vunpack.c.l.b16 %v358
        %v435 = vunpack.c.h.b16 %v358
        %v436 = vunpack.c.l.b16 %v359
        %v437 = vunpack.c.h.b16 %v359
        %v438 = vunpack.c.l.b16 %v360
        %v439 = vunpack.c.h.b16 %v360
        %v440 = vunpack.c.l.b16 %v361
        %v441 = vunpack.c.h.b16 %v361
        %v442 = vunpack.c.l.b16 %v362
        %v443 = vunpack.c.h.b16 %v362
        %v444 = vunpack.c.l.b16 %v363
        %v445 = vunpack.c.h.b16 %v363
        %v446 = vunpack.c.l.b16 %v364
        %v447 = vunpack.c.h.b16 %v364
        %v448 = vunpack.c.l.b16 %v365
        %v449 = vunpack.c.h.b16 %v365
        %v450 = vunpack.c.l.b16 %v366
        %v451 = vunpack.c.h.b16 %v366
        %v452 = vunpack.c.l.b16 %v367
        %v453 = vunpack.c.h.b16 %v367
        %v454 = vunpack.c.l.b16 %v368
        %v455 = vunpack.c.h.b16 %v368
        %v456 = vunpack.c.l.b16 %v369
        %v457 = vunpack.c.h.b16 %v369
        %v458 = vunpack.c.l.b16 %v370
        %v459 = vunpack.c.h.b16 %v370
        %v460 = vunpack.c.l.b16 %v371
        %v461 = vunpack.c.h.b16 %v371
        %v462 = vunpack.c.l.b16 %v372
        %v463 = vunpack.c.h.b16 %v372
        %v464 = vunpack.c.l.b16 %v373
        %v465 = vunpack.c.h.b16 %v373
        %v466 = vunpack.c.l.b16 %v374
        %v467 = vunpack.c.h.b16 %v374
        %v468 = vunpack.c.l.b16 %v375
        %v469 = vunpack.c.h.b16 %v375
        %v470 = vunpack.c.l.b16 %v376
        %v471 = vunpack.c.h.b16 %v376
        %v472 = vunpack.c.l.b16 %v377
        %v473 = vunpack.c.h.b16 %v377
        %v474 = vunpack.c.l.b16 %v378
        %v475 = vunpack.c.h.b16 %v378
        %v476 = vunpack.c.l.b16 %v379
        %v477 = vunpack.c.h.b16 %v379
        %v478 = vunpack.c.l.b16 %v380
        %v479 = vunpack.c.h.b16 %v380
        %v480 = vunpack.c.l.b16 %v381
        %v481 = vunpack.c.h.b16 %v381
        %v482 = vunpack.c.l.b16 %v382
        %v483 = vunpack.c.h.b16 %v382
        %v484 = vunpack.c.l.b16 %v383
        %v485 = vunpack.c.h.b16 %v383
        %v486 = vpack.c.b16 %v426, %v422
        %v487 = vpack.c.b16 %v427, %v423
        %v488 = vpack.c.b16 %v428, %v424
        %v489 = vpack.c.b16 %v429, %v425
        %v490 = vpack.c.b16 %v434, %v430
        %v491 = vpack.c.b16 %v435, %v431
        %v492 = vpack.c.b16 %v436, %v432
        %v493 = vpack.c.b16 %v437, %v433
        %v494 = vpack.c.b16 %v442, %v438
        %v495 = vpack.c.b16 %v443, %v439
        %v496 = vpack.c.b16 %v444, %v440
        %v497 = vpack.c.b16 %v445, %v441
        %v498 = vpack.c.b16 %v450, %v446
        %v499 = vpack.c.b16 %v451, %v447
        %v500 = vpack.c.b16 %v452, %v448
        %v501 = vpack.c.b16 %v453, %v449
        %v502 = vpack.c.b16 %v458, %v454
        %v503 = vpack.c.b16 %v459, %v455
        %v504 = vpack.c.b16 %v460, %v456
        %v505 = vpack.c.b16 %v461, %v457
        %v506 = vpack.c.b16 %v466, %v462
        %v507 = vpack.c.b16 %v467, %v463
        %v508 = vpack.c.b16 %v468, %v464
        %v509 = vpack.c.b16 %v469, %v465
        %v510 = vpack.c.b16 %v474, %v470
        %v511 = vpack.c.b16 %v475, %v471
        %v512 = vpack.c.b16 %v476, %v472
        %v513 = vpack.c.b16 %v477, %v473
        %v514 = vpack.c.b16 %v482, %v478
        %v515 = vpack.c.b16 %v483, %v479
        %v516 = vpack.c.b16 %v484, %v480
        %v517 = vpack.c.b16 %v485, %v481
        %550 = vmatprep.subr.bf16.mxu0 %v487
        %551 = vmatpush1.bf16.msra.mxu0 %v486
        %552 = vmatprep.subr.bf16.mxu0 %v491
        %553 = vmatpush1.bf16.msra.mxu0 %v490
        %554 = vmatprep.subr.bf16.mxu0 %v495
        %555 = vmatpush1.bf16.msra.mxu0 %v494
        %556 = vmatprep.subr.bf16.mxu0 %v499
        %557 = vmatpush1.bf16.msra.mxu0 %v498
        %558 = vmatprep.subr.bf16.mxu0 %v503
        %559 = vmatpush1.bf16.msra.mxu0 %v502
        %560 = vmatprep.subr.bf16.mxu0 %v507
        %561 = vmatpush1.bf16.msra.mxu0 %v506
        %562 = vmatprep.subr.bf16.mxu0 %v511
        %563 = vmatpush1.bf16.msra.mxu0 %v510
        %564 = vmatprep.subr.bf16.mxu0 %v515
        %565 = vmatpush1.bf16.msra.mxu0 %v514
        %566 = vmatprep.subr.bf16.mxu0 0
        %567 = vmatpush1.bf16.msra.mxu0 0
        %568 = vmatprep.subr.bf16.mxu0 0
        %569 = vmatpush1.bf16.msra.mxu0 0
        %570 = vmatprep.subr.bf16.mxu0 0
        %571 = vmatpush1.bf16.msra.mxu0 0
        %572 = vmatprep.subr.bf16.mxu0 0
        %573 = vmatpush1.bf16.msra.mxu0 0
        %574 = vmatprep.subr.bf16.mxu0 0
        %575 = vmatpush1.bf16.msra.mxu0 0
        %576 = vmatprep.subr.bf16.mxu0 0
        %577 = vmatpush1.bf16.msra.mxu0 0
        %578 = vmatprep.subr.bf16.mxu0 0
        %579 = vmatpush1.bf16.msra.mxu0 0
        %580 = vmatprep.subr.bf16.mxu0 0
        %581 = vmatpush1.bf16.msra.mxu0 0
        %582 = vmatprep.mubr.bf16.mxu0 0
        %583 = vmatmul.mubr.bf16.gmra.mrb[0].mxu0 %v388
        %v584 = vpop.f32.mrb[0].mxu0
        %v585 = vadd.f32 0.0, %v584
        %v586 = vpop.f32.mrb[0].mxu0
        %v587 = vadd.f32 0.0, %v586
        %v588 = vpop.f32.mrb[0].mxu0
        %v589 = vadd.f32 0.0, %v588
        %v590 = vpop.f32.mrb[0].mxu0
        %v591 = vadd.f32 0.0, %v590
        %592 = vdwg.mxu0
        %593 = vmatprep.subr.bf16.mxu0 %v489
        %594 = vmatpush1.bf16.msra.mxu0 %v488
        %595 = vmatprep.subr.bf16.mxu0 %v493
        %596 = vmatpush1.bf16.msra.mxu0 %v492
        %597 = vmatprep.subr.bf16.mxu0 %v497
        %598 = vmatpush1.bf16.msra.mxu0 %v496
        %599 = vmatprep.subr.bf16.mxu0 %v501
        %600 = vmatpush1.bf16.msra.mxu0 %v500
        %601 = vmatprep.subr.bf16.mxu0 %v505
        %602 = vmatpush1.bf16.msra.mxu0 %v504
        %603 = vmatprep.subr.bf16.mxu0 %v509
        %604 = vmatpush1.bf16.msra.mxu0 %v508
        %605 = vmatprep.subr.bf16.mxu0 %v513
        %606 = vmatpush1.bf16.msra.mxu0 %v512
        %607 = vmatprep.subr.bf16.mxu0 %v517
        %608 = vmatpush1.bf16.msra.mxu0 %v516
        %609 = vmatprep.subr.bf16.mxu0 0
        %610 = vmatpush1.bf16.msra.mxu0 0
        %611 = vmatprep.subr.bf16.mxu0 0
        %612 = vmatpush1.bf16.msra.mxu0 0
        %613 = vmatprep.subr.bf16.mxu0 0
        %614 = vmatpush1.bf16.msra.mxu0 0
        %615 = vmatprep.subr.bf16.mxu0 0
        %616 = vmatpush1.bf16.msra.mxu0 0
        %617 = vmatprep.subr.bf16.mxu0 0
        %618 = vmatpush1.bf16.msra.mxu0 0
        %619 = vmatprep.subr.bf16.mxu0 0
        %620 = vmatpush1.bf16.msra.mxu0 0
        %621 = vmatprep.subr.bf16.mxu0 0
        %622 = vmatpush1.bf16.msra.mxu0 0
        %623 = vmatprep.subr.bf16.mxu0 0
        %624 = vmatpush1.bf16.msra.mxu0 0
        %625 = vmatprep.mubr.bf16.mxu0 0
        %626 = vmatmul.mubr.bf16.gmra.mrb[0].mxu0 %v388
        %v627 = vpop.f32.mrb[0].mxu0
        %v628 = vadd.f32 0.0, %v627
        %v629 = vpop.f32.mrb[0].mxu0
        %v630 = vadd.f32 0.0, %v629
        %v631 = vpop.f32.mrb[0].mxu0
        %v632 = vadd.f32 0.0, %v631
        %v633 = vpop.f32.mrb[0].mxu0
        %v634 = vadd.f32 0.0, %v633
        %635 = vdwg.mxu0
        %v636 = vadd.f32 %v342, %v585
        %v637 = vadd.f32 %v343, %v587
        %v638 = vadd.f32 %v344, %v628
        %v639 = vadd.f32 %v345, %v630
        %v640 = vadd.f32 %v346, %v589
        %v641 = vadd.f32 %v347, %v591
        %v642 = vadd.f32 %v348, %v632
        %v643 = vadd.f32 %v349, %v634
        %644 = vst [vmem:[#allocation2] sm:$0xff] %v636
        %645 = vst [vmem:[#allocation2 + $0x8] sm:$0xff] %v637
        %646 = vst [vmem:[#allocation2 + $0x10] sm:$0xff] %v638
        %647 = vst [vmem:[#allocation2 + $0x18] sm:$0xff] %v639
        %648 = vst [vmem:[#allocation2 + $0x20] sm:$0xff] %v640
        %649 = vst [vmem:[#allocation2 + $0x28] sm:$0xff] %v641
        %650 = vst [vmem:[#allocation2 + $0x30] sm:$0xff] %v642
        %651 = vst [vmem:[#allocation2 + $0x38] sm:$0xff] %v643
        // Predicated region
        $region60: #{san_bert_forward.11} parent=50 // pred_check
          %p652 = pneg %p330
        $region61: #{san_bert_forward.11} parent=50 // pred_check_branch
          %654 = sbr.rel (%p652) target = $region63
        $region62: #{san_bert_forward.11} parent=50 // pred_region
          %v655 = vld [vmem:[#allocation2] sm:$0xff]
          %v656 = vld [vmem:[#allocation2 + $0x8] sm:$0xff]
          %v657 = vld [vmem:[#allocation2 + $0x10] sm:$0xff]
          %v658 = vld [vmem:[#allocation2 + $0x18] sm:$0xff]
          %v659 = vld [vmem:[#allocation2 + $0x20] sm:$0xff]
          %v660 = vld [vmem:[#allocation2 + $0x28] sm:$0xff]
          %v661 = vld [vmem:[#allocation2 + $0x30] sm:$0xff]
          %v662 = vld [vmem:[#allocation2 + $0x38] sm:$0xff]
          %v663 = vld [vmem:[%s325] sm:$0xf]
          %v665 = vlaneseq
          %v666 = vshrl.u32 %v665, 7
          %v667 = vsub.s32 0, %v666
          %v668 = vrot.slane %v663, %v667
          %v669 = vlaneseq
          %v670 = vshrl.u32 %v669, 7
          %v671 = vsub.s32 1, %v670
          %v672 = vrot.slane %v663, %v671
          %v673 = vlaneseq
          %v674 = vshrl.u32 %v673, 7
          %v675 = vsub.s32 2, %v674
          %v676 = vrot.slane %v663, %v675
          %v677 = vlaneseq
          %v678 = vshrl.u32 %v677, 7
          %v679 = vsub.s32 3, %v678
          %v680 = vrot.slane %v663, %v679
          %v685 = vadd.f32 %v655, %v668
          %v686 = vadd.f32 %v656, %v672
          %v687 = vadd.f32 %v657, %v676
          %v688 = vadd.f32 %v658, %v680
          %v689 = vadd.f32 %v659, %v668
          %v690 = vadd.f32 %v660, %v672
          %v691 = vadd.f32 %v661, %v676
          %v692 = vadd.f32 %v662, %v680
          %v693 = vpack.c.bf16 %v689, %v685
          %v694 = vpack.c.bf16 %v690, %v686
          %v695 = vpack.c.bf16 %v691, %v687
          %v696 = vpack.c.bf16 %v692, %v688
          %v701 = vunpack.c.l.b16 %v693
          %v702 = vunpack.c.l.b16 %v694
          %v703 = vunpack.c.l.b16 %v695
          %v704 = vunpack.c.l.b16 %v696
          %v705 = vunpack.c.h.b16 %v693
          %v706 = vunpack.c.h.b16 %v694
          %v707 = vunpack.c.h.b16 %v695
          %v708 = vunpack.c.h.b16 %v696
          %v709 = vpack.c.b16 %v702, %v701
          %v710 = vpack.c.b16 %v704, %v703
          %v711 = vpack.c.b16 %v706, %v705
          %v712 = vpack.c.b16 %v708, %v707
          %717 = vst [vmem:[%s310] sm:$0xff] %v709
          %718 = vst [vmem:[%s310 + $0x8] sm:$0xff] %v710
          %719 = vst [vmem:[%s310 + $0x10] sm:$0xff] %v711
          %720 = vst [vmem:[%s310 + $0x18] sm:$0xff] %v712
        $region63: #{san_bert_forward.11} parent=50 // pred_fallthru
          _
        %s721 = sand.u32 %s125, 1
        %s722 = sand.u32 %s125, 1
        %s723 = smul.addr %s722, 32
        %s724 = scalar_lea.vmem [#allocation4], %s723
        // Predicated region
        $region64: #{san_bert_forward.11} parent=50 // pred_check
          %p725 = pneg %p135
        $region65: #{san_bert_forward.11} parent=50 // pred_check_branch
          %727 = sbr.rel (%p725) target = $region67
        $region66: #{san_bert_forward.11} parent=50 // pred_region
          %s728 = smul.u32 2, %s19
          %s729 = smul.u32 4, %s20
          %s730 = smul.addr %s728, 12
          %s731 = sadd.s32 %s729, %s730
          %s732 = smul.addr %s731, 4
          %s733 = scalar_lea.vmem %s3, %s732
          // Predicated region
          $region68: #{san_bert_forward.11} parent=66 // pred_check
            _
          $region69: #{san_bert_forward.11} parent=66 // pred_check_branch
            %735 = sbr.rel (0) target = $region71
          $region70: #{san_bert_forward.11} parent=66 // pred_region
            // Predicated region
            $region72: #{san_bert_forward.11} parent=70 // pred_check
              _
            $region73: #{san_bert_forward.11} parent=70 // pred_check_branch
              %737 = sbr.rel (0) target = $region75
            $region74: #{san_bert_forward.11} parent=70 // pred_region
              loop: start=0, step=1, limit=1
              $region76: #{san_bert_forward.11} parent=74 // loop_pre_header
                _
              $region77: #{san_bert_forward.11} parent=74 // loop_header
                %s739 = sphi 0, %s743
                %p740 = scmp.ge.s32.totalorder %s739, 1
                %s744 = sphi %s724, %s724
                %s745 = sphi %s733, %s733
              $region78: #{san_bert_forward.11} parent=74 // loop_header_branch
                %742 = sbr.rel (%p740) target = $region82
              $region79: #{san_bert_forward.11} parent=74 // loop_body
                %v746 = vld [vmem:[%s744] sm:$0xff]
                %747 = vst [vmem:[%s745] sm:$0xff] %v746
                %v748 = vld [vmem:[%s744 + $0x8] sm:$0xff]
                %749 = vst [vmem:[%s745 + $0x8] sm:$0xff] %v748
                %v750 = vld [vmem:[%s744 + $0x10] sm:$0xff]
                %751 = vst [vmem:[%s745 + $0x30] sm:$0xff] %v750
                %v752 = vld [vmem:[%s744 + $0x18] sm:$0xff]
                %753 = vst [vmem:[%s745 + $0x38] sm:$0xff] %v752
              $region80: #{san_bert_forward.11} parent=74 // loop_footer
                %s743 = sadd.s32 1, %s739
              $region81: #{san_bert_forward.11} parent=74 // loop_footer_branch
                %738 = sbr.rel target = $region77
              $region82: #{san_bert_forward.11} parent=74 // loop_exit
                _
            $region75: #{san_bert_forward.11} parent=70 // pred_fallthru
              _
            // Predicated region
            $region83: #{san_bert_forward.11} parent=70 // pred_check
              _
            $region84: #{san_bert_forward.11} parent=70 // pred_check_branch
              %755 = sbr.rel target = $region86
            $region85: #{san_bert_forward.11} parent=70 // pred_region
              _
            $region86: #{san_bert_forward.11} parent=70 // pred_fallthru
              _
          $region71: #{san_bert_forward.11} parent=66 // pred_fallthru
            _
          %756 = vnop
        $region67: #{san_bert_forward.11} parent=50 // pred_fallthru
          _
      $region51: #{san_bert_forward.11} parent=5 // pred_fallthru
        _
      %p757 = scmp.le.s32.totalorder 2, %s9
      // Predicated region
      $region87: #{san_bert_forward.11} parent=5 // pred_check
        %p758 = pneg %p757
      $region88: #{san_bert_forward.11} parent=5 // pred_check_branch
        %760 = sbr.rel (%p758) target = $region90
      $region89: #{san_bert_forward.11} parent=5 // pred_region
        %s761 = ssub.s32 %s9, 2
        // Predicated region
        $region91: #{san_bert_forward.11} parent=89 // pred_check
          %p762 = pneg %p141
        $region92: #{san_bert_forward.11} parent=89 // pred_check_branch
          %764 = sbr.rel (%p762) target = $region94
        $region93: #{san_bert_forward.11} parent=89 // pred_region
          %s765 = sand.u32 %s126, 1
          %s766 = sand.u32 %s126, 1
          %s767 = smul.addr %s766, 32
          %s768 = scalar_lea.vmem [#allocation4], %s767
        $region94: #{san_bert_forward.11} parent=89 // pred_fallthru
          _
      $region90: #{san_bert_forward.11} parent=5 // pred_fallthru
        _
    $region6: #{san_bert_forward.11} parent=1 // loop_footer
      %s13 = sadd.s32 1, %s9
    $region7: #{san_bert_forward.11} parent=1 // loop_footer_branch
      %8 = sbr.rel target = $region3
    $region8: #{san_bert_forward.11} parent=1 // loop_exit
      _

// kernel: san_bert_forward.13
$region0: #{san_bert_forward.13}
  #allocation0 [shape = 'u32[]', space=smem, size = 0x4, offset = 0x4, fixed_abs, tag = 'smem constant byte address 0x4 - core index']
  #allocation1 [shape = 'u32[144,128]{1,0:T(1,128)}', space=vmem, size = 0x12000, scoped, tag = 'internal scratch']
  #allocation2 [shape = 'f32[16,32]{1,0:T(8,128)}', space=vmem, size = 0x2000, scoped, tag = 'scratch operand']
  %s0 = inlined_call_operand.vmem [shape: bf16[16,512], index: 0, kind: input, shape index: {}]
  %s1 = inlined_call_operand.vmem [shape: bf16[512,32], index: 1, kind: input, shape index: {}]
  %s2 = inlined_call_operand.vmem [shape: f32[1,32], index: 2, kind: input, shape index: {}]
  %s3 = inlined_call_operand.vmem [shape: bf16[16,32], index: 3, kind: input, shape index: {}]
  %s4 = inlined_call_operand.vmem [shape: f32[1,32], index: 4, kind: input, shape index: {}]
  %s5 = inlined_call_operand.vmem [shape: f32[1,32], index: 5, kind: input, shape index: {}]
  %s6 = inlined_call_operand.vmem [shape: bf16[16,32], index: 6, kind: output, shape index: {}]
  %s7 = sld [smem:[#allocation0]]
  $region42: #{san_bert_forward.13} parent=0
    _
  %s9 = ssub.s32 1, %s7
  %s10 = scalar_select 0, %s9, %s7
  // Predicated region
  $region2: #{san_bert_forward.13} parent=0 // pred_check
    _
  $region3: #{san_bert_forward.13} parent=0 // pred_check_branch
    %12 = sbr.rel (0) target = $region5
  $region4: #{san_bert_forward.13} parent=0 // pred_region
    _
  $region5: #{san_bert_forward.13} parent=0 // pred_fallthru
    _
  // Predicated region
  $region6: #{san_bert_forward.13} parent=0 // pred_check
    _
  $region7: #{san_bert_forward.13} parent=0 // pred_check_branch
    %14 = sbr.rel (0) target = $region9
  $region8: #{san_bert_forward.13} parent=0 // pred_region
    _
  $region9: #{san_bert_forward.13} parent=0 // pred_fallthru
    _
  // Predicated region
  $region10: #{san_bert_forward.13} parent=0 // pred_check
    _
  $region11: #{san_bert_forward.13} parent=0 // pred_check_branch
    %16 = sbr.rel (0) target = $region13
  $region12: #{san_bert_forward.13} parent=0 // pred_region
    _
  $region13: #{san_bert_forward.13} parent=0 // pred_fallthru
    _
  // Predicated region
  $region14: #{san_bert_forward.13} parent=0 // pred_check
    _
  $region15: #{san_bert_forward.13} parent=0 // pred_check_branch
    %18 = sbr.rel (0) target = $region17
  $region16: #{san_bert_forward.13} parent=0 // pred_region
    _
  $region17: #{san_bert_forward.13} parent=0 // pred_fallthru
    _
  // Predicated region
  $region18: #{san_bert_forward.13} parent=0 // pred_check
    _
  $region19: #{san_bert_forward.13} parent=0 // pred_check_branch
    %20 = sbr.rel (0) target = $region21
  $region20: #{san_bert_forward.13} parent=0 // pred_region
    _
  $region21: #{san_bert_forward.13} parent=0 // pred_fallthru
    _
  // Predicated region
  $region22: #{san_bert_forward.13} parent=0 // pred_check
    _
  $region23: #{san_bert_forward.13} parent=0 // pred_check_branch
    %22 = sbr.rel (0) target = $region25
  $region24: #{san_bert_forward.13} parent=0 // pred_region
    _
  $region25: #{san_bert_forward.13} parent=0 // pred_fallthru
    _
  %p24 = scmp.eq.s32.totalorder 0, 0
  // Predicated region
  $region26: #{san_bert_forward.13} parent=0 // pred_check
    %p25 = pneg %p24
  $region27: #{san_bert_forward.13} parent=0 // pred_check_branch
    %27 = sbr.rel (%p25) target = $region29
  $region28: #{san_bert_forward.13} parent=0 // pred_region
    %vm28 = vcmask 261120
    %29 = vst.msk [vmem:[#allocation2] sm:$0xff] %vm28, 0.0
    %30 = vst.msk [vmem:[#allocation2 + $0x8] sm:$0xff] %vm28, 0.0
  $region29: #{san_bert_forward.13} parent=0 // pred_fallthru
    _
  %v31 = vld [vmem:[#allocation2] sm:$0xff]
  %v32 = vld [vmem:[#allocation2 + $0x8] sm:$0xff]
  %v33 = vld [vmem:[%s0] sm:$0xff]
  %v34 = vld [vmem:[%s0 + $0x8] sm:$0xff]
  %v35 = vld [vmem:[%s0 + $0x10] sm:$0xff]
  %v36 = vld [vmem:[%s0 + $0x18] sm:$0xff]
  %v37 = vld [vmem:[%s1] sm:$0xf]
  %v38 = vld [vmem:[%s1 + $0x4] sm:$0xf]
  %v39 = vld [vmem:[%s1 + $0x8] sm:$0xf]
  %v40 = vld [vmem:[%s1 + $0xc] sm:$0xf]
  %v41 = vld [vmem:[%s1 + $0x10] sm:$0xf]
  %v42 = vld [vmem:[%s1 + $0x14] sm:$0xf]
  %v43 = vld [vmem:[%s1 + $0x18] sm:$0xf]
  %v44 = vld [vmem:[%s1 + $0x1c] sm:$0xf]
  %v45 = vld [vmem:[%s1 + $0x20] sm:$0xf]
  %v46 = vld [vmem:[%s1 + $0x24] sm:$0xf]
  %v47 = vld [vmem:[%s1 + $0x28] sm:$0xf]
  %v48 = vld [vmem:[%s1 + $0x2c] sm:$0xf]
  %v49 = vld [vmem:[%s1 + $0x30] sm:$0xf]
  %v50 = vld [vmem:[%s1 + $0x34] sm:$0xf]
  %v51 = vld [vmem:[%s1 + $0x38] sm:$0xf]
  %v52 = vld [vmem:[%s1 + $0x3c] sm:$0xf]
  %v53 = vld [vmem:[%s1 + $0x40] sm:$0xf]
  %v54 = vld [vmem:[%s1 + $0x44] sm:$0xf]
  %v55 = vld [vmem:[%s1 + $0x48] sm:$0xf]
  %v56 = vld [vmem:[%s1 + $0x4c] sm:$0xf]
  %v57 = vld [vmem:[%s1 + $0x50] sm:$0xf]
  %v58 = vld [vmem:[%s1 + $0x54] sm:$0xf]
  %v59 = vld [vmem:[%s1 + $0x58] sm:$0xf]
  %v60 = vld [vmem:[%s1 + $0x5c] sm:$0xf]
  %v61 = vld [vmem:[%s1 + $0x60] sm:$0xf]
  %v62 = vld [vmem:[%s1 + $0x64] sm:$0xf]
  %v63 = vld [vmem:[%s1 + $0x68] sm:$0xf]
  %v64 = vld [vmem:[%s1 + $0x6c] sm:$0xf]
  %v65 = vld [vmem:[%s1 + $0x70] sm:$0xf]
  %v66 = vld [vmem:[%s1 + $0x74] sm:$0xf]
  %v67 = vld [vmem:[%s1 + $0x78] sm:$0xf]
  %v68 = vld [vmem:[%s1 + $0x7c] sm:$0xf]
  %v69 = vld [vmem:[%s1 + $0x80] sm:$0xf]
  %v70 = vld [vmem:[%s1 + $0x84] sm:$0xf]
  %v71 = vld [vmem:[%s1 + $0x88] sm:$0xf]
  %v72 = vld [vmem:[%s1 + $0x8c] sm:$0xf]
  %v73 = vld [vmem:[%s1 + $0x90] sm:$0xf]
  %v74 = vld [vmem:[%s1 + $0x94] sm:$0xf]
  %v75 = vld [vmem:[%s1 + $0x98] sm:$0xf]
  %v76 = vld [vmem:[%s1 + $0x9c] sm:$0xf]
  %v77 = vld [vmem:[%s1 + $0xa0] sm:$0xf]
  %v78 = vld [vmem:[%s1 + $0xa4] sm:$0xf]
  %v79 = vld [vmem:[%s1 + $0xa8] sm:$0xf]
  %v80 = vld [vmem:[%s1 + $0xac] sm:$0xf]
  %v81 = vld [vmem:[%s1 + $0xb0] sm:$0xf]
  %v82 = vld [vmem:[%s1 + $0xb4] sm:$0xf]
  %v83 = vld [vmem:[%s1 + $0xb8] sm:$0xf]
  %v84 = vld [vmem:[%s1 + $0xbc] sm:$0xf]
  %v85 = vld [vmem:[%s1 + $0xc0] sm:$0xf]
  %v86 = vld [vmem:[%s1 + $0xc4] sm:$0xf]
  %v87 = vld [vmem:[%s1 + $0xc8] sm:$0xf]
  %v88 = vld [vmem:[%s1 + $0xcc] sm:$0xf]
  %v89 = vld [vmem:[%s1 + $0xd0] sm:$0xf]
  %v90 = vld [vmem:[%s1 + $0xd4] sm:$0xf]
  %v91 = vld [vmem:[%s1 + $0xd8] sm:$0xf]
  %v92 = vld [vmem:[%s1 + $0xdc] sm:$0xf]
  %v93 = vld [vmem:[%s1 + $0xe0] sm:$0xf]
  %v94 = vld [vmem:[%s1 + $0xe4] sm:$0xf]
  %v95 = vld [vmem:[%s1 + $0xe8] sm:$0xf]
  %v96 = vld [vmem:[%s1 + $0xec] sm:$0xf]
  %v97 = vld [vmem:[%s1 + $0xf0] sm:$0xf]
  %v98 = vld [vmem:[%s1 + $0xf4] sm:$0xf]
  %v99 = vld [vmem:[%s1 + $0xf8] sm:$0xf]
  %v100 = vld [vmem:[%s1 + $0xfc] sm:$0xf]
  %v105 = vunpack.c.l.b16 %v33
  %v106 = vunpack.c.h.b16 %v33
  %v107 = vunpack.c.l.b16 %v34
  %v108 = vunpack.c.h.b16 %v34
  %v109 = vunpack.c.l.b16 %v35
  %v110 = vunpack.c.h.b16 %v35
  %v111 = vunpack.c.l.b16 %v36
  %v112 = vunpack.c.h.b16 %v36
  %v113 = vpack.c.b16 %v109, %v105
  %v114 = vpack.c.b16 %v110, %v106
  %v115 = vpack.c.b16 %v111, %v107
  %v116 = vpack.c.b16 %v112, %v108
  %v185 = vunpack.c.l.b16 %v37
  %v186 = vunpack.c.l.b16 %v38
  %v187 = vunpack.c.l.b16 %v39
  %v188 = vunpack.c.l.b16 %v40
  %v189 = vunpack.c.l.b16 %v41
  %v190 = vunpack.c.l.b16 %v42
  %v191 = vunpack.c.l.b16 %v43
  %v192 = vunpack.c.l.b16 %v44
  %v193 = vunpack.c.l.b16 %v45
  %v194 = vunpack.c.l.b16 %v46
  %v195 = vunpack.c.l.b16 %v47
  %v196 = vunpack.c.l.b16 %v48
  %v197 = vunpack.c.l.b16 %v49
  %v198 = vunpack.c.l.b16 %v50
  %v199 = vunpack.c.l.b16 %v51
  %v200 = vunpack.c.l.b16 %v52
  %v201 = vunpack.c.l.b16 %v53
  %v202 = vunpack.c.l.b16 %v54
  %v203 = vunpack.c.l.b16 %v55
  %v204 = vunpack.c.l.b16 %v56
  %v205 = vunpack.c.l.b16 %v57
  %v206 = vunpack.c.l.b16 %v58
  %v207 = vunpack.c.l.b16 %v59
  %v208 = vunpack.c.l.b16 %v60
  %v209 = vunpack.c.l.b16 %v61
  %v210 = vunpack.c.l.b16 %v62
  %v211 = vunpack.c.l.b16 %v63
  %v212 = vunpack.c.l.b16 %v64
  %v213 = vunpack.c.l.b16 %v65
  %v214 = vunpack.c.l.b16 %v66
  %v215 = vunpack.c.l.b16 %v67
  %v216 = vunpack.c.l.b16 %v68
  %v217 = vunpack.c.l.b16 %v69
  %v218 = vunpack.c.l.b16 %v70
  %v219 = vunpack.c.l.b16 %v71
  %v220 = vunpack.c.l.b16 %v72
  %v221 = vunpack.c.l.b16 %v73
  %v222 = vunpack.c.l.b16 %v74
  %v223 = vunpack.c.l.b16 %v75
  %v224 = vunpack.c.l.b16 %v76
  %v225 = vunpack.c.l.b16 %v77
  %v226 = vunpack.c.l.b16 %v78
  %v227 = vunpack.c.l.b16 %v79
  %v228 = vunpack.c.l.b16 %v80
  %v229 = vunpack.c.l.b16 %v81
  %v230 = vunpack.c.l.b16 %v82
  %v231 = vunpack.c.l.b16 %v83
  %v232 = vunpack.c.l.b16 %v84
  %v233 = vunpack.c.l.b16 %v85
  %v234 = vunpack.c.l.b16 %v86
  %v235 = vunpack.c.l.b16 %v87
  %v236 = vunpack.c.l.b16 %v88
  %v237 = vunpack.c.l.b16 %v89
  %v238 = vunpack.c.l.b16 %v90
  %v239 = vunpack.c.l.b16 %v91
  %v240 = vunpack.c.l.b16 %v92
  %v241 = vunpack.c.l.b16 %v93
  %v242 = vunpack.c.l.b16 %v94
  %v243 = vunpack.c.l.b16 %v95
  %v244 = vunpack.c.l.b16 %v96
  %v245 = vunpack.c.l.b16 %v97
  %v246 = vunpack.c.l.b16 %v98
  %v247 = vunpack.c.l.b16 %v99
  %v248 = vunpack.c.l.b16 %v100
  %v249 = vpack.c.b16 %v186, %v185
  %v250 = vpack.c.b16 %v188, %v187
  %v251 = vpack.c.b16 %v190, %v189
  %v252 = vpack.c.b16 %v192, %v191
  %v253 = vpack.c.b16 %v194, %v193
  %v254 = vpack.c.b16 %v196, %v195
  %v255 = vpack.c.b16 %v198, %v197
  %v256 = vpack.c.b16 %v200, %v199
  %v257 = vpack.c.b16 %v202, %v201
  %v258 = vpack.c.b16 %v204, %v203
  %v259 = vpack.c.b16 %v206, %v205
  %v260 = vpack.c.b16 %v208, %v207
  %v261 = vpack.c.b16 %v210, %v209
  %v262 = vpack.c.b16 %v212, %v211
  %v263 = vpack.c.b16 %v214, %v213
  %v264 = vpack.c.b16 %v216, %v215
  %v265 = vpack.c.b16 %v218, %v217
  %v266 = vpack.c.b16 %v220, %v219
  %v267 = vpack.c.b16 %v222, %v221
  %v268 = vpack.c.b16 %v224, %v223
  %v269 = vpack.c.b16 %v226, %v225
  %v270 = vpack.c.b16 %v228, %v227
  %v271 = vpack.c.b16 %v230, %v229
  %v272 = vpack.c.b16 %v232, %v231
  %v273 = vpack.c.b16 %v234, %v233
  %v274 = vpack.c.b16 %v236, %v235
  %v275 = vpack.c.b16 %v238, %v237
  %v276 = vpack.c.b16 %v240, %v239
  %v277 = vpack.c.b16 %v242, %v241
  %v278 = vpack.c.b16 %v244, %v243
  %v279 = vpack.c.b16 %v246, %v245
  %v280 = vpack.c.b16 %v248, %v247
  %313 = vmatprep.subr.bf16.mxu0 0
  %314 = vmatpush1.bf16.msra.mxu0 %v249
  %315 = vmatprep.subr.bf16.mxu0 0
  %316 = vmatpush1.bf16.msra.mxu0 %v250
  %317 = vmatprep.subr.bf16.mxu0 0
  %318 = vmatpush1.bf16.msra.mxu0 %v251
  %319 = vmatprep.subr.bf16.mxu0 0
  %320 = vmatpush1.bf16.msra.mxu0 %v252
  %321 = vmatprep.subr.bf16.mxu0 0
  %322 = vmatpush1.bf16.msra.mxu0 %v253
  %323 = vmatprep.subr.bf16.mxu0 0
  %324 = vmatpush1.bf16.msra.mxu0 %v254
  %325 = vmatprep.subr.bf16.mxu0 0
  %326 = vmatpush1.bf16.msra.mxu0 %v255
  %327 = vmatprep.subr.bf16.mxu0 0
  %328 = vmatpush1.bf16.msra.mxu0 %v256
  %329 = vmatprep.subr.bf16.mxu0 0
  %330 = vmatpush1.bf16.msra.mxu0 %v257
  %331 = vmatprep.subr.bf16.mxu0 0
  %332 = vmatpush1.bf16.msra.mxu0 %v258
  %333 = vmatprep.subr.bf16.mxu0 0
  %334 = vmatpush1.bf16.msra.mxu0 %v259
  %335 = vmatprep.subr.bf16.mxu0 0
  %336 = vmatpush1.bf16.msra.mxu0 %v260
  %337 = vmatprep.subr.bf16.mxu0 0
  %338 = vmatpush1.bf16.msra.mxu0 %v261
  %339 = vmatprep.subr.bf16.mxu0 0
  %340 = vmatpush1.bf16.msra.mxu0 %v262
  %341 = vmatprep.subr.bf16.mxu0 0
  %342 = vmatpush1.bf16.msra.mxu0 %v263
  %343 = vmatprep.subr.bf16.mxu0 0
  %344 = vmatpush1.bf16.msra.mxu0 %v264
  %345 = vmatprep.mubr.bf16.mxu0 %v114
  %346 = vmatmul.mubr.bf16.gmra.mrb[0].mxu0 %v113
  %v347 = vpop.f32.mrb[0].mxu0
  %v348 = vadd.f32 0.0, %v347
  %v349 = vpop.f32.mrb[0].mxu0
  %v350 = vpop.f32.mrb[0].mxu0
  %v351 = vadd.f32 0.0, %v350
  %v352 = vpop.f32.mrb[0].mxu0
  %353 = vdwg.mxu0
  %354 = vmatprep.subr.bf16.mxu0 0
  %355 = vmatpush1.bf16.msra.mxu0 %v265
  %356 = vmatprep.subr.bf16.mxu0 0
  %357 = vmatpush1.bf16.msra.mxu0 %v266
  %358 = vmatprep.subr.bf16.mxu0 0
  %359 = vmatpush1.bf16.msra.mxu0 %v267
  %360 = vmatprep.subr.bf16.mxu0 0
  %361 = vmatpush1.bf16.msra.mxu0 %v268
  %362 = vmatprep.subr.bf16.mxu0 0
  %363 = vmatpush1.bf16.msra.mxu0 %v269
  %364 = vmatprep.subr.bf16.mxu0 0
  %365 = vmatpush1.bf16.msra.mxu0 %v270
  %366 = vmatprep.subr.bf16.mxu0 0
  %367 = vmatpush1.bf16.msra.mxu0 %v271
  %368 = vmatprep.subr.bf16.mxu0 0
  %369 = vmatpush1.bf16.msra.mxu0 %v272
  %370 = vmatprep.subr.bf16.mxu0 0
  %371 = vmatpush1.bf16.msra.mxu0 %v273
  %372 = vmatprep.subr.bf16.mxu0 0
  %373 = vmatpush1.bf16.msra.mxu0 %v274
  %374 = vmatprep.subr.bf16.mxu0 0
  %375 = vmatpush1.bf16.msra.mxu0 %v275
  %376 = vmatprep.subr.bf16.mxu0 0
  %377 = vmatpush1.bf16.msra.mxu0 %v276
  %378 = vmatprep.subr.bf16.mxu0 0
  %379 = vmatpush1.bf16.msra.mxu0 %v277
  %380 = vmatprep.subr.bf16.mxu0 0
  %381 = vmatpush1.bf16.msra.mxu0 %v278
  %382 = vmatprep.subr.bf16.mxu0 0
  %383 = vmatpush1.bf16.msra.mxu0 %v279
  %384 = vmatprep.subr.bf16.mxu0 0
  %385 = vmatpush1.bf16.msra.mxu0 %v280
  %386 = vmatprep.mubr.bf16.mxu0 %v116
  %387 = vmatmul.mubr.bf16.gmra.mrb[0].mxu0 %v115
  %v388 = vpop.f32.mrb[0].mxu0
  %v389 = vadd.f32 %v348, %v388
  %v390 = vpop.f32.mrb[0].mxu0
  %v391 = vpop.f32.mrb[0].mxu0
  %v392 = vadd.f32 %v351, %v391
  %v393 = vpop.f32.mrb[0].mxu0
  %394 = vdwg.mxu0
  %v395 = vadd.f32 %v31, %v389
  %v396 = vadd.f32 %v32, %v392
  %vm397 = vcmask 261120
  %398 = vst.msk [vmem:[#allocation2] sm:$0xff] %vm397, %v395
  %399 = vst.msk [vmem:[#allocation2 + $0x8] sm:$0xff] %vm397, %v396
  // Predicated region
  $region30: #{san_bert_forward.13} parent=0 // pred_check
    %p400 = pneg %p24
  $region31: #{san_bert_forward.13} parent=0 // pred_check_branch
    %402 = sbr.rel (%p400) target = $region33
  $region32: #{san_bert_forward.13} parent=0 // pred_region
    %v403 = vld [vmem:[#allocation2] sm:$0xff]
    %v404 = vld [vmem:[#allocation2 + $0x8] sm:$0xff]
    %v405 = vld [vmem:[%s2] sm:$0x1]
    %v407 = vlaneseq
    %v408 = vshrl.u32 %v407, 7
    %v409 = vsub.s32 0, %v408
    %v410 = vrot.slane %v405, %v409
    %v412 = vadd.f32 %v403, %v410
    %v413 = vadd.f32 %v404, %v410
    %v414 = vld [vmem:[%s3] sm:$0xf]
    %v415 = vld [vmem:[%s3 + $0x4] sm:$0xf]
    %v416 = vunpack.c.l.bf16 %v414
    %v417 = vunpack.c.l.bf16 %v415
    %v418 = vadd.f32 %v412, %v416
    %v419 = vadd.f32 %v413, %v417
    %v420 = vsel %vm397, %v418, 0.0
    %421 = vadd.xlane.f32.xlu0 %v420
    %v422 = vpop.xlane.xlu0 %421
    %v423 = vsel %vm397, %v419, 0.0
    %424 = vadd.xlane.f32.xlu0 %v423
    %v425 = vpop.xlane.xlu0 %424
    %v426 = vrcp.pop 32.0
    %v427 = vmul.f32 %v422, %v426
    %v428 = vmul.f32 %v425, %v426
    %v429 = vsub.f32 %v418, %v427
    %v430 = vsub.f32 %v419, %v428
    %v431 = vmul.f32 %v429, %v429
    %v432 = vmul.f32 %v430, %v430
    %v433 = vsel %vm397, %v431, 0.0
    %434 = vadd.xlane.f32.xlu0 %v433
    %v435 = vpop.xlane.xlu0 %434
    %v436 = vsel %vm397, %v432, 0.0
    %437 = vadd.xlane.f32.xlu0 %v436
    %v438 = vpop.xlane.xlu0 %437
    %v439 = vmul.f32 %v435, %v426
    %v440 = vmul.f32 %v438, %v426
    %v441 = vadd.f32 %v439, 1e-12
    %v442 = vadd.f32 %v440, 1e-12
    %v443 = vrsqrt.pop %v441
    %v444 = vrsqrt.pop %v442
    %v445 = vmul.f32 %v429, %v443
    %v446 = vmul.f32 %v430, %v444
    %v447 = vld [vmem:[%s4] sm:$0x1]
    %v449 = vlaneseq
    %v450 = vshrl.u32 %v449, 7
    %v451 = vsub.s32 0, %v450
    %v452 = vrot.slane %v447, %v451
    %v454 = vmul.f32 %v445, %v452
    %v455 = vmul.f32 %v446, %v452
    %v456 = vld [vmem:[%s5] sm:$0x1]
    %v458 = vlaneseq
    %v459 = vshrl.u32 %v458, 7
    %v460 = vsub.s32 0, %v459
    %v461 = vrot.slane %v456, %v460
    %v463 = vadd.f32 %v454, %v461
    %v464 = vadd.f32 %v455, %v461
    %v465 = vpack.c.bf16 %v464, %v463
    %v467 = vunpack.c.l.b16 %v465
    %v468 = vunpack.c.h.b16 %v465
    %v469 = vpack.c.b16 %v467, %v467
    %v470 = vpack.c.b16 %v468, %v468
    %vm473 = vcmask 257024
    %474 = vst.msk [vmem:[%s6] sm:$0xf] %vm473, %v469
    %475 = vst.msk [vmem:[%s6 + $0x4] sm:$0xf] %vm473, %v470
  $region33: #{san_bert_forward.13} parent=0 // pred_fallthru
    _
  // Predicated region
  $region34: #{san_bert_forward.13} parent=0 // pred_check
    _
  $region35: #{san_bert_forward.13} parent=0 // pred_check_branch
    %477 = sbr.rel (0) target = $region37
  $region36: #{san_bert_forward.13} parent=0 // pred_region
    _
  $region37: #{san_bert_forward.13} parent=0 // pred_fallthru
    _
  // Predicated region
  $region38: #{san_bert_forward.13} parent=0 // pred_check
    _
  $region39: #{san_bert_forward.13} parent=0 // pred_check_branch
    %479 = sbr.rel (0) target = $region41
  $region40: #{san_bert_forward.13} parent=0 // pred_region
    _
  $region41: #{san_bert_forward.13} parent=0 // pred_fallthru
    _

// kernel: san_bert_forward.19
$region0: #{san_bert_forward.19}
  #allocation0 [shape = 'u32[]', space=smem, size = 0x4, offset = 0x4, fixed_abs, tag = 'smem constant byte address 0x4 - core index']
  #allocation1 [shape = 'u32[144,128]{1,0:T(1,128)}', space=vmem, size = 0x12000, scoped, tag = 'internal scratch']
  %s0 = inlined_call_operand.vmem [shape: bf16[8,32], index: 0, kind: input, shape index: {}]
  %s1 = inlined_call_operand.vmem [shape: bf16[32,32], index: 1, kind: input, shape index: {}]
  %s2 = inlined_call_operand.vmem [shape: f32[1,32], index: 2, kind: input, shape index: {}]
  %s3 = inlined_call_operand.vmem [shape: bf16[32,128], index: 3, kind: input, shape index: {}]
  %s4 = inlined_call_operand.vmem [shape: f32[1,128], index: 4, kind: input, shape index: {}]
  %s5 = inlined_call_operand.vmem [shape: f32[8,128], index: 5, kind: output, shape index: {}]
  %s6 = sld [smem:[#allocation0]]
  $region30: #{san_bert_forward.19} parent=0
    _
  %s8 = ssub.s32 1, %s6
  %s9 = scalar_select 0, %s8, %s6
  // Predicated region
  $region2: #{san_bert_forward.19} parent=0 // pred_check
    _
  $region3: #{san_bert_forward.19} parent=0 // pred_check_branch
    %11 = sbr.rel (0) target = $region5
  $region4: #{san_bert_forward.19} parent=0 // pred_region
    _
  $region5: #{san_bert_forward.19} parent=0 // pred_fallthru
    _
  // Predicated region
  $region6: #{san_bert_forward.19} parent=0 // pred_check
    _
  $region7: #{san_bert_forward.19} parent=0 // pred_check_branch
    %13 = sbr.rel (0) target = $region9
  $region8: #{san_bert_forward.19} parent=0 // pred_region
    _
  $region9: #{san_bert_forward.19} parent=0 // pred_fallthru
    _
  // Predicated region
  $region10: #{san_bert_forward.19} parent=0 // pred_check
    _
  $region11: #{san_bert_forward.19} parent=0 // pred_check_branch
    %15 = sbr.rel (0) target = $region13
  $region12: #{san_bert_forward.19} parent=0 // pred_region
    _
  $region13: #{san_bert_forward.19} parent=0 // pred_fallthru
    _
  // Predicated region
  $region14: #{san_bert_forward.19} parent=0 // pred_check
    _
  $region15: #{san_bert_forward.19} parent=0 // pred_check_branch
    %17 = sbr.rel (0) target = $region17
  $region16: #{san_bert_forward.19} parent=0 // pred_region
    _
  $region17: #{san_bert_forward.19} parent=0 // pred_fallthru
    _
  // Predicated region
  $region18: #{san_bert_forward.19} parent=0 // pred_check
    _
  $region19: #{san_bert_forward.19} parent=0 // pred_check_branch
    %19 = sbr.rel (0) target = $region21
  $region20: #{san_bert_forward.19} parent=0 // pred_region
    _
  $region21: #{san_bert_forward.19} parent=0 // pred_fallthru
    _
  %v21 = vld [vmem:[%s0] sm:$0xf]
  %v22 = vld [vmem:[%s1] sm:$0xf]
  %v23 = vld [vmem:[%s1 + $0x4] sm:$0xf]
  %v24 = vld [vmem:[%s1 + $0x8] sm:$0xf]
  %v25 = vld [vmem:[%s1 + $0xc] sm:$0xf]
  %v26 = vld [vmem:[%s2] sm:$0x1]
  %v28 = vlaneseq
  %v29 = vshrl.u32 %v28, 7
  %v30 = vsub.s32 0, %v29
  %v31 = vrot.slane %v26, %v30
  %v37 = vunpack.c.l.b16 %v22
  %v38 = vunpack.c.l.b16 %v23
  %v39 = vunpack.c.l.b16 %v24
  %v40 = vunpack.c.l.b16 %v25
  %v41 = vpack.c.b16 %v38, %v37
  %v42 = vpack.c.b16 %v40, %v39
  %vm45 = vcmask 261120
  %v47 = vsel %vm45, %v21, 0
  %49 = vmatprep.subr.bf16.mxu0 0
  %50 = vmatpush1.bf16.msra.mxu0 %v41
  %51 = vmatprep.subr.bf16.mxu0 0
  %52 = vmatpush1.bf16.msra.mxu0 %v42
  %53 = vmatprep.subr.bf16.mxu0 0
  %54 = vmatpush1.bf16.msra.mxu0 0
  %55 = vmatprep.subr.bf16.mxu0 0
  %56 = vmatpush1.bf16.msra.mxu0 0
  %57 = vmatprep.subr.bf16.mxu0 0
  %58 = vmatpush1.bf16.msra.mxu0 0
  %59 = vmatprep.subr.bf16.mxu0 0
  %60 = vmatpush1.bf16.msra.mxu0 0
  %61 = vmatprep.subr.bf16.mxu0 0
  %62 = vmatpush1.bf16.msra.mxu0 0
  %63 = vmatprep.subr.bf16.mxu0 0
  %64 = vmatpush1.bf16.msra.mxu0 0
  %65 = vmatprep.subr.bf16.mxu0 0
  %66 = vmatpush1.bf16.msra.mxu0 0
  %67 = vmatprep.subr.bf16.mxu0 0
  %68 = vmatpush1.bf16.msra.mxu0 0
  %69 = vmatprep.subr.bf16.mxu0 0
  %70 = vmatpush1.bf16.msra.mxu0 0
  %71 = vmatprep.subr.bf16.mxu0 0
  %72 = vmatpush1.bf16.msra.mxu0 0
  %73 = vmatprep.subr.bf16.mxu0 0
  %74 = vmatpush1.bf16.msra.mxu0 0
  %75 = vmatprep.subr.bf16.mxu0 0
  %76 = vmatpush1.bf16.msra.mxu0 0
  %77 = vmatprep.subr.bf16.mxu0 0
  %78 = vmatpush1.bf16.msra.mxu0 0
  %79 = vmatprep.subr.bf16.mxu0 0
  %80 = vmatpush1.bf16.msra.mxu0 0
  %81 = vmatprep.mubr.bf16.mxu0 0
  %82 = vmatmul.mubr.bf16.gmra.mrb[0].mxu0 %v47
  %v83 = vpop.f32.mrb[0].mxu0
  %v84 = vadd.f32 %v31, %v83
  %v85 = vpop.f32.mrb[0].mxu0
  %v86 = vpop.f32.mrb[0].mxu0
  %v87 = vpop.f32.mrb[0].mxu0
  %88 = vdwg.mxu0
  %v89 = vtanh.pop %v84
  %v90 = vpack.c.bf16 %v89, %v89
  %v91 = vld [vmem:[%s3] sm:$0xf]
  %v92 = vld [vmem:[%s3 + $0x4] sm:$0xf]
  %v93 = vld [vmem:[%s3 + $0x8] sm:$0xf]
  %v94 = vld [vmem:[%s3 + $0xc] sm:$0xf]
  %v95 = vld [vmem:[%s4] sm:$0x1]
  %v97 = vlaneseq
  %v98 = vshrl.u32 %v97, 7
  %v99 = vsub.s32 0, %v98
  %v100 = vrot.slane %v95, %v99
  %v106 = vunpack.c.l.b16 %v91
  %v107 = vunpack.c.l.b16 %v92
  %v108 = vunpack.c.l.b16 %v93
  %v109 = vunpack.c.l.b16 %v94
  %v110 = vpack.c.b16 %v107, %v106
  %v111 = vpack.c.b16 %v109, %v108
  %v115 = vsel %vm45, %v90, 0
  %117 = vmatprep.subr.bf16.mxu0 0
  %118 = vmatpush1.bf16.msra.mxu0 %v110
  %119 = vmatprep.subr.bf16.mxu0 0
  %120 = vmatpush1.bf16.msra.mxu0 %v111
  %121 = vmatprep.subr.bf16.mxu0 0
  %122 = vmatpush1.bf16.msra.mxu0 0
  %123 = vmatprep.subr.bf16.mxu0 0
  %124 = vmatpush1.bf16.msra.mxu0 0
  %125 = vmatprep.subr.bf16.mxu0 0
  %126 = vmatpush1.bf16.msra.mxu0 0
  %127 = vmatprep.subr.bf16.mxu0 0
  %128 = vmatpush1.bf16.msra.mxu0 0
  %129 = vmatprep.subr.bf16.mxu0 0
  %130 = vmatpush1.bf16.msra.mxu0 0
  %131 = vmatprep.subr.bf16.mxu0 0
  %132 = vmatpush1.bf16.msra.mxu0 0
  %133 = vmatprep.subr.bf16.mxu0 0
  %134 = vmatpush1.bf16.msra.mxu0 0
  %135 = vmatprep.subr.bf16.mxu0 0
  %136 = vmatpush1.bf16.msra.mxu0 0
  %137 = vmatprep.subr.bf16.mxu0 0
  %138 = vmatpush1.bf16.msra.mxu0 0
  %139 = vmatprep.subr.bf16.mxu0 0
  %140 = vmatpush1.bf16.msra.mxu0 0
  %141 = vmatprep.subr.bf16.mxu0 0
  %142 = vmatpush1.bf16.msra.mxu0 0
  %143 = vmatprep.subr.bf16.mxu0 0
  %144 = vmatpush1.bf16.msra.mxu0 0
  %145 = vmatprep.subr.bf16.mxu0 0
  %146 = vmatpush1.bf16.msra.mxu0 0
  %147 = vmatprep.subr.bf16.mxu0 0
  %148 = vmatpush1.bf16.msra.mxu0 0
  %149 = vmatprep.mubr.bf16.mxu0 0
  %150 = vmatmul.mubr.bf16.gmra.mrb[0].mxu0 %v115
  %v151 = vpop.f32.mrb[0].mxu0
  %v152 = vadd.f32 %v100, %v151
  %v153 = vpop.f32.mrb[0].mxu0
  %v154 = vpop.f32.mrb[0].mxu0
  %v155 = vpop.f32.mrb[0].mxu0
  %156 = vdwg.mxu0
  %157 = vst [vmem:[%s5] sm:$0xff] %v152
  // Predicated region
  $region22: #{san_bert_forward.19} parent=0 // pred_check
    _
  $region23: #{san_bert_forward.19} parent=0 // pred_check_branch
    %159 = sbr.rel (0) target = $region25
  $region24: #{san_bert_forward.19} parent=0 // pred_region
    _
  $region25: #{san_bert_forward.19} parent=0 // pred_fallthru
    _
  // Predicated region
  $region26: #{san_bert_forward.19} parent=0 // pred_check
    _
  $region27: #{san_bert_forward.19} parent=0 // pred_check_branch
    %161 = sbr.rel (0) target = $region29
  $region28: #{san_bert_forward.19} parent=0 // pred_region
    _
  $region29: #{san_bert_forward.19} parent=0 // pred_fallthru
    _

// kernel: san_bert_forward.14
$region0: #{san_bert_forward.14}
  #allocation0 [shape = 'u32[]', space=smem, size = 0x4, offset = 0x4, fixed_abs, tag = 'smem constant byte address 0x4 - core index']
  #allocation1 [shape = 'u32[144,128]{1,0:T(1,128)}', space=vmem, size = 0x12000, scoped, tag = 'internal scratch']
  #allocation2 [shape = 'f32[16,32]{1,0:T(8,128)}', space=vmem, size = 0x2000, scoped, tag = 'scratch operand']
  %s0 = inlined_call_operand.vmem [shape: bf16[16,32], index: 0, kind: input, shape index: {}, may-alias: {0,5}]
  %s1 = inlined_call_operand.vmem [shape: bf16[32,128], index: 1, kind: input, shape index: {}]
  %s2 = inlined_call_operand.vmem [shape: f32[1,128], index: 2, kind: input, shape index: {}]
  %s3 = inlined_call_operand.vmem [shape: bf16[128,32], index: 3, kind: input, shape index: {}]
  %s4 = inlined_call_operand.vmem [shape: f32[1,32], index: 4, kind: input, shape index: {}]
  %s5 = inlined_call_operand.vmem [shape: bf16[16,32], index: 5, kind: input, shape index: {}, may-alias: {0,5}]
  %s6 = inlined_call_operand.vmem [shape: f32[1,32], index: 6, kind: input, shape index: {}]
  %s7 = inlined_call_operand.vmem [shape: f32[1,32], index: 7, kind: input, shape index: {}]
  %s8 = inlined_call_operand.vmem [shape: bf16[16,32], index: 8, kind: output, shape index: {}]
  %s9 = sld [smem:[#allocation0]]
  $region50: #{san_bert_forward.14} parent=0
    _
  %s11 = ssub.s32 1, %s9
  %s12 = scalar_select 0, %s11, %s9
  // Predicated region
  $region2: #{san_bert_forward.14} parent=0 // pred_check
    _
  $region3: #{san_bert_forward.14} parent=0 // pred_check_branch
    %14 = sbr.rel (0) target = $region5
  $region4: #{san_bert_forward.14} parent=0 // pred_region
    _
  $region5: #{san_bert_forward.14} parent=0 // pred_fallthru
    _
  // Predicated region
  $region6: #{san_bert_forward.14} parent=0 // pred_check
    _
  $region7: #{san_bert_forward.14} parent=0 // pred_check_branch
    %16 = sbr.rel (0) target = $region9
  $region8: #{san_bert_forward.14} parent=0 // pred_region
    _
  $region9: #{san_bert_forward.14} parent=0 // pred_fallthru
    _
  // Predicated region
  $region10: #{san_bert_forward.14} parent=0 // pred_check
    _
  $region11: #{san_bert_forward.14} parent=0 // pred_check_branch
    %18 = sbr.rel (0) target = $region13
  $region12: #{san_bert_forward.14} parent=0 // pred_region
    _
  $region13: #{san_bert_forward.14} parent=0 // pred_fallthru
    _
  // Predicated region
  $region14: #{san_bert_forward.14} parent=0 // pred_check
    _
  $region15: #{san_bert_forward.14} parent=0 // pred_check_branch
    %20 = sbr.rel (0) target = $region17
  $region16: #{san_bert_forward.14} parent=0 // pred_region
    _
  $region17: #{san_bert_forward.14} parent=0 // pred_fallthru
    _
  // Predicated region
  $region18: #{san_bert_forward.14} parent=0 // pred_check
    _
  $region19: #{san_bert_forward.14} parent=0 // pred_check_branch
    %22 = sbr.rel (0) target = $region21
  $region20: #{san_bert_forward.14} parent=0 // pred_region
    _
  $region21: #{san_bert_forward.14} parent=0 // pred_fallthru
    _
  // Predicated region
  $region22: #{san_bert_forward.14} parent=0 // pred_check
    _
  $region23: #{san_bert_forward.14} parent=0 // pred_check_branch
    %24 = sbr.rel (0) target = $region25
  $region24: #{san_bert_forward.14} parent=0 // pred_region
    _
  $region25: #{san_bert_forward.14} parent=0 // pred_fallthru
    _
  // Predicated region
  $region26: #{san_bert_forward.14} parent=0 // pred_check
    _
  $region27: #{san_bert_forward.14} parent=0 // pred_check_branch
    %26 = sbr.rel (0) target = $region29
  $region28: #{san_bert_forward.14} parent=0 // pred_region
    _
  $region29: #{san_bert_forward.14} parent=0 // pred_fallthru
    _
  // Predicated region
  $region30: #{san_bert_forward.14} parent=0 // pred_check
    _
  $region31: #{san_bert_forward.14} parent=0 // pred_check_branch
    %28 = sbr.rel (0) target = $region33
  $region32: #{san_bert_forward.14} parent=0 // pred_region
    _
  $region33: #{san_bert_forward.14} parent=0 // pred_fallthru
    _
  %p30 = scmp.eq.s32.totalorder 0, 0
  // Predicated region
  $region34: #{san_bert_forward.14} parent=0 // pred_check
    %p31 = pneg %p30
  $region35: #{san_bert_forward.14} parent=0 // pred_check_branch
    %33 = sbr.rel (%p31) target = $region37
  $region36: #{san_bert_forward.14} parent=0 // pred_region
    %vm34 = vcmask 261120
    %35 = vst.msk [vmem:[#allocation2] sm:$0xff] %vm34, 0.0
    %36 = vst.msk [vmem:[#allocation2 + $0x8] sm:$0xff] %vm34, 0.0
  $region37: #{san_bert_forward.14} parent=0 // pred_fallthru
    _
  %v37 = vld [vmem:[%s0] sm:$0xf]
  %v38 = vld [vmem:[%s0 + $0x4] sm:$0xf]
  %v39 = vld [vmem:[%s1] sm:$0xf]
  %v40 = vld [vmem:[%s1 + $0x4] sm:$0xf]
  %v41 = vld [vmem:[%s1 + $0x8] sm:$0xf]
  %v42 = vld [vmem:[%s1 + $0xc] sm:$0xf]
  %v43 = vld [vmem:[%s2] sm:$0x1]
  %v45 = vlaneseq
  %v46 = vshrl.u32 %v45, 7
  %v47 = vsub.s32 0, %v46
  %v48 = vrot.slane %v43, %v47
  %v52 = vunpack.c.l.b16 %v37
  %v53 = vunpack.c.l.b16 %v38
  %v54 = vpack.c.b16 %v53, %v52
  %v59 = vunpack.c.l.b16 %v39
  %v60 = vunpack.c.l.b16 %v40
  %v61 = vunpack.c.l.b16 %v41
  %v62 = vunpack.c.l.b16 %v42
  %v63 = vpack.c.b16 %v60, %v59
  %v64 = vpack.c.b16 %v62, %v61
  %vm67 = vcmask 261120
  %v69 = vsel %vm67, %v54, 0
  %71 = vmatprep.subr.bf16.mxu0 0
  %72 = vmatpush1.bf16.msra.mxu0 %v63
  %73 = vmatprep.subr.bf16.mxu0 0
  %74 = vmatpush1.bf16.msra.mxu0 %v64
  %75 = vmatprep.subr.bf16.mxu0 0
  %76 = vmatpush1.bf16.msra.mxu0 0
  %77 = vmatprep.subr.bf16.mxu0 0
  %78 = vmatpush1.bf16.msra.mxu0 0
  %79 = vmatprep.subr.bf16.mxu0 0
  %80 = vmatpush1.bf16.msra.mxu0 0
  %81 = vmatprep.subr.bf16.mxu0 0
  %82 = vmatpush1.bf16.msra.mxu0 0
  %83 = vmatprep.subr.bf16.mxu0 0
  %84 = vmatpush1.bf16.msra.mxu0 0
  %85 = vmatprep.subr.bf16.mxu0 0
  %86 = vmatpush1.bf16.msra.mxu0 0
  %87 = vmatprep.subr.bf16.mxu0 0
  %88 = vmatpush1.bf16.msra.mxu0 0
  %89 = vmatprep.subr.bf16.mxu0 0
  %90 = vmatpush1.bf16.msra.mxu0 0
  %91 = vmatprep.subr.bf16.mxu0 0
  %92 = vmatpush1.bf16.msra.mxu0 0
  %93 = vmatprep.subr.bf16.mxu0 0
  %94 = vmatpush1.bf16.msra.mxu0 0
  %95 = vmatprep.subr.bf16.mxu0 0
  %96 = vmatpush1.bf16.msra.mxu0 0
  %97 = vmatprep.subr.bf16.mxu0 0
  %98 = vmatpush1.bf16.msra.mxu0 0
  %99 = vmatprep.subr.bf16.mxu0 0
  %100 = vmatpush1.bf16.msra.mxu0 0
  %101 = vmatprep.subr.bf16.mxu0 0
  %102 = vmatpush1.bf16.msra.mxu0 0
  %103 = vmatprep.mubr.bf16.mxu0 0
  %104 = vmatmul.mubr.bf16.gmra.mrb[0].mxu0 %v69
  %v105 = vpop.f32.mrb[0].mxu0
  %v106 = vadd.f32 %v48, %v105
  %v107 = vpop.f32.mrb[0].mxu0
  %v108 = vpop.f32.mrb[0].mxu0
  %v109 = vadd.f32 %v48, %v108
  %v110 = vpop.f32.mrb[0].mxu0
  %111 = vdwg.mxu0
  %v112 = vmul.f32 %v106, 0.5
  %v113 = vmul.f32 %v109, 0.5
  %v114 = vmul.f32 %v106, 0.70710677
  %v115 = vmul.f32 %v109, 0.70710677
  %v116 = verf.f32.pop %v114
  %v117 = verf.f32.pop %v115
  %v118 = vadd.f32 %v116, 1.0
  %v119 = vadd.f32 %v117, 1.0
  %v120 = vmul.f32 %v112, %v118
  %v121 = vmul.f32 %v113, %v119
  %v122 = vld [vmem:[#allocation2] sm:$0xff]
  %v123 = vld [vmem:[#allocation2 + $0x8] sm:$0xff]
  %v124 = vpack.c.bf16 %v121, %v120
  %v125 = vld [vmem:[%s3] sm:$0xf]
  %v126 = vld [vmem:[%s3 + $0x4] sm:$0xf]
  %v127 = vld [vmem:[%s3 + $0x8] sm:$0xf]
  %v128 = vld [vmem:[%s3 + $0xc] sm:$0xf]
  %v129 = vld [vmem:[%s3 + $0x10] sm:$0xf]
  %v130 = vld [vmem:[%s3 + $0x14] sm:$0xf]
  %v131 = vld [vmem:[%s3 + $0x18] sm:$0xf]
  %v132 = vld [vmem:[%s3 + $0x1c] sm:$0xf]
  %v133 = vld [vmem:[%s3 + $0x20] sm:$0xf]
  %v134 = vld [vmem:[%s3 + $0x24] sm:$0xf]
  %v135 = vld [vmem:[%s3 + $0x28] sm:$0xf]
  %v136 = vld [vmem:[%s3 + $0x2c] sm:$0xf]
  %v137 = vld [vmem:[%s3 + $0x30] sm:$0xf]
  %v138 = vld [vmem:[%s3 + $0x34] sm:$0xf]
  %v139 = vld [vmem:[%s3 + $0x38] sm:$0xf]
  %v140 = vld [vmem:[%s3 + $0x3c] sm:$0xf]
  %v157 = vunpack.c.l.b16 %v125
  %v158 = vunpack.c.l.b16 %v126
  %v159 = vunpack.c.l.b16 %v127
  %v160 = vunpack.c.l.b16 %v128
  %v161 = vunpack.c.l.b16 %v129
  %v162 = vunpack.c.l.b16 %v130
  %v163 = vunpack.c.l.b16 %v131
  %v164 = vunpack.c.l.b16 %v132
  %v165 = vunpack.c.l.b16 %v133
  %v166 = vunpack.c.l.b16 %v134
  %v167 = vunpack.c.l.b16 %v135
  %v168 = vunpack.c.l.b16 %v136
  %v169 = vunpack.c.l.b16 %v137
  %v170 = vunpack.c.l.b16 %v138
  %v171 = vunpack.c.l.b16 %v139
  %v172 = vunpack.c.l.b16 %v140
  %v173 = vpack.c.b16 %v158, %v157
  %v174 = vpack.c.b16 %v160, %v159
  %v175 = vpack.c.b16 %v162, %v161
  %v176 = vpack.c.b16 %v164, %v163
  %v177 = vpack.c.b16 %v166, %v165
  %v178 = vpack.c.b16 %v168, %v167
  %v179 = vpack.c.b16 %v170, %v169
  %v180 = vpack.c.b16 %v172, %v171
  %189 = vmatprep.subr.bf16.mxu0 0
  %190 = vmatpush1.bf16.msra.mxu0 %v173
  %191 = vmatprep.subr.bf16.mxu0 0
  %192 = vmatpush1.bf16.msra.mxu0 %v174
  %193 = vmatprep.subr.bf16.mxu0 0
  %194 = vmatpush1.bf16.msra.mxu0 %v175
  %195 = vmatprep.subr.bf16.mxu0 0
  %196 = vmatpush1.bf16.msra.mxu0 %v176
  %197 = vmatprep.subr.bf16.mxu0 0
  %198 = vmatpush1.bf16.msra.mxu0 %v177
  %199 = vmatprep.subr.bf16.mxu0 0
  %200 = vmatpush1.bf16.msra.mxu0 %v178
  %201 = vmatprep.subr.bf16.mxu0 0
  %202 = vmatpush1.bf16.msra.mxu0 %v179
  %203 = vmatprep.subr.bf16.mxu0 0
  %204 = vmatpush1.bf16.msra.mxu0 %v180
  %205 = vmatprep.subr.bf16.mxu0 0
  %206 = vmatpush1.bf16.msra.mxu0 0
  %207 = vmatprep.subr.bf16.mxu0 0
  %208 = vmatpush1.bf16.msra.mxu0 0
  %209 = vmatprep.subr.bf16.mxu0 0
  %210 = vmatpush1.bf16.msra.mxu0 0
  %211 = vmatprep.subr.bf16.mxu0 0
  %212 = vmatpush1.bf16.msra.mxu0 0
  %213 = vmatprep.subr.bf16.mxu0 0
  %214 = vmatpush1.bf16.msra.mxu0 0
  %215 = vmatprep.subr.bf16.mxu0 0
  %216 = vmatpush1.bf16.msra.mxu0 0
  %217 = vmatprep.subr.bf16.mxu0 0
  %218 = vmatpush1.bf16.msra.mxu0 0
  %219 = vmatprep.subr.bf16.mxu0 0
  %220 = vmatpush1.bf16.msra.mxu0 0
  %221 = vmatprep.mubr.bf16.mxu0 0
  %222 = vmatmul.mubr.bf16.gmra.mrb[0].mxu0 %v124
  %v223 = vpop.f32.mrb[0].mxu0
  %v224 = vadd.f32 0.0, %v223
  %v225 = vpop.f32.mrb[0].mxu0
  %v226 = vpop.f32.mrb[0].mxu0
  %v227 = vadd.f32 0.0, %v226
  %v228 = vpop.f32.mrb[0].mxu0
  %229 = vdwg.mxu0
  %v230 = vadd.f32 %v122, %v224
  %v231 = vadd.f32 %v123, %v227
  %232 = vst.msk [vmem:[#allocation2] sm:$0xff] %vm67, %v230
  %233 = vst.msk [vmem:[#allocation2 + $0x8] sm:$0xff] %vm67, %v231
  // Predicated region
  $region38: #{san_bert_forward.14} parent=0 // pred_check
    %p234 = pneg %p30
  $region39: #{san_bert_forward.14} parent=0 // pred_check_branch
    %236 = sbr.rel (%p234) target = $region41
  $region40: #{san_bert_forward.14} parent=0 // pred_region
    %v237 = vld [vmem:[#allocation2] sm:$0xff]
    %v238 = vld [vmem:[#allocation2 + $0x8] sm:$0xff]
    %v239 = vld [vmem:[%s4] sm:$0x1]
    %v241 = vlaneseq
    %v242 = vshrl.u32 %v241, 7
    %v243 = vsub.s32 0, %v242
    %v244 = vrot.slane %v239, %v243
    %v246 = vadd.f32 %v237, %v244
    %v247 = vadd.f32 %v238, %v244
    %v248 = vld [vmem:[%s5] sm:$0xf]
    %v249 = vld [vmem:[%s5 + $0x4] sm:$0xf]
    %v250 = vunpack.c.l.bf16 %v248
    %v251 = vunpack.c.l.bf16 %v249
    %v252 = vadd.f32 %v246, %v250
    %v253 = vadd.f32 %v247, %v251
    %v254 = vsel %vm67, %v252, 0.0
    %255 = vadd.xlane.f32.xlu0 %v254
    %v256 = vpop.xlane.xlu0 %255
    %v257 = vsel %vm67, %v253, 0.0
    %258 = vadd.xlane.f32.xlu0 %v257
    %v259 = vpop.xlane.xlu0 %258
    %v260 = vrcp.pop 32.0
    %v261 = vmul.f32 %v256, %v260
    %v262 = vmul.f32 %v259, %v260
    %v263 = vsub.f32 %v252, %v261
    %v264 = vsub.f32 %v253, %v262
    %v265 = vmul.f32 %v263, %v263
    %v266 = vmul.f32 %v264, %v264
    %v267 = vsel %vm67, %v265, 0.0
    %268 = vadd.xlane.f32.xlu0 %v267
    %v269 = vpop.xlane.xlu0 %268
    %v270 = vsel %vm67, %v266, 0.0
    %271 = vadd.xlane.f32.xlu0 %v270
    %v272 = vpop.xlane.xlu0 %271
    %v273 = vmul.f32 %v269, %v260
    %v274 = vmul.f32 %v272, %v260
    %v275 = vadd.f32 %v273, 1e-12
    %v276 = vadd.f32 %v274, 1e-12
    %v277 = vrsqrt.pop %v275
    %v278 = vrsqrt.pop %v276
    %v279 = vmul.f32 %v263, %v277
    %v280 = vmul.f32 %v264, %v278
    %v281 = vld [vmem:[%s6] sm:$0x1]
    %v283 = vlaneseq
    %v284 = vshrl.u32 %v283, 7
    %v285 = vsub.s32 0, %v284
    %v286 = vrot.slane %v281, %v285
    %v288 = vmul.f32 %v279, %v286
    %v289 = vmul.f32 %v280, %v286
    %v290 = vld [vmem:[%s7] sm:$0x1]
    %v292 = vlaneseq
    %v293 = vshrl.u32 %v292, 7
    %v294 = vsub.s32 0, %v293
    %v295 = vrot.slane %v290, %v294
    %v297 = vadd.f32 %v288, %v295
    %v298 = vadd.f32 %v289, %v295
    %v299 = vpack.c.bf16 %v298, %v297
    %v301 = vunpack.c.l.b16 %v299
    %v302 = vunpack.c.h.b16 %v299
    %v303 = vpack.c.b16 %v301, %v301
    %v304 = vpack.c.b16 %v302, %v302
    %vm307 = vcmask 257024
    %308 = vst.msk [vmem:[%s8] sm:$0xf] %vm307, %v303
    %309 = vst.msk [vmem:[%s8 + $0x4] sm:$0xf] %vm307, %v304
  $region41: #{san_bert_forward.14} parent=0 // pred_fallthru
    _
  // Predicated region
  $region42: #{san_bert_forward.14} parent=0 // pred_check
    _
  $region43: #{san_bert_forward.14} parent=0 // pred_check_branch
    %311 = sbr.rel (0) target = $region45
  $region44: #{san_bert_forward.14} parent=0 // pred_region
    _
  $region45: #{san_bert_forward.14} parent=0 // pred_fallthru
    _
  // Predicated region
  $region46: #{san_bert_forward.14} parent=0 // pred_check
    _
  $region47: #{san_bert_forward.14} parent=0 // pred_check_branch
    %313 = sbr.rel (0) target = $region49
  $region48: #{san_bert_forward.14} parent=0 // pred_region
    _
  $region49: #{san_bert_forward.14} parent=0 // pred_fallthru
    _

</llo_original>
